<compile_context>
chip_gen: v7x
topology: tpu7x:2x2x1
jax: 0.10.0
libtpu: 0.0.40
codegen_flags: <defaults>
</compile_context>

<pallas_src>
import functools

import jax
import jax.numpy as jnp
from jax.experimental import pallas as pl
from jax.experimental.pallas import tpu as pltpu

# Large negative instead of -inf: avoids exp(-inf - -inf) = NaN if a row were
# ever fully masked (cannot happen with the causal mask, but safer).
_MASK_VALUE = -1e30


def _mha_core(x_ref, enc_ref, wqkv_ref, bqkv_ref, wo_ref, bo_ref,
              out_ref, attn_ref,
              *, num_heads, head_dim, masked, self_attn, dot_dtype):
    blk_b, S_q, H = x_ref.shape
    S_kv = enc_ref.shape[1]
    rows_q = blk_b * S_q

    x2 = x_ref[...].reshape(rows_q, H).astype(dot_dtype)

    # ---- fused input projections (1 or 2 MXU matmuls instead of 3) ----------
    # NOTE: 1/sqrt(head_dim) is already folded into the q columns of
    # wqkv/bqkv by the wrapper, so scores need no in-kernel scaling.
    if self_attn:
        qkv = jnp.dot(x2, wqkv_ref[...].astype(dot_dtype),
                      preferred_element_type=jnp.float32) + bqkv_ref[...]
        q, k, v = qkv[:, :H], qkv[:, H:2 * H], qkv[:, 2 * H:]
    else:
        enc2 = enc_ref[...].reshape(blk_b * S_kv, H).astype(dot_dtype)
        q = jnp.dot(x2, wqkv_ref[:, :H].astype(dot_dtype),
                    preferred_element_type=jnp.float32) + bqkv_ref[:, :H]
        kv = jnp.dot(enc2, wqkv_ref[:, H:].astype(dot_dtype),
                     preferred_element_type=jnp.float32) + bqkv_ref[:, H:]
        k, v = kv[:, :H], kv[:, H:]

    q3 = q.reshape(blk_b, S_q, H).astype(dot_dtype)
    k3 = k.reshape(blk_b, S_kv, H).astype(dot_dtype)
    v3 = v.reshape(blk_b, S_kv, H).astype(dot_dtype)

    # ---- causal mask: built once, reused by every head ----------------------
    if masked:
        row_id = jax.lax.broadcasted_iota(jnp.int32, (S_q, S_kv), 0)
        col_id = jax.lax.broadcasted_iota(jnp.int32, (S_q, S_kv), 1)
        keep = (col_id <= row_id)[None, :, :]            # (1, S_q, S_kv)

    # ---- per-head attention (unrolled), output projection accumulated -------
    out_acc = None
    for h in range(num_heads):
        lo = h * head_dim
        hi = lo + head_dim
        qh = q3[:, :, lo:hi]                             # (blk_b, S_q, hd)
        kh = k3[:, :, lo:hi]                             # (blk_b, S_kv, hd)
        vh = v3[:, :, lo:hi]                             # (blk_b, S_kv, hd)

        # Batched over the batch block; contraction on the last dim, so no
        # explicit K transpose is materialised.
        scores = jnp.einsum("bqd,bkd->bqk", qh, kh,
                            preferred_element_type=jnp.float32)
        if masked:
            scores = jnp.where(keep, scores, _MASK_VALUE)

        m = jnp.max(scores, axis=-1, keepdims=True)
        e = jnp.exp(scores - m)
        denom = jnp.sum(e, axis=-1, keepdims=True)
        attn = e / denom                                 # exact: rows sum to 1

        # One contiguous store per head straight into the final
        # (B, num_heads, S_q, S_kv) layout -- no concatenate, no wrapper
        # transpose, only one head's attn tile live at a time.
        attn_ref[:, h, :, :] = attn.astype(attn_ref.dtype)

        ctx_h = jnp.einsum("bqk,bkd->bqd", attn.astype(dot_dtype), vh,
                           preferred_element_type=jnp.float32)

        # Fold the output projection into the head loop (same total FLOPs as
        # one (rows,H)@(H,H) matmul) -> no ctx scratch / masked ctx stores.
        contrib = jnp.dot(ctx_h.reshape(rows_q, head_dim).astype(dot_dtype),
                          wo_ref[lo:hi, :].astype(dot_dtype),
                          preferred_element_type=jnp.float32)
        out_acc = contrib if out_acc is None else out_acc + contrib

    out = out_acc + bo_ref[...]
    out_ref[...] = out.reshape(blk_b, S_q, H).astype(out_ref.dtype)


def _mha_kernel_self(x_ref, wqkv_ref, bqkv_ref, wo_ref, bo_ref,
                     out_ref, attn_ref, **kw):
    # Self-attention: the query tile is DMA'd once and reused for both streams.
    _mha_core(x_ref, x_ref, wqkv_ref, bqkv_ref, wo_ref, bo_ref,
              out_ref, attn_ref, self_attn=True, **kw)


def _mha_kernel_cross(x_ref, enc_ref, wqkv_ref, bqkv_ref, wo_ref, bo_ref,
                      out_ref, attn_ref, **kw):
    _mha_core(x_ref, enc_ref, wqkv_ref, bqkv_ref, wo_ref, bo_ref,
              out_ref, attn_ref, self_attn=False, **kw)


def _pick_block_b(B, S, per_batch_bytes, budget_bytes, row_target=512):
    """Largest divisor of B whose rows stay near an MXU-friendly target and
    whose (double-buffered) tiles fit the VMEM budget."""
    best = 1
    for cand in range(1, B + 1):
        if B % cand:
            continue
        rows_ok = cand * S <= max(row_target, S)
        fits = cand * per_batch_bytes <= max(budget_bytes, per_batch_bytes)
        if rows_ok and fits:
            best = cand
    return best


def multi_head_attention(query, params, num_heads, encoder_hidden_states=None,
                         masked=False, block_b=None,
                         dot_dtype=jnp.float32, attn_dtype=jnp.float32):
    """Pallas TPU implementation of MultiHeadAttention.forward.

    query: (B, S, H) float32
    params: dict with 'wq','bq','wk','bk','wv','bv','wo','bo'
            w*: (H, H) laid out (in, out) [i.e. torch weight.T]; b*: (1, H)
    Returns (output (B, S, H), attn_weights (B, num_heads, S, S_kv)).

    Best MXU/lane efficiency at H multiple of 128 and head_dim in {64, 128};
    smaller shapes (like the demo) are lane-padded but still correct.
    """
    B, S, H = query.shape
    assert H % num_heads == 0, "hidden_size must be divisible by num_heads"
    head_dim = H // num_heads
    self_attn = encoder_hidden_states is None
    S_kv = S if self_attn else encoder_hidden_states.shape[1]
    scale = 1.0 / float(head_dim) ** 0.5

    # Fuse the three projection weights once, outside the kernel (plain JAX),
    # and fold the 1/sqrt(head_dim) scale into the q columns (free).
    wqkv = jnp.concatenate(
        [params["wq"] * scale, params["wk"], params["wv"]], axis=1)   # (H, 3H)
    bqkv = jnp.concatenate(
        [params["bq"] * scale, params["bk"], params["bv"]], axis=1)   # (1, 3H)

    # ---- VMEM-aware block sizing -------------------------------------------
    # Per-batch-element tile bytes (x, enc, out, attn), x2 for double buffering.
    per_b = (S * H
             + (0 if self_attn else S_kv * H)
             + S * H
             + num_heads * S * S_kv) * 4 * 2
    weight_bytes = (H * 3 * H + 3 * H + H * H + H) * 4 * 2   # double-buffered
    try:
        vmem_cap = int(pltpu.get_tpu_info().vmem_capacity_bytes)
    except Exception:
        vmem_cap = 64 * 1024 * 1024        # conservative (v7x per-core VMEM)
    tile_budget = int(0.5 * vmem_cap) - weight_bytes

    if block_b is None:
        block_b = _pick_block_b(B, S, per_b, tile_budget)
    assert B % block_b == 0, "block_b must divide the batch size"
    grid = (B // block_b,)
    # For very large S the attn tile at block_b=1 can still exceed the budget
    # (notably on v7x's 64 MiB VMEM); that regime needs an extra S_q grid axis.

    vmem_limit = int(min(max(block_b * per_b + weight_bytes + (8 << 20),
                             32 << 20),
                         int(0.9 * vmem_cap)))

    # ---- specs ---------------------------------------------------------------
    x_spec = pl.BlockSpec((block_b, S, H), lambda b: (b, 0, 0))
    enc_spec = pl.BlockSpec((block_b, S_kv, H), lambda b: (b, 0, 0))
    w3_spec = pl.BlockSpec((H, 3 * H), lambda b: (0, 0))
    b3_spec = pl.BlockSpec((1, 3 * H), lambda b: (0, 0))
    wo_spec = pl.BlockSpec((H, H), lambda b: (0, 0))
    bo_spec = pl.BlockSpec((1, H), lambda b: (0, 0))

    out_specs = [
        pl.BlockSpec((block_b, S, H), lambda b: (b, 0, 0)),
        pl.BlockSpec((block_b, num_heads, S, S_kv), lambda b: (b, 0, 0, 0)),
    ]
    out_shape = (
        jax.ShapeDtypeStruct((B, S, H), query.dtype),
        jax.ShapeDtypeStruct((B, num_heads, S, S_kv), attn_dtype),
    )

    kw = dict(num_heads=num_heads, head_dim=head_dim, masked=masked,
              dot_dtype=dot_dtype)
    if self_attn:
        kernel = functools.partial(_mha_kernel_self, **kw)
        in_specs = [x_spec, w3_spec, b3_spec, wo_spec, bo_spec]
        args = (query, wqkv, bqkv, params["wo"], params["bo"])
    else:
        assert encoder_hidden_states.shape[0] == B
        kernel = functools.partial(_mha_kernel_cross, **kw)
        in_specs = [x_spec, enc_spec, w3_spec, b3_spec, wo_spec, bo_spec]
        args = (query, encoder_hidden_states, wqkv, bqkv,
                params["wo"], params["bo"])

    out, attn = pl.pallas_call(
        kernel,
        out_shape=out_shape,
        grid_spec=pltpu.PrefetchScalarGridSpec(
            num_scalar_prefetch=0,
            grid=grid,
            in_specs=in_specs,
            out_specs=out_specs,
        ),
        compiler_params=pltpu.CompilerParams(
            dimension_semantics=("parallel",),   # megacore shards batch steps
            vmem_limit_bytes=vmem_limit,
        ),
    )(*args)
    return out, attn


def _reference(query, params, num_heads, encoder_hidden_states=None, masked=False):
    """Plain-JAX reference mirroring the PyTorch forward (for verification)."""
    if encoder_hidden_states is None:
        encoder_hidden_states = query
    B, S, H = query.shape
    S_kv = encoder_hidden_states.shape[1]
    hd = H // num_heads

    def lin(x, w, b):
        return x @ w + b

    q = lin(query, params["wq"], params["bq"])
    k = lin(encoder_hidden_states, params["wk"], params["bk"])
    v = lin(encoder_hidden_states, params["wv"], params["bv"])

    def split(x):
        b, s, _ = x.shape
        return x.reshape(b, s, num_heads, hd).transpose(0, 2, 1, 3)

    Q, K, V = split(q), split(k), split(v)
    scores = jnp.einsum("bnqd,bnkd->bnqk", Q, K) / (hd ** 0.5)
    if masked:
        mask = jnp.tril(jnp.ones((S, S_kv), dtype=bool))
        scores = jnp.where(mask, scores, -jnp.inf)
    attn = jax.nn.softmax(scores, axis=-1)
    ctx = jnp.einsum("bnqk,bnkd->bnqd", attn, V)
    ctx = ctx.transpose(0, 2, 1, 3).reshape(B, S, H)
    out = lin(ctx, params["wo"], params["bo"])
    return out, attn


if __name__ == "__main__":
    B, S, H = 2, 8, 32
    S_ENC = 16
    num_heads = 8

    key = jax.random.PRNGKey(0)
    keys = jax.random.split(key, 10)

    # Deterministic synthetic parameters (nn.Linear(H, H) x 4), stored as
    # (in, out) weights so the kernel computes x @ W + b.
    params = {
        "wq": jax.random.normal(keys[0], (H, H), jnp.float32) * 0.05,
        "bq": jax.random.normal(keys[1], (1, H), jnp.float32) * 0.05,
        "wk": jax.random.normal(keys[2], (H, H), jnp.float32) * 0.05,
        "bk": jax.random.normal(keys[3], (1, H), jnp.float32) * 0.05,
        "wv": jax.random.normal(keys[4], (H, H), jnp.float32) * 0.05,
        "bv": jax.random.normal(keys[5], (1, H), jnp.float32) * 0.05,
        "wo": jax.random.normal(keys[6], (H, H), jnp.float32) * 0.05,
        "bo": jax.random.normal(keys[7], (1, H), jnp.float32) * 0.05,
    }
    x = jax.random.normal(keys[8], (B, S, H), jnp.float32)
    enc = jax.random.normal(keys[9], (B, S_ENC, H), jnp.float32)

    RTOL, ATOL = 1e-2, 1e-4   # exact-divide softmax; f32 matmuls throughout

    # 1) self-attention, unmasked (matches the PyTorch default forward)
    out, attn = multi_head_attention(x, params, num_heads, masked=False)
    out = jax.block_until_ready(out)
    attn = jax.block_until_ready(attn)
    ref_out, ref_attn = _reference(x, params, num_heads, masked=False)
    assert out.shape == (B, S, H) and attn.shape == (B, num_heads, S, S)
    assert jnp.allclose(out, ref_out, rtol=RTOL, atol=ATOL)
    assert jnp.allclose(attn, ref_attn, rtol=RTOL, atol=ATOL)

    # 2) self-attention with the causal (look-ahead) mask
    out_m, attn_m = multi_head_attention(x, params, num_heads, masked=True)
    out_m = jax.block_until_ready(out_m)
    attn_m = jax.block_until_ready(attn_m)
    ref_out_m, ref_attn_m = _reference(x, params, num_heads, masked=True)
    assert jnp.allclose(out_m, ref_out_m, rtol=RTOL, atol=ATOL)
    assert jnp.allclose(attn_m, ref_attn_m, rtol=RTOL, atol=ATOL)

    # 3) cross-attention (encoder_hidden_states with a different seq length)
    out_c, attn_c = multi_head_attention(x, params, num_heads,
                                         encoder_hidden_states=enc, masked=False)
    out_c = jax.block_until_ready(out_c)
    attn_c = jax.block_until_ready(attn_c)
    ref_out_c, ref_attn_c = _reference(x, params, num_heads,
                                       encoder_hidden_states=enc, masked=False)
    assert out_c.shape == (B, S, H) and attn_c.shape == (B, num_heads, S, S_ENC)
    assert jnp.allclose(out_c, ref_out_c, rtol=RTOL, atol=ATOL)
    assert jnp.allclose(attn_c, ref_attn_c, rtol=RTOL, atol=ATOL)

    # 4) fast path: bf16 MXU operands + bf16 attention-weight emission
    #    (f32 accumulation; loose tolerance for the reduced-precision operands)
    out_b, attn_b = multi_head_attention(x, params, num_heads, masked=True,
                                         dot_dtype=jnp.bfloat16,
                                         attn_dtype=jnp.bfloat16)
    out_b = jax.block_until_ready(out_b)
    attn_b = jax.block_until_ready(attn_b)
    assert jnp.allclose(out_b, ref_out_m, rtol=1e-1, atol=3e-2)
    assert jnp.allclose(attn_b.astype(jnp.float32), ref_attn_m,
                        rtol=1e-1, atol=3e-2)

    print("KERNEL_OK")
</pallas_src>

<mosaic_0001>
module attributes {stable_mosaic.version = 11 : i64} {
  func.func @_mha_kernel_self(%arg0: i32, %arg1: memref<2x8x32xf32, #tpu.memory_space<vmem>>, %arg2: memref<32x96xf32, #tpu.memory_space<vmem>>, %arg3: memref<1x96xf32, #tpu.memory_space<vmem>>, %arg4: memref<32x32xf32, #tpu.memory_space<vmem>>, %arg5: memref<1x32xf32, #tpu.memory_space<vmem>>, %arg6: memref<2x8x32xf32, #tpu.memory_space<vmem>>, %arg7: memref<2x8x8x8xf32, #tpu.memory_space<vmem>>) attributes {dimension_semantics = [#tpu.dimension_semantics<parallel>], iteration_bounds = array<i64: 1>, scalar_prefetch = 0 : i64, scratch_operands = 0 : i64, tpu.core_type = #tpu.core_type<tc>, window_params = [{transform_indices = @transform_0, window_bounds = array<i64: 2, 8, 32>}, {pipeline_mode = #tpu.pipeline_mode<synchronous>, transform_indices = @transform_1, window_bounds = array<i64: 32, 96>}, {pipeline_mode = #tpu.pipeline_mode<synchronous>, transform_indices = @transform_2, window_bounds = array<i64: 1, 96>}, {pipeline_mode = #tpu.pipeline_mode<synchronous>, transform_indices = @transform_3, window_bounds = array<i64: 32, 32>}, {pipeline_mode = #tpu.pipeline_mode<synchronous>, transform_indices = @transform_4, window_bounds = array<i64: 1, 32>}, {transform_indices = @transform_5, window_bounds = array<i64: 2, 8, 32>}, {transform_indices = @transform_6, window_bounds = array<i64: 2, 8, 8, 8>}]} {
    %c0 = arith.constant 0 : index
    %c0_0 = arith.constant 0 : index
    %c0_1 = arith.constant 0 : index
    %0 = vector.load %arg1[%c0, %c0_0, %c0_1] : memref<2x8x32xf32, #tpu.memory_space<vmem>>, vector<2x8x32xf32>
    %1 = vector.shape_cast %0 : vector<2x8x32xf32> to vector<16x32xf32>
    %c0_2 = arith.constant 0 : index
    %c0_3 = arith.constant 0 : index
    %2 = vector.load %arg2[%c0_2, %c0_3] : memref<32x96xf32, #tpu.memory_space<vmem>>, vector<32x96xf32>
    %cst = arith.constant dense<0.000000e+00> : vector<16x96xf32>
    %3 = tpu.matmul %1, %2, %cst {dimension_numbers = #tpu.dot_dimension_numbers<[1], [0], [0], [1], [0, 0, 1, 1], [], []>} : vector<16x32xf32>, vector<32x96xf32>, vector<16x96xf32> -> vector<16x96xf32>
    %c0_4 = arith.constant 0 : index
    %c0_5 = arith.constant 0 : index
    %4 = vector.load %arg3[%c0_4, %c0_5] : memref<1x96xf32, #tpu.memory_space<vmem>>, vector<1x96xf32>
    %5 = vector.broadcast %4 : vector<1x96xf32> to vector<16x96xf32>
    %6 = arith.addf %3, %5 : vector<16x96xf32>
    %7 = vector.extract_strided_slice %6 {offsets = [0, 0], sizes = [16, 32], strides = [1, 1]} : vector<16x96xf32> to vector<16x32xf32>
    %8 = vector.extract_strided_slice %6 {offsets = [0, 32], sizes = [16, 32], strides = [1, 1]} : vector<16x96xf32> to vector<16x32xf32>
    %9 = vector.extract_strided_slice %6 {offsets = [0, 64], sizes = [16, 32], strides = [1, 1]} : vector<16x96xf32> to vector<16x32xf32>
    %10 = vector.shape_cast %7 : vector<16x32xf32> to vector<2x8x32xf32>
    %11 = vector.shape_cast %8 : vector<16x32xf32> to vector<2x8x32xf32>
    %12 = vector.shape_cast %9 : vector<16x32xf32> to vector<2x8x32xf32>
    %13 = vector.extract_strided_slice %10 {offsets = [0, 0, 0], sizes = [2, 8, 4], strides = [1, 1, 1]} : vector<2x8x32xf32> to vector<2x8x4xf32>
    %14 = vector.extract_strided_slice %11 {offsets = [0, 0, 0], sizes = [2, 8, 4], strides = [1, 1, 1]} : vector<2x8x32xf32> to vector<2x8x4xf32>
    %15 = vector.extract_strided_slice %12 {offsets = [0, 0, 0], sizes = [2, 8, 4], strides = [1, 1, 1]} : vector<2x8x32xf32> to vector<2x8x4xf32>
    "tpu.trace_start"() <{level = 10 : i32, message = "bqd,bkd->bqk"}> : () -> ()
    %cst_6 = arith.constant dense<0.000000e+00> : vector<2x8x8xf32>
    %16 = tpu.matmul %13, %14, %cst_6 {dimension_numbers = #tpu.dot_dimension_numbers<[2], [2], [1], [1], [0, 0, 0, 1, 1, 1], [0], [0]>} : vector<2x8x4xf32>, vector<2x8x4xf32>, vector<2x8x8xf32> -> vector<2x8x8xf32>
    "tpu.trace_stop"() : () -> ()
    %cst_7 = arith.constant dense<0xFF800000> : vector<2x8xf32>
    %17 = vector.multi_reduction <maximumf>, %16, %cst_7 [2] : vector<2x8x8xf32> to vector<2x8xf32>
    %18 = vector.shape_cast %17 : vector<2x8xf32> to vector<2x8x1xf32>
    %19 = vector.broadcast %18 : vector<2x8x1xf32> to vector<2x8x8xf32>
    %20 = arith.subf %16, %19 : vector<2x8x8xf32>
    %21 = math.exp %20 : vector<2x8x8xf32>
    %cst_8 = arith.constant dense<0.000000e+00> : vector<2x8xf32>
    %22 = vector.multi_reduction <add>, %21, %cst_8 [2] : vector<2x8x8xf32> to vector<2x8xf32>
    %23 = vector.shape_cast %22 : vector<2x8xf32> to vector<2x8x1xf32>
    %24 = vector.broadcast %23 : vector<2x8x1xf32> to vector<2x8x8xf32>
    %25 = arith.divf %21, %24 : vector<2x8x8xf32>
    %c0_9 = arith.constant 0 : index
    %c0_10 = arith.constant 0 : index
    %c0_11 = arith.constant 0 : index
    %c0_12 = arith.constant 0 : index
    %26 = vector.load %arg7[%c0_9, %c0_10, %c0_11, %c0_12] : memref<2x8x8x8xf32, #tpu.memory_space<vmem>>, vector<2x1x8x8xf32>
    %27 = vector.shape_cast %26 : vector<2x1x8x8xf32> to vector<2x8x8xf32>
    %28 = vector.shape_cast %25 : vector<2x8x8xf32> to vector<2x1x8x8xf32>
    tpu.vector_store %arg7[%c0_9, %c0_10, %c0_11, %c0_12], %28 {strides = array<i32>} : memref<2x8x8x8xf32, #tpu.memory_space<vmem>>, vector<2x1x8x8xf32>,
    "tpu.trace_start"() <{level = 10 : i32, message = "bqk,bkd->bqd"}> : () -> ()
    %cst_13 = arith.constant dense<0.000000e+00> : vector<2x8x4xf32>
    %29 = tpu.matmul %25, %15, %cst_13 {dimension_numbers = #tpu.dot_dimension_numbers<[2], [1], [1], [2], [0, 0, 0, 1, 1, 2], [0], [0]>} : vector<2x8x8xf32>, vector<2x8x4xf32>, vector<2x8x4xf32> -> vector<2x8x4xf32>
    "tpu.trace_stop"() : () -> ()
    %30 = vector.shape_cast %29 : vector<2x8x4xf32> to vector<16x4xf32>
    %c0_14 = arith.constant 0 : index
    %c0_15 = arith.constant 0 : index
    %31 = vector.load %arg4[%c0_14, %c0_15] : memref<32x32xf32, #tpu.memory_space<vmem>>, vector<4x32xf32>
    %cst_16 = arith.constant dense<0.000000e+00> : vector<16x32xf32>
    %32 = tpu.matmul %30, %31, %cst_16 {dimension_numbers = #tpu.dot_dimension_numbers<[1], [0], [0], [1], [0, 0, 1, 1], [], []>} : vector<16x4xf32>, vector<4x32xf32>, vector<16x32xf32> -> vector<16x32xf32>
    %33 = vector.extract_strided_slice %10 {offsets = [0, 0, 4], sizes = [2, 8, 4], strides = [1, 1, 1]} : vector<2x8x32xf32> to vector<2x8x4xf32>
    %34 = vector.extract_strided_slice %11 {offsets = [0, 0, 4], sizes = [2, 8, 4], strides = [1, 1, 1]} : vector<2x8x32xf32> to vector<2x8x4xf32>
    %35 = vector.extract_strided_slice %12 {offsets = [0, 0, 4], sizes = [2, 8, 4], strides = [1, 1, 1]} : vector<2x8x32xf32> to vector<2x8x4xf32>
    "tpu.trace_start"() <{level = 10 : i32, message = "bqd,bkd->bqk"}> : () -> ()
    %cst_17 = arith.constant dense<0.000000e+00> : vector<2x8x8xf32>
    %36 = tpu.matmul %33, %34, %cst_17 {dimension_numbers = #tpu.dot_dimension_numbers<[2], [2], [1], [1], [0, 0, 0, 1, 1, 1], [0], [0]>} : vector<2x8x4xf32>, vector<2x8x4xf32>, vector<2x8x8xf32> -> vector<2x8x8xf32>
    "tpu.trace_stop"() : () -> ()
    %cst_18 = arith.constant dense<0xFF800000> : vector<2x8xf32>
    %37 = vector.multi_reduction <maximumf>, %36, %cst_18 [2] : vector<2x8x8xf32> to vector<2x8xf32>
    %38 = vector.shape_cast %37 : vector<2x8xf32> to vector<2x8x1xf32>
    %39 = vector.broadcast %38 : vector<2x8x1xf32> to vector<2x8x8xf32>
    %40 = arith.subf %36, %39 : vector<2x8x8xf32>
    %41 = math.exp %40 : vector<2x8x8xf32>
    %cst_19 = arith.constant dense<0.000000e+00> : vector<2x8xf32>
    %42 = vector.multi_reduction <add>, %41, %cst_19 [2] : vector<2x8x8xf32> to vector<2x8xf32>
    %43 = vector.shape_cast %42 : vector<2x8xf32> to vector<2x8x1xf32>
    %44 = vector.broadcast %43 : vector<2x8x1xf32> to vector<2x8x8xf32>
    %45 = arith.divf %41, %44 : vector<2x8x8xf32>
    %c0_20 = arith.constant 0 : index
    %c1 = arith.constant 1 : index
    %c0_21 = arith.constant 0 : index
    %c0_22 = arith.constant 0 : index
    %46 = vector.load %arg7[%c0_20, %c1, %c0_21, %c0_22] : memref<2x8x8x8xf32, #tpu.memory_space<vmem>>, vector<2x1x8x8xf32>
    %47 = vector.shape_cast %46 : vector<2x1x8x8xf32> to vector<2x8x8xf32>
    %48 = vector.shape_cast %45 : vector<2x8x8xf32> to vector<2x1x8x8xf32>
    tpu.vector_store %arg7[%c0_20, %c1, %c0_21, %c0_22], %48 {strides = array<i32>} : memref<2x8x8x8xf32, #tpu.memory_space<vmem>>, vector<2x1x8x8xf32>,
    "tpu.trace_start"() <{level = 10 : i32, message = "bqk,bkd->bqd"}> : () -> ()
    %cst_23 = arith.constant dense<0.000000e+00> : vector<2x8x4xf32>
    %49 = tpu.matmul %45, %35, %cst_23 {dimension_numbers = #tpu.dot_dimension_numbers<[2], [1], [1], [2], [0, 0, 0, 1, 1, 2], [0], [0]>} : vector<2x8x8xf32>, vector<2x8x4xf32>, vector<2x8x4xf32> -> vector<2x8x4xf32>
    "tpu.trace_stop"() : () -> ()
    %50 = vector.shape_cast %49 : vector<2x8x4xf32> to vector<16x4xf32>
    %c4 = arith.constant 4 : index
    %c0_24 = arith.constant 0 : index
    %51 = vector.load %arg4[%c4, %c0_24] : memref<32x32xf32, #tpu.memory_space<vmem>>, vector<4x32xf32>
    %cst_25 = arith.constant dense<0.000000e+00> : vector<16x32xf32>
    %52 = tpu.matmul %50, %51, %cst_25 {dimension_numbers = #tpu.dot_dimension_numbers<[1], [0], [0], [1], [0, 0, 1, 1], [], []>} : vector<16x4xf32>, vector<4x32xf32>, vector<16x32xf32> -> vector<16x32xf32>
    %53 = arith.addf %32, %52 : vector<16x32xf32>
    %54 = vector.extract_strided_slice %10 {offsets = [0, 0, 8], sizes = [2, 8, 4], strides = [1, 1, 1]} : vector<2x8x32xf32> to vector<2x8x4xf32>
    %55 = vector.extract_strided_slice %11 {offsets = [0, 0, 8], sizes = [2, 8, 4], strides = [1, 1, 1]} : vector<2x8x32xf32> to vector<2x8x4xf32>
    %56 = vector.extract_strided_slice %12 {offsets = [0, 0, 8], sizes = [2, 8, 4], strides = [1, 1, 1]} : vector<2x8x32xf32> to vector<2x8x4xf32>
    "tpu.trace_start"() <{level = 10 : i32, message = "bqd,bkd->bqk"}> : () -> ()
    %cst_26 = arith.constant dense<0.000000e+00> : vector<2x8x8xf32>
    %57 = tpu.matmul %54, %55, %cst_26 {dimension_numbers = #tpu.dot_dimension_numbers<[2], [2], [1], [1], [0, 0, 0, 1, 1, 1], [0], [0]>} : vector<2x8x4xf32>, vector<2x8x4xf32>, vector<2x8x8xf32> -> vector<2x8x8xf32>
    "tpu.trace_stop"() : () -> ()
    %cst_27 = arith.constant dense<0xFF800000> : vector<2x8xf32>
    %58 = vector.multi_reduction <maximumf>, %57, %cst_27 [2] : vector<2x8x8xf32> to vector<2x8xf32>
    %59 = vector.shape_cast %58 : vector<2x8xf32> to vector<2x8x1xf32>
    %60 = vector.broadcast %59 : vector<2x8x1xf32> to vector<2x8x8xf32>
    %61 = arith.subf %57, %60 : vector<2x8x8xf32>
    %62 = math.exp %61 : vector<2x8x8xf32>
    %cst_28 = arith.constant dense<0.000000e+00> : vector<2x8xf32>
    %63 = vector.multi_reduction <add>, %62, %cst_28 [2] : vector<2x8x8xf32> to vector<2x8xf32>
    %64 = vector.shape_cast %63 : vector<2x8xf32> to vector<2x8x1xf32>
    %65 = vector.broadcast %64 : vector<2x8x1xf32> to vector<2x8x8xf32>
    %66 = arith.divf %62, %65 : vector<2x8x8xf32>
    %c0_29 = arith.constant 0 : index
    %c2 = arith.constant 2 : index
    %c0_30 = arith.constant 0 : index
    %c0_31 = arith.constant 0 : index
    %67 = vector.load %arg7[%c0_29, %c2, %c0_30, %c0_31] : memref<2x8x8x8xf32, #tpu.memory_space<vmem>>, vector<2x1x8x8xf32>
    %68 = vector.shape_cast %67 : vector<2x1x8x8xf32> to vector<2x8x8xf32>
    %69 = vector.shape_cast %66 : vector<2x8x8xf32> to vector<2x1x8x8xf32>
    tpu.vector_store %arg7[%c0_29, %c2, %c0_30, %c0_31], %69 {strides = array<i32>} : memref<2x8x8x8xf32, #tpu.memory_space<vmem>>, vector<2x1x8x8xf32>,
    "tpu.trace_start"() <{level = 10 : i32, message = "bqk,bkd->bqd"}> : () -> ()
    %cst_32 = arith.constant dense<0.000000e+00> : vector<2x8x4xf32>
    %70 = tpu.matmul %66, %56, %cst_32 {dimension_numbers = #tpu.dot_dimension_numbers<[2], [1], [1], [2], [0, 0, 0, 1, 1, 2], [0], [0]>} : vector<2x8x8xf32>, vector<2x8x4xf32>, vector<2x8x4xf32> -> vector<2x8x4xf32>
    "tpu.trace_stop"() : () -> ()
    %71 = vector.shape_cast %70 : vector<2x8x4xf32> to vector<16x4xf32>
    %c8 = arith.constant 8 : index
    %c0_33 = arith.constant 0 : index
    %72 = vector.load %arg4[%c8, %c0_33] : memref<32x32xf32, #tpu.memory_space<vmem>>, vector<4x32xf32>
    %cst_34 = arith.constant dense<0.000000e+00> : vector<16x32xf32>
    %73 = tpu.matmul %71, %72, %cst_34 {dimension_numbers = #tpu.dot_dimension_numbers<[1], [0], [0], [1], [0, 0, 1, 1], [], []>} : vector<16x4xf32>, vector<4x32xf32>, vector<16x32xf32> -> vector<16x32xf32>
    %74 = arith.addf %53, %73 : vector<16x32xf32>
    %75 = vector.extract_strided_slice %10 {offsets = [0, 0, 12], sizes = [2, 8, 4], strides = [1, 1, 1]} : vector<2x8x32xf32> to vector<2x8x4xf32>
    %76 = vector.extract_strided_slice %11 {offsets = [0, 0, 12], sizes = [2, 8, 4], strides = [1, 1, 1]} : vector<2x8x32xf32> to vector<2x8x4xf32>
    %77 = vector.extract_strided_slice %12 {offsets = [0, 0, 12], sizes = [2, 8, 4], strides = [1, 1, 1]} : vector<2x8x32xf32> to vector<2x8x4xf32>
    "tpu.trace_start"() <{level = 10 : i32, message = "bqd,bkd->bqk"}> : () -> ()
    %cst_35 = arith.constant dense<0.000000e+00> : vector<2x8x8xf32>
    %78 = tpu.matmul %75, %76, %cst_35 {dimension_numbers = #tpu.dot_dimension_numbers<[2], [2], [1], [1], [0, 0, 0, 1, 1, 1], [0], [0]>} : vector<2x8x4xf32>, vector<2x8x4xf32>, vector<2x8x8xf32> -> vector<2x8x8xf32>
    "tpu.trace_stop"() : () -> ()
    %cst_36 = arith.constant dense<0xFF800000> : vector<2x8xf32>
    %79 = vector.multi_reduction <maximumf>, %78, %cst_36 [2] : vector<2x8x8xf32> to vector<2x8xf32>
    %80 = vector.shape_cast %79 : vector<2x8xf32> to vector<2x8x1xf32>
    %81 = vector.broadcast %80 : vector<2x8x1xf32> to vector<2x8x8xf32>
    %82 = arith.subf %78, %81 : vector<2x8x8xf32>
    %83 = math.exp %82 : vector<2x8x8xf32>
    %cst_37 = arith.constant dense<0.000000e+00> : vector<2x8xf32>
    %84 = vector.multi_reduction <add>, %83, %cst_37 [2] : vector<2x8x8xf32> to vector<2x8xf32>
    %85 = vector.shape_cast %84 : vector<2x8xf32> to vector<2x8x1xf32>
    %86 = vector.broadcast %85 : vector<2x8x1xf32> to vector<2x8x8xf32>
    %87 = arith.divf %83, %86 : vector<2x8x8xf32>
    %c0_38 = arith.constant 0 : index
    %c3 = arith.constant 3 : index
    %c0_39 = arith.constant 0 : index
    %c0_40 = arith.constant 0 : index
    %88 = vector.load %arg7[%c0_38, %c3, %c0_39, %c0_40] : memref<2x8x8x8xf32, #tpu.memory_space<vmem>>, vector<2x1x8x8xf32>
    %89 = vector.shape_cast %88 : vector<2x1x8x8xf32> to vector<2x8x8xf32>
    %90 = vector.shape_cast %87 : vector<2x8x8xf32> to vector<2x1x8x8xf32>
    tpu.vector_store %arg7[%c0_38, %c3, %c0_39, %c0_40], %90 {strides = array<i32>} : memref<2x8x8x8xf32, #tpu.memory_space<vmem>>, vector<2x1x8x8xf32>,
    "tpu.trace_start"() <{level = 10 : i32, message = "bqk,bkd->bqd"}> : () -> ()
    %cst_41 = arith.constant dense<0.000000e+00> : vector<2x8x4xf32>
    %91 = tpu.matmul %87, %77, %cst_41 {dimension_numbers = #tpu.dot_dimension_numbers<[2], [1], [1], [2], [0, 0, 0, 1, 1, 2], [0], [0]>} : vector<2x8x8xf32>, vector<2x8x4xf32>, vector<2x8x4xf32> -> vector<2x8x4xf32>
    "tpu.trace_stop"() : () -> ()
    %92 = vector.shape_cast %91 : vector<2x8x4xf32> to vector<16x4xf32>
    %c12 = arith.constant 12 : index
    %c0_42 = arith.constant 0 : index
    %93 = vector.load %arg4[%c12, %c0_42] : memref<32x32xf32, #tpu.memory_space<vmem>>, vector<4x32xf32>
    %cst_43 = arith.constant dense<0.000000e+00> : vector<16x32xf32>
    %94 = tpu.matmul %92, %93, %cst_43 {dimension_numbers = #tpu.dot_dimension_numbers<[1], [0], [0], [1], [0, 0, 1, 1], [], []>} : vector<16x4xf32>, vector<4x32xf32>, vector<16x32xf32> -> vector<16x32xf32>
    %95 = arith.addf %74, %94 : vector<16x32xf32>
    %96 = vector.extract_strided_slice %10 {offsets = [0, 0, 16], sizes = [2, 8, 4], strides = [1, 1, 1]} : vector<2x8x32xf32> to vector<2x8x4xf32>
    %97 = vector.extract_strided_slice %11 {offsets = [0, 0, 16], sizes = [2, 8, 4], strides = [1, 1, 1]} : vector<2x8x32xf32> to vector<2x8x4xf32>
    %98 = vector.extract_strided_slice %12 {offsets = [0, 0, 16], sizes = [2, 8, 4], strides = [1, 1, 1]} : vector<2x8x32xf32> to vector<2x8x4xf32>
    "tpu.trace_start"() <{level = 10 : i32, message = "bqd,bkd->bqk"}> : () -> ()
    %cst_44 = arith.constant dense<0.000000e+00> : vector<2x8x8xf32>
    %99 = tpu.matmul %96, %97, %cst_44 {dimension_numbers = #tpu.dot_dimension_numbers<[2], [2], [1], [1], [0, 0, 0, 1, 1, 1], [0], [0]>} : vector<2x8x4xf32>, vector<2x8x4xf32>, vector<2x8x8xf32> -> vector<2x8x8xf32>
    "tpu.trace_stop"() : () -> ()
    %cst_45 = arith.constant dense<0xFF800000> : vector<2x8xf32>
    %100 = vector.multi_reduction <maximumf>, %99, %cst_45 [2] : vector<2x8x8xf32> to vector<2x8xf32>
    %101 = vector.shape_cast %100 : vector<2x8xf32> to vector<2x8x1xf32>
    %102 = vector.broadcast %101 : vector<2x8x1xf32> to vector<2x8x8xf32>
    %103 = arith.subf %99, %102 : vector<2x8x8xf32>
    %104 = math.exp %103 : vector<2x8x8xf32>
    %cst_46 = arith.constant dense<0.000000e+00> : vector<2x8xf32>
    %105 = vector.multi_reduction <add>, %104, %cst_46 [2] : vector<2x8x8xf32> to vector<2x8xf32>
    %106 = vector.shape_cast %105 : vector<2x8xf32> to vector<2x8x1xf32>
    %107 = vector.broadcast %106 : vector<2x8x1xf32> to vector<2x8x8xf32>
    %108 = arith.divf %104, %107 : vector<2x8x8xf32>
    %c0_47 = arith.constant 0 : index
    %c4_48 = arith.constant 4 : index
    %c0_49 = arith.constant 0 : index
    %c0_50 = arith.constant 0 : index
    %109 = vector.load %arg7[%c0_47, %c4_48, %c0_49, %c0_50] : memref<2x8x8x8xf32, #tpu.memory_space<vmem>>, vector<2x1x8x8xf32>
    %110 = vector.shape_cast %109 : vector<2x1x8x8xf32> to vector<2x8x8xf32>
    %111 = vector.shape_cast %108 : vector<2x8x8xf32> to vector<2x1x8x8xf32>
    tpu.vector_store %arg7[%c0_47, %c4_48, %c0_49, %c0_50], %111 {strides = array<i32>} : memref<2x8x8x8xf32, #tpu.memory_space<vmem>>, vector<2x1x8x8xf32>,
    "tpu.trace_start"() <{level = 10 : i32, message = "bqk,bkd->bqd"}> : () -> ()
    %cst_51 = arith.constant dense<0.000000e+00> : vector<2x8x4xf32>
    %112 = tpu.matmul %108, %98, %cst_51 {dimension_numbers = #tpu.dot_dimension_numbers<[2], [1], [1], [2], [0, 0, 0, 1, 1, 2], [0], [0]>} : vector<2x8x8xf32>, vector<2x8x4xf32>, vector<2x8x4xf32> -> vector<2x8x4xf32>
    "tpu.trace_stop"() : () -> ()
    %113 = vector.shape_cast %112 : vector<2x8x4xf32> to vector<16x4xf32>
    %c16 = arith.constant 16 : index
    %c0_52 = arith.constant 0 : index
    %114 = vector.load %arg4[%c16, %c0_52] : memref<32x32xf32, #tpu.memory_space<vmem>>, vector<4x32xf32>
    %cst_53 = arith.constant dense<0.000000e+00> : vector<16x32xf32>
    %115 = tpu.matmul %113, %114, %cst_53 {dimension_numbers = #tpu.dot_dimension_numbers<[1], [0], [0], [1], [0, 0, 1, 1], [], []>} : vector<16x4xf32>, vector<4x32xf32>, vector<16x32xf32> -> vector<16x32xf32>
    %116 = arith.addf %95, %115 : vector<16x32xf32>
    %117 = vector.extract_strided_slice %10 {offsets = [0, 0, 20], sizes = [2, 8, 4], strides = [1, 1, 1]} : vector<2x8x32xf32> to vector<2x8x4xf32>
    %118 = vector.extract_strided_slice %11 {offsets = [0, 0, 20], sizes = [2, 8, 4], strides = [1, 1, 1]} : vector<2x8x32xf32> to vector<2x8x4xf32>
    %119 = vector.extract_strided_slice %12 {offsets = [0, 0, 20], sizes = [2, 8, 4], strides = [1, 1, 1]} : vector<2x8x32xf32> to vector<2x8x4xf32>
    "tpu.trace_start"() <{level = 10 : i32, message = "bqd,bkd->bqk"}> : () -> ()
    %cst_54 = arith.constant dense<0.000000e+00> : vector<2x8x8xf32>
    %120 = tpu.matmul %117, %118, %cst_54 {dimension_numbers = #tpu.dot_dimension_numbers<[2], [2], [1], [1], [0, 0, 0, 1, 1, 1], [0], [0]>} : vector<2x8x4xf32>, vector<2x8x4xf32>, vector<2x8x8xf32> -> vector<2x8x8xf32>
    "tpu.trace_stop"() : () -> ()
    %cst_55 = arith.constant dense<0xFF800000> : vector<2x8xf32>
    %121 = vector.multi_reduction <maximumf>, %120, %cst_55 [2] : vector<2x8x8xf32> to vector<2x8xf32>
    %122 = vector.shape_cast %121 : vector<2x8xf32> to vector<2x8x1xf32>
    %123 = vector.broadcast %122 : vector<2x8x1xf32> to vector<2x8x8xf32>
    %124 = arith.subf %120, %123 : vector<2x8x8xf32>
    %125 = math.exp %124 : vector<2x8x8xf32>
    %cst_56 = arith.constant dense<0.000000e+00> : vector<2x8xf32>
    %126 = vector.multi_reduction <add>, %125, %cst_56 [2] : vector<2x8x8xf32> to vector<2x8xf32>
    %127 = vector.shape_cast %126 : vector<2x8xf32> to vector<2x8x1xf32>
    %128 = vector.broadcast %127 : vector<2x8x1xf32> to vector<2x8x8xf32>
    %129 = arith.divf %125, %128 : vector<2x8x8xf32>
    %c0_57 = arith.constant 0 : index
    %c5 = arith.constant 5 : index
    %c0_58 = arith.constant 0 : index
    %c0_59 = arith.constant 0 : index
    %130 = vector.load %arg7[%c0_57, %c5, %c0_58, %c0_59] : memref<2x8x8x8xf32, #tpu.memory_space<vmem>>, vector<2x1x8x8xf32>
    %131 = vector.shape_cast %130 : vector<2x1x8x8xf32> to vector<2x8x8xf32>
    %132 = vector.shape_cast %129 : vector<2x8x8xf32> to vector<2x1x8x8xf32>
    tpu.vector_store %arg7[%c0_57, %c5, %c0_58, %c0_59], %132 {strides = array<i32>} : memref<2x8x8x8xf32, #tpu.memory_space<vmem>>, vector<2x1x8x8xf32>,
    "tpu.trace_start"() <{level = 10 : i32, message = "bqk,bkd->bqd"}> : () -> ()
    %cst_60 = arith.constant dense<0.000000e+00> : vector<2x8x4xf32>
    %133 = tpu.matmul %129, %119, %cst_60 {dimension_numbers = #tpu.dot_dimension_numbers<[2], [1], [1], [2], [0, 0, 0, 1, 1, 2], [0], [0]>} : vector<2x8x8xf32>, vector<2x8x4xf32>, vector<2x8x4xf32> -> vector<2x8x4xf32>
    "tpu.trace_stop"() : () -> ()
    %134 = vector.shape_cast %133 : vector<2x8x4xf32> to vector<16x4xf32>
    %c20 = arith.constant 20 : index
    %c0_61 = arith.constant 0 : index
    %135 = vector.load %arg4[%c20, %c0_61] : memref<32x32xf32, #tpu.memory_space<vmem>>, vector<4x32xf32>
    %cst_62 = arith.constant dense<0.000000e+00> : vector<16x32xf32>
    %136 = tpu.matmul %134, %135, %cst_62 {dimension_numbers = #tpu.dot_dimension_numbers<[1], [0], [0], [1], [0, 0, 1, 1], [], []>} : vector<16x4xf32>, vector<4x32xf32>, vector<16x32xf32> -> vector<16x32xf32>
    %137 = arith.addf %116, %136 : vector<16x32xf32>
    %138 = vector.extract_strided_slice %10 {offsets = [0, 0, 24], sizes = [2, 8, 4], strides = [1, 1, 1]} : vector<2x8x32xf32> to vector<2x8x4xf32>
    %139 = vector.extract_strided_slice %11 {offsets = [0, 0, 24], sizes = [2, 8, 4], strides = [1, 1, 1]} : vector<2x8x32xf32> to vector<2x8x4xf32>
    %140 = vector.extract_strided_slice %12 {offsets = [0, 0, 24], sizes = [2, 8, 4], strides = [1, 1, 1]} : vector<2x8x32xf32> to vector<2x8x4xf32>
    "tpu.trace_start"() <{level = 10 : i32, message = "bqd,bkd->bqk"}> : () -> ()
    %cst_63 = arith.constant dense<0.000000e+00> : vector<2x8x8xf32>
    %141 = tpu.matmul %138, %139, %cst_63 {dimension_numbers = #tpu.dot_dimension_numbers<[2], [2], [1], [1], [0, 0, 0, 1, 1, 1], [0], [0]>} : vector<2x8x4xf32>, vector<2x8x4xf32>, vector<2x8x8xf32> -> vector<2x8x8xf32>
    "tpu.trace_stop"() : () -> ()
    %cst_64 = arith.constant dense<0xFF800000> : vector<2x8xf32>
    %142 = vector.multi_reduction <maximumf>, %141, %cst_64 [2] : vector<2x8x8xf32> to vector<2x8xf32>
    %143 = vector.shape_cast %142 : vector<2x8xf32> to vector<2x8x1xf32>
    %144 = vector.broadcast %143 : vector<2x8x1xf32> to vector<2x8x8xf32>
    %145 = arith.subf %141, %144 : vector<2x8x8xf32>
    %146 = math.exp %145 : vector<2x8x8xf32>
    %cst_65 = arith.constant dense<0.000000e+00> : vector<2x8xf32>
    %147 = vector.multi_reduction <add>, %146, %cst_65 [2] : vector<2x8x8xf32> to vector<2x8xf32>
    %148 = vector.shape_cast %147 : vector<2x8xf32> to vector<2x8x1xf32>
    %149 = vector.broadcast %148 : vector<2x8x1xf32> to vector<2x8x8xf32>
    %150 = arith.divf %146, %149 : vector<2x8x8xf32>
    %c0_66 = arith.constant 0 : index
    %c6 = arith.constant 6 : index
    %c0_67 = arith.constant 0 : index
    %c0_68 = arith.constant 0 : index
    %151 = vector.load %arg7[%c0_66, %c6, %c0_67, %c0_68] : memref<2x8x8x8xf32, #tpu.memory_space<vmem>>, vector<2x1x8x8xf32>
    %152 = vector.shape_cast %151 : vector<2x1x8x8xf32> to vector<2x8x8xf32>
    %153 = vector.shape_cast %150 : vector<2x8x8xf32> to vector<2x1x8x8xf32>
    tpu.vector_store %arg7[%c0_66, %c6, %c0_67, %c0_68], %153 {strides = array<i32>} : memref<2x8x8x8xf32, #tpu.memory_space<vmem>>, vector<2x1x8x8xf32>,
    "tpu.trace_start"() <{level = 10 : i32, message = "bqk,bkd->bqd"}> : () -> ()
    %cst_69 = arith.constant dense<0.000000e+00> : vector<2x8x4xf32>
    %154 = tpu.matmul %150, %140, %cst_69 {dimension_numbers = #tpu.dot_dimension_numbers<[2], [1], [1], [2], [0, 0, 0, 1, 1, 2], [0], [0]>} : vector<2x8x8xf32>, vector<2x8x4xf32>, vector<2x8x4xf32> -> vector<2x8x4xf32>
    "tpu.trace_stop"() : () -> ()
    %155 = vector.shape_cast %154 : vector<2x8x4xf32> to vector<16x4xf32>
    %c24 = arith.constant 24 : index
    %c0_70 = arith.constant 0 : index
    %156 = vector.load %arg4[%c24, %c0_70] : memref<32x32xf32, #tpu.memory_space<vmem>>, vector<4x32xf32>
    %cst_71 = arith.constant dense<0.000000e+00> : vector<16x32xf32>
    %157 = tpu.matmul %155, %156, %cst_71 {dimension_numbers = #tpu.dot_dimension_numbers<[1], [0], [0], [1], [0, 0, 1, 1], [], []>} : vector<16x4xf32>, vector<4x32xf32>, vector<16x32xf32> -> vector<16x32xf32>
    %158 = arith.addf %137, %157 : vector<16x32xf32>
    %159 = vector.extract_strided_slice %10 {offsets = [0, 0, 28], sizes = [2, 8, 4], strides = [1, 1, 1]} : vector<2x8x32xf32> to vector<2x8x4xf32>
    %160 = vector.extract_strided_slice %11 {offsets = [0, 0, 28], sizes = [2, 8, 4], strides = [1, 1, 1]} : vector<2x8x32xf32> to vector<2x8x4xf32>
    %161 = vector.extract_strided_slice %12 {offsets = [0, 0, 28], sizes = [2, 8, 4], strides = [1, 1, 1]} : vector<2x8x32xf32> to vector<2x8x4xf32>
    "tpu.trace_start"() <{level = 10 : i32, message = "bqd,bkd->bqk"}> : () -> ()
    %cst_72 = arith.constant dense<0.000000e+00> : vector<2x8x8xf32>
    %162 = tpu.matmul %159, %160, %cst_72 {dimension_numbers = #tpu.dot_dimension_numbers<[2], [2], [1], [1], [0, 0, 0, 1, 1, 1], [0], [0]>} : vector<2x8x4xf32>, vector<2x8x4xf32>, vector<2x8x8xf32> -> vector<2x8x8xf32>
    "tpu.trace_stop"() : () -> ()
    %cst_73 = arith.constant dense<0xFF800000> : vector<2x8xf32>
    %163 = vector.multi_reduction <maximumf>, %162, %cst_73 [2] : vector<2x8x8xf32> to vector<2x8xf32>
    %164 = vector.shape_cast %163 : vector<2x8xf32> to vector<2x8x1xf32>
    %165 = vector.broadcast %164 : vector<2x8x1xf32> to vector<2x8x8xf32>
    %166 = arith.subf %162, %165 : vector<2x8x8xf32>
    %167 = math.exp %166 : vector<2x8x8xf32>
    %cst_74 = arith.constant dense<0.000000e+00> : vector<2x8xf32>
    %168 = vector.multi_reduction <add>, %167, %cst_74 [2] : vector<2x8x8xf32> to vector<2x8xf32>
    %169 = vector.shape_cast %168 : vector<2x8xf32> to vector<2x8x1xf32>
    %170 = vector.broadcast %169 : vector<2x8x1xf32> to vector<2x8x8xf32>
    %171 = arith.divf %167, %170 : vector<2x8x8xf32>
    %c0_75 = arith.constant 0 : index
    %c7 = arith.constant 7 : index
    %c0_76 = arith.constant 0 : index
    %c0_77 = arith.constant 0 : index
    %172 = vector.load %arg7[%c0_75, %c7, %c0_76, %c0_77] : memref<2x8x8x8xf32, #tpu.memory_space<vmem>>, vector<2x1x8x8xf32>
    %173 = vector.shape_cast %172 : vector<2x1x8x8xf32> to vector<2x8x8xf32>
    %174 = vector.shape_cast %171 : vector<2x8x8xf32> to vector<2x1x8x8xf32>
    tpu.vector_store %arg7[%c0_75, %c7, %c0_76, %c0_77], %174 {strides = array<i32>} : memref<2x8x8x8xf32, #tpu.memory_space<vmem>>, vector<2x1x8x8xf32>,
    "tpu.trace_start"() <{level = 10 : i32, message = "bqk,bkd->bqd"}> : () -> ()
    %cst_78 = arith.constant dense<0.000000e+00> : vector<2x8x4xf32>
    %175 = tpu.matmul %171, %161, %cst_78 {dimension_numbers = #tpu.dot_dimension_numbers<[2], [1], [1], [2], [0, 0, 0, 1, 1, 2], [0], [0]>} : vector<2x8x8xf32>, vector<2x8x4xf32>, vector<2x8x4xf32> -> vector<2x8x4xf32>
    "tpu.trace_stop"() : () -> ()
    %176 = vector.shape_cast %175 : vector<2x8x4xf32> to vector<16x4xf32>
    %c28 = arith.constant 28 : index
    %c0_79 = arith.constant 0 : index
    %177 = vector.load %arg4[%c28, %c0_79] : memref<32x32xf32, #tpu.memory_space<vmem>>, vector<4x32xf32>
    %cst_80 = arith.constant dense<0.000000e+00> : vector<16x32xf32>
    %178 = tpu.matmul %176, %177, %cst_80 {dimension_numbers = #tpu.dot_dimension_numbers<[1], [0], [0], [1], [0, 0, 1, 1], [], []>} : vector<16x4xf32>, vector<4x32xf32>, vector<16x32xf32> -> vector<16x32xf32>
    %179 = arith.addf %158, %178 : vector<16x32xf32>
    %c0_81 = arith.constant 0 : index
    %c0_82 = arith.constant 0 : index
    %180 = vector.load %arg5[%c0_81, %c0_82] : memref<1x32xf32, #tpu.memory_space<vmem>>, vector<1x32xf32>
    %181 = vector.broadcast %180 : vector<1x32xf32> to vector<16x32xf32>
    %182 = arith.addf %179, %181 : vector<16x32xf32>
    %183 = vector.shape_cast %182 : vector<16x32xf32> to vector<2x8x32xf32>
    %c0_83 = arith.constant 0 : index
    %c0_84 = arith.constant 0 : index
    %c0_85 = arith.constant 0 : index
    %184 = vector.load %arg6[%c0_83, %c0_84, %c0_85] : memref<2x8x32xf32, #tpu.memory_space<vmem>>, vector<2x8x32xf32>
    tpu.vector_store %arg6[%c0_83, %c0_84, %c0_85], %183 {strides = array<i32>} : memref<2x8x32xf32, #tpu.memory_space<vmem>>, vector<2x8x32xf32>,
    return
  }
  func.func @transform_0(%arg0: i32) -> (i32, i32, i32) {
    %c0_i32 = arith.constant 0 : i32
    %c0_i32_0 = arith.constant 0 : i32
    %c0_i32_1 = arith.constant 0 : i32
    return %arg0, %c0_i32, %c0_i32_0 : i32, i32, i32
  }
  func.func @transform_1(%arg0: i32) -> (i32, i32) {
    %c0_i32 = arith.constant 0 : i32
    %c0_i32_0 = arith.constant 0 : i32
    %c0_i32_1 = arith.constant 0 : i32
    return %c0_i32, %c0_i32_0 : i32, i32
  }
  func.func @transform_2(%arg0: i32) -> (i32, i32) {
    %c0_i32 = arith.constant 0 : i32
    %c0_i32_0 = arith.constant 0 : i32
    %c0_i32_1 = arith.constant 0 : i32
    return %c0_i32, %c0_i32_0 : i32, i32
  }
  func.func @transform_3(%arg0: i32) -> (i32, i32) {
    %c0_i32 = arith.constant 0 : i32
    %c0_i32_0 = arith.constant 0 : i32
    %c0_i32_1 = arith.constant 0 : i32
    return %c0_i32, %c0_i32_0 : i32, i32
  }
  func.func @transform_4(%arg0: i32) -> (i32, i32) {
    %c0_i32 = arith.constant 0 : i32
    %c0_i32_0 = arith.constant 0 : i32
    %c0_i32_1 = arith.constant 0 : i32
    return %c0_i32, %c0_i32_0 : i32, i32
  }
  func.func @transform_5(%arg0: i32) -> (i32, i32, i32) {
    %c0_i32 = arith.constant 0 : i32
    %c0_i32_0 = arith.constant 0 : i32
    %c0_i32_1 = arith.constant 0 : i32
    return %arg0, %c0_i32, %c0_i32_0 : i32, i32, i32
  }
  func.func @transform_6(%arg0: i32) -> (i32, i32, i32, i32) {
    %c0_i32 = arith.constant 0 : i32
    %c0_i32_0 = arith.constant 0 : i32
    %c0_i32_1 = arith.constant 0 : i32
    %c0_i32_2 = arith.constant 0 : i32
    return %arg0, %c0_i32, %c0_i32_0, %c0_i32_1 : i32, i32, i32, i32
  }
}

</mosaic_0001>

<llo_original>
// kernel: tpu_custom_call.1
$region0: #{tpu_custom_call.1}
  #allocation0 [shape = 'u32[]', space=smem, size = 0x4, offset = 0x4, fixed_abs, tag = 'smem constant byte address 0x4 - core index']
  #allocation1 [shape = 'u32[144,128]{1,0:T(1,128)}', space=vmem, size = 0x12000, scoped, tag = 'internal scratch']
  %s0 = inlined_call_operand.hbm [shape: f32[2,8,32], index: 0, kind: input, shape index: {}]
  %s1 = inlined_call_operand.hbm [shape: f32[32,96], index: 1, kind: input, shape index: {}]
  %s2 = inlined_call_operand.vmem [shape: f32[1,96], index: 2, kind: input, shape index: {}]
  %s3 = inlined_call_operand.hbm [shape: f32[32,32], index: 3, kind: input, shape index: {}]
  %s4 = inlined_call_operand.vmem [shape: f32[1,32], index: 4, kind: input, shape index: {}]
  %s5 = inlined_call_operand.hbm [shape: f32[2,8,32], index: 5, kind: output, shape index: {0}]
  %s6 = inlined_call_operand.hbm [shape: f32[2,8,8,8], index: 6, kind: output, shape index: {1}]
  %7 = xla_tuple %s5, %s6
  %s8 = sld [smem:[#allocation0]]
  $region50: #{tpu_custom_call.1} parent=0
    _
  %s10 = ssub.s32 1, %s8
  %s11 = scalar_select 0, %s10, %s8
  $region1: #{tpu_custom_call.1} parent=0
    #allocation2 [shape = 'u8[8192]{0}', space=vmem, size = 0x2000, scoped, tag = 'input window, operand 0, single buffered']
    #allocation3 [shape = 's32[1]{0}', space=sflag, size = 0x4, scoped, tag = 'scoped memory for tpu_custom_call.1']
    #allocation4 [shape = 's32[1]{0}', space=sflag, size = 0x4, scoped, tag = 'scoped memory for tpu_custom_call.1']
    #allocation5 [shape = 'u8[16384]{0}', space=vmem, size = 0x4000, scoped, tag = 'input window, operand 1, single buffered']
    #allocation6 [shape = 's32[1]{0}', space=sflag, size = 0x4, scoped, tag = 'scoped memory for tpu_custom_call.1']
    #allocation7 [shape = 'u8[16384]{0}', space=vmem, size = 0x4000, scoped, tag = 'input window, operand 3, single buffered']
    #allocation8 [shape = 'u8[8192]{0}', space=vmem, size = 0x2000, scoped, tag = 'output window, operand 0, single buffered']
    #allocation9 [shape = 'u8[65536]{0}', space=vmem, size = 0x10000, scoped, tag = 'output window, operand 1, single buffered']
    #allocation10 [shape = 's32[1]{0}', space=sflag, size = 0x4, scoped, tag = 'scoped memory for tpu_custom_call.1']
    %12 = vsyncpa [#allocation3], 0
    %13 = vsyncpa [#allocation6], 0
    %14 = vsyncpa [#allocation4], 0
    %15 = vsyncpa [#allocation10], 0
    // Predicated region
    $region2: #{tpu_custom_call.1} parent=1 // pred_check
      _
    $region3: #{tpu_custom_call.1} parent=1 // pred_check_branch
      %17 = sbr.rel (0) target = $region5
    $region4: #{tpu_custom_call.1} parent=1 // pred_region
      %s19 = ssub.s32 256, 256
      %20 = vsyncadd [#allocation3], %s19
      %s21 = sshll.u32 [#allocation2], 4
      %s22 = int_to_ptr.vmem [resolvable:$true] %s21
      %27 = dma.hbm_to_vmem [thread:$0]  %s0, 256, %s22, [#allocation3], 128, 128, 8
    $region5: #{tpu_custom_call.1} parent=1 // pred_fallthru
      _
    // Predicated region
    $region6: #{tpu_custom_call.1} parent=1 // pred_check
      _
    $region7: #{tpu_custom_call.1} parent=1 // pred_check_branch
      %29 = sbr.rel (0) target = $region9
    $region8: #{tpu_custom_call.1} parent=1 // pred_region
      %s31 = ssub.s32 512, 512
      %32 = vsyncadd [#allocation6], %s31
      %s33 = sshll.u32 [#allocation5], 4
      %s34 = int_to_ptr.vmem [resolvable:$true] %s33
      %39 = dma.hbm_to_vmem [thread:$0]  %s1, 512, %s34, [#allocation6], 128, 128, 8
    $region9: #{tpu_custom_call.1} parent=1 // pred_fallthru
      _
    // Predicated region
    $region10: #{tpu_custom_call.1} parent=1 // pred_check
      _
    $region11: #{tpu_custom_call.1} parent=1 // pred_check_branch
      %41 = sbr.rel (0) target = $region13
    $region12: #{tpu_custom_call.1} parent=1 // pred_region
      _
    $region13: #{tpu_custom_call.1} parent=1 // pred_fallthru
      _
    // Predicated region
    $region14: #{tpu_custom_call.1} parent=1 // pred_check
      _
    $region15: #{tpu_custom_call.1} parent=1 // pred_check_branch
      %43 = sbr.rel (0) target = $region17
    $region16: #{tpu_custom_call.1} parent=1 // pred_region
      %s45 = ssub.s32 512, 512
      %46 = vsyncadd [#allocation6], %s45
      %s47 = sshll.u32 [#allocation7], 4
      %s48 = int_to_ptr.vmem [resolvable:$true] %s47
      %53 = dma.hbm_to_vmem [thread:$0]  %s3, 512, %s48, [#allocation6], 128, 128, 8
    $region17: #{tpu_custom_call.1} parent=1 // pred_fallthru
      _
    // Predicated region
    $region18: #{tpu_custom_call.1} parent=1 // pred_check
      _
    $region19: #{tpu_custom_call.1} parent=1 // pred_check_branch
      %55 = sbr.rel (0) target = $region21
    $region20: #{tpu_custom_call.1} parent=1 // pred_region
      _
    $region21: #{tpu_custom_call.1} parent=1 // pred_fallthru
      _
    // Predicated region
    $region22: #{tpu_custom_call.1} parent=1 // pred_check
      _
    $region23: #{tpu_custom_call.1} parent=1 // pred_check_branch
      %57 = sbr.rel (0) target = $region25
    $region24: #{tpu_custom_call.1} parent=1 // pred_region
      %58 = dma.done [#allocation3], 256
    $region25: #{tpu_custom_call.1} parent=1 // pred_fallthru
      _
    // Predicated region
    $region26: #{tpu_custom_call.1} parent=1 // pred_check
      _
    $region27: #{tpu_custom_call.1} parent=1 // pred_check_branch
      %60 = sbr.rel (0) target = $region29
    $region28: #{tpu_custom_call.1} parent=1 // pred_region
      %61 = dma.done [#allocation6], 512
    $region29: #{tpu_custom_call.1} parent=1 // pred_fallthru
      _
    // Predicated region
    $region30: #{tpu_custom_call.1} parent=1 // pred_check
      _
    $region31: #{tpu_custom_call.1} parent=1 // pred_check_branch
      %63 = sbr.rel (0) target = $region33
    $region32: #{tpu_custom_call.1} parent=1 // pred_region
      %64 = dma.done [#allocation6], 512
    $region33: #{tpu_custom_call.1} parent=1 // pred_fallthru
      _
    %v65 = vld [vmem:[#allocation2] sm:$0xff]
    %v66 = vld [vmem:[#allocation2 + $0x8] sm:$0xff]
    %v67 = vld [vmem:[#allocation5] sm:$0xff]
    %v68 = vld [vmem:[#allocation5 + $0x8] sm:$0xff]
    %v69 = vld [vmem:[#allocation5 + $0x10] sm:$0xff]
    %v70 = vld [vmem:[#allocation5 + $0x18] sm:$0xff]
    %v71 = vld [vmem:[%s2] sm:$0x1]
    %v73 = vlaneseq
    %v74 = vshrl.u32 %v73, 7
    %v75 = vsub.s32 0, %v74
    %v76 = vrot.slane %v71, %v75
    %vm78 = vcmask 261120
    %v80 = vsel %vm78, %v65, 0
    %v83 = vsel %vm78, %v66, 0
    %85 = vmatprep.subr.mxu0 0.0
    %86 = vmatpush1.msra.mxu0 %v67
    %87 = vmatprep.subr.mxu0 0.0
    %88 = vmatpush1.msra.mxu0 %v68
    %89 = vmatprep.subr.mxu0 0.0
    %90 = vmatpush1.msra.mxu0 %v69
    %91 = vmatprep.subr.mxu0 0.0
    %92 = vmatpush1.msra.mxu0 %v70
    %93 = vmatprep.subr.mxu0 0.0
    %94 = vmatpush1.msra.mxu0 0.0
    %95 = vmatprep.subr.mxu0 0.0
    %96 = vmatpush1.msra.mxu0 0.0
    %97 = vmatprep.subr.mxu0 0.0
    %98 = vmatpush1.msra.mxu0 0.0
    %99 = vmatprep.subr.mxu0 0.0
    %100 = vmatpush1.msra.mxu0 0.0
    %101 = vmatprep.subr.mxu0 0.0
    %102 = vmatpush1.msra.mxu0 0.0
    %103 = vmatprep.subr.mxu0 0.0
    %104 = vmatpush1.msra.mxu0 0.0
    %105 = vmatprep.subr.mxu0 0.0
    %106 = vmatpush1.msra.mxu0 0.0
    %107 = vmatprep.subr.mxu0 0.0
    %108 = vmatpush1.msra.mxu0 0.0
    %109 = vmatprep.subr.mxu0 0.0
    %110 = vmatpush1.msra.mxu0 0.0
    %111 = vmatprep.subr.mxu0 0.0
    %112 = vmatpush1.msra.mxu0 0.0
    %113 = vmatprep.subr.mxu0 0.0
    %114 = vmatpush1.msra.mxu0 0.0
    %115 = vmatprep.subr.mxu0 0.0
    %116 = vmatpush1.msra.mxu0 0.0
    %117 = vmatprep.subr.mxu0 0.0
    %118 = vmatpush1.msra.mxu0 0.0
    %119 = vmatprep.subr.mxu0 0.0
    %120 = vmatpush1.msra.mxu0 0.0
    %121 = vmatprep.subr.mxu0 0.0
    %122 = vmatpush1.msra.mxu0 0.0
    %123 = vmatprep.subr.mxu0 0.0
    %124 = vmatpush1.msra.mxu0 0.0
    %125 = vmatprep.subr.mxu0 0.0
    %126 = vmatpush1.msra.mxu0 0.0
    %127 = vmatprep.subr.mxu0 0.0
    %128 = vmatpush1.msra.mxu0 0.0
    %129 = vmatprep.subr.mxu0 0.0
    %130 = vmatpush1.msra.mxu0 0.0
    %131 = vmatprep.subr.mxu0 0.0
    %132 = vmatpush1.msra.mxu0 0.0
    %133 = vmatprep.subr.mxu0 0.0
    %134 = vmatpush1.msra.mxu0 0.0
    %135 = vmatprep.subr.mxu0 0.0
    %136 = vmatpush1.msra.mxu0 0.0
    %137 = vmatprep.subr.mxu0 0.0
    %138 = vmatpush1.msra.mxu0 0.0
    %139 = vmatprep.subr.mxu0 0.0
    %140 = vmatpush1.msra.mxu0 0.0
    %141 = vmatprep.subr.mxu0 0.0
    %142 = vmatpush1.msra.mxu0 0.0
    %143 = vmatprep.subr.mxu0 0.0
    %144 = vmatpush1.msra.mxu0 0.0
    %145 = vmatprep.subr.mxu0 0.0
    %146 = vmatpush1.msra.mxu0 0.0
    %147 = vmatprep.subr.mxu0 0.0
    %148 = vmatpush1.msra.mxu0 0.0
    %149 = vmatprep.mubr.f32.mxu0 0.0
    %150 = vmatmul.mubr.f32.gmra.mrb[0].mxu0 %v80
    %v151 = vpop.f32.mrb[0].mxu0
    %v152 = vadd.f32 %v76, %v151
    %v153 = vpop.f32.mrb[0].mxu0
    %154 = vmatprep.mubr.f32.mxu0 0.0
    %155 = vmatmul.mubr.f32.gmra.mrb[0].mxu0 %v83
    %v156 = vpop.f32.mrb[0].mxu0
    %v157 = vadd.f32 %v76, %v156
    %v158 = vpop.f32.mrb[0].mxu0
    %159 = vdwg.mxu0
    %161 = vrot.lane.b32.xlu0 %v152, 96
    %v162 = vpop.permute.xlu0 %161
    %vm163 = vcmask 31744
    %v164 = vsel %vm163, %v152, 0
    %v166 = vsel %vm163, %v162, 0
    %168 = vmatprep.subr.mxu0 0.0
    %169 = vmatpush1.xpose.msra.mxu0 %v166
    %170 = vmatprep.subr.mxu0 0.0
    %171 = vmatpush1.xpose.msra.mxu0 0.0
    %172 = vmatprep.subr.mxu0 0.0
    %173 = vmatpush1.xpose.msra.mxu0 0.0
    %174 = vmatprep.subr.mxu0 0.0
    %175 = vmatpush1.xpose.msra.mxu0 0.0
    %176 = vmatprep.subr.mxu0 0.0
    %177 = vmatpush1.xpose.msra.mxu0 0.0
    %178 = vmatprep.subr.mxu0 0.0
    %179 = vmatpush1.xpose.msra.mxu0 0.0
    %180 = vmatprep.subr.mxu0 0.0
    %181 = vmatpush1.xpose.msra.mxu0 0.0
    %182 = vmatprep.subr.mxu0 0.0
    %183 = vmatpush1.xpose.msra.mxu0 0.0
    %184 = vmatprep.subr.mxu0 0.0
    %185 = vmatpush1.xpose.msra.mxu0 0.0
    %186 = vmatprep.subr.mxu0 0.0
    %187 = vmatpush1.xpose.msra.mxu0 0.0
    %188 = vmatprep.subr.mxu0 0.0
    %189 = vmatpush1.xpose.msra.mxu0 0.0
    %190 = vmatprep.subr.mxu0 0.0
    %191 = vmatpush1.xpose.msra.mxu0 0.0
    %192 = vmatprep.subr.mxu0 0.0
    %193 = vmatpush1.xpose.msra.mxu0 0.0
    %194 = vmatprep.subr.mxu0 0.0
    %195 = vmatpush1.xpose.msra.mxu0 0.0
    %196 = vmatprep.subr.mxu0 0.0
    %197 = vmatpush1.xpose.msra.mxu0 0.0
    %198 = vmatprep.subr.mxu0 0.0
    %199 = vmatpush1.xpose.msra.mxu0 0.0
    %200 = vmatprep.subr.mxu0 0.0
    %201 = vmatpush1.xpose.msra.mxu0 0.0
    %202 = vmatprep.subr.mxu0 0.0
    %203 = vmatpush1.xpose.msra.mxu0 0.0
    %204 = vmatprep.subr.mxu0 0.0
    %205 = vmatpush1.xpose.msra.mxu0 0.0
    %206 = vmatprep.subr.mxu0 0.0
    %207 = vmatpush1.xpose.msra.mxu0 0.0
    %208 = vmatprep.subr.mxu0 0.0
    %209 = vmatpush1.xpose.msra.mxu0 0.0
    %210 = vmatprep.subr.mxu0 0.0
    %211 = vmatpush1.xpose.msra.mxu0 0.0
    %212 = vmatprep.subr.mxu0 0.0
    %213 = vmatpush1.xpose.msra.mxu0 0.0
    %214 = vmatprep.subr.mxu0 0.0
    %215 = vmatpush1.xpose.msra.mxu0 0.0
    %216 = vmatprep.subr.mxu0 0.0
    %217 = vmatpush1.xpose.msra.mxu0 0.0
    %218 = vmatprep.subr.mxu0 0.0
    %219 = vmatpush1.xpose.msra.mxu0 0.0
    %220 = vmatprep.subr.mxu0 0.0
    %221 = vmatpush1.xpose.msra.mxu0 0.0
    %222 = vmatprep.subr.mxu0 0.0
    %223 = vmatpush1.xpose.msra.mxu0 0.0
    %224 = vmatprep.subr.mxu0 0.0
    %225 = vmatpush1.xpose.msra.mxu0 0.0
    %226 = vmatprep.subr.mxu0 0.0
    %227 = vmatpush1.xpose.msra.mxu0 0.0
    %228 = vmatprep.subr.mxu0 0.0
    %229 = vmatpush1.xpose.msra.mxu0 0.0
    %230 = vmatprep.subr.mxu0 0.0
    %231 = vmatpush1.xpose.msra.mxu0 0.0
    %232 = vmatprep.mubr.f32.mxu0 0.0
    %233 = vmatmul.mubr.f32.gmra.mrb[0].mxu0 %v164
    %v234 = vpop.f32.mrb[0].mxu0
    %v235 = vadd.f32 0.0, %v234
    %v236 = vpop.f32.mrb[0].mxu0
    %237 = vdwg.mxu0
    %239 = vrot.lane.b32.xlu0 %v157, 96
    %v240 = vpop.permute.xlu0 %239
    %v241 = vsel %vm163, %v157, 0
    %v243 = vsel %vm163, %v240, 0
    %245 = vmatprep.subr.mxu0 0.0
    %246 = vmatpush1.xpose.msra.mxu0 %v243
    %247 = vmatprep.subr.mxu0 0.0
    %248 = vmatpush1.xpose.msra.mxu0 0.0
    %249 = vmatprep.subr.mxu0 0.0
    %250 = vmatpush1.xpose.msra.mxu0 0.0
    %251 = vmatprep.subr.mxu0 0.0
    %252 = vmatpush1.xpose.msra.mxu0 0.0
    %253 = vmatprep.subr.mxu0 0.0
    %254 = vmatpush1.xpose.msra.mxu0 0.0
    %255 = vmatprep.subr.mxu0 0.0
    %256 = vmatpush1.xpose.msra.mxu0 0.0
    %257 = vmatprep.subr.mxu0 0.0
    %258 = vmatpush1.xpose.msra.mxu0 0.0
    %259 = vmatprep.subr.mxu0 0.0
    %260 = vmatpush1.xpose.msra.mxu0 0.0
    %261 = vmatprep.subr.mxu0 0.0
    %262 = vmatpush1.xpose.msra.mxu0 0.0
    %263 = vmatprep.subr.mxu0 0.0
    %264 = vmatpush1.xpose.msra.mxu0 0.0
    %265 = vmatprep.subr.mxu0 0.0
    %266 = vmatpush1.xpose.msra.mxu0 0.0
    %267 = vmatprep.subr.mxu0 0.0
    %268 = vmatpush1.xpose.msra.mxu0 0.0
    %269 = vmatprep.subr.mxu0 0.0
    %270 = vmatpush1.xpose.msra.mxu0 0.0
    %271 = vmatprep.subr.mxu0 0.0
    %272 = vmatpush1.xpose.msra.mxu0 0.0
    %273 = vmatprep.subr.mxu0 0.0
    %274 = vmatpush1.xpose.msra.mxu0 0.0
    %275 = vmatprep.subr.mxu0 0.0
    %276 = vmatpush1.xpose.msra.mxu0 0.0
    %277 = vmatprep.subr.mxu0 0.0
    %278 = vmatpush1.xpose.msra.mxu0 0.0
    %279 = vmatprep.subr.mxu0 0.0
    %280 = vmatpush1.xpose.msra.mxu0 0.0
    %281 = vmatprep.subr.mxu0 0.0
    %282 = vmatpush1.xpose.msra.mxu0 0.0
    %283 = vmatprep.subr.mxu0 0.0
    %284 = vmatpush1.xpose.msra.mxu0 0.0
    %285 = vmatprep.subr.mxu0 0.0
    %286 = vmatpush1.xpose.msra.mxu0 0.0
    %287 = vmatprep.subr.mxu0 0.0
    %288 = vmatpush1.xpose.msra.mxu0 0.0
    %289 = vmatprep.subr.mxu0 0.0
    %290 = vmatpush1.xpose.msra.mxu0 0.0
    %291 = vmatprep.subr.mxu0 0.0
    %292 = vmatpush1.xpose.msra.mxu0 0.0
    %293 = vmatprep.subr.mxu0 0.0
    %294 = vmatpush1.xpose.msra.mxu0 0.0
    %295 = vmatprep.subr.mxu0 0.0
    %296 = vmatpush1.xpose.msra.mxu0 0.0
    %297 = vmatprep.subr.mxu0 0.0
    %298 = vmatpush1.xpose.msra.mxu0 0.0
    %299 = vmatprep.subr.mxu0 0.0
    %300 = vmatpush1.xpose.msra.mxu0 0.0
    %301 = vmatprep.subr.mxu0 0.0
    %302 = vmatpush1.xpose.msra.mxu0 0.0
    %303 = vmatprep.subr.mxu0 0.0
    %304 = vmatpush1.xpose.msra.mxu0 0.0
    %305 = vmatprep.subr.mxu0 0.0
    %306 = vmatpush1.xpose.msra.mxu0 0.0
    %307 = vmatprep.subr.mxu0 0.0
    %308 = vmatpush1.xpose.msra.mxu0 0.0
    %309 = vmatprep.mubr.f32.mxu0 0.0
    %310 = vmatmul.mubr.f32.gmra.mrb[0].mxu0 %v241
    %v311 = vpop.f32.mrb[0].mxu0
    %v312 = vadd.f32 0.0, %v311
    %v313 = vpop.f32.mrb[0].mxu0
    %314 = vdwg.mxu0
    %vm315 = vcmask 64512
    %v316 = vsel %vm315, %v235, -inf
    %317 = vmax.xlane.f32.xlu0 %v316
    %v318 = vpop.xlane.xlu0 %317
    %v319 = vsel %vm315, %v312, -inf
    %320 = vmax.xlane.f32.xlu0 %v319
    %v321 = vpop.xlane.xlu0 %320
    %v322 = vsub.f32 %v235, %v318
    %v323 = vsub.f32 %v312, %v321
    %v324 = vmul.f32 %v322, 1.442695
    %v325 = vpow.pop %v324
    %v326 = vmul.f32 %v323, 1.442695
    %v327 = vpow.pop %v326
    %v328 = vsel %vm315, %v325, 0.0
    %329 = vadd.xlane.f32.xlu0 %v328
    %v330 = vpop.xlane.xlu0 %329
    %v331 = vsel %vm315, %v327, 0.0
    %332 = vadd.xlane.f32.xlu0 %v331
    %v333 = vpop.xlane.xlu0 %332
    %v334 = vrcp.pop %v330
    %v335 = vmul.f32 %v325, %v334
    %v336 = vrcp.pop %v333
    %v337 = vmul.f32 %v327, %v336
    %338 = vst.msk [vmem:[#allocation9] sm:$0xff] %vm315, %v335
    %339 = vst.msk [vmem:[#allocation9 + $0x40] sm:$0xff] %vm315, %v337
    %340 = vrot.lane.b32.xlu0 %v152, 64
    %v341 = vpop.permute.xlu0 %340
    %v344 = vsel %vm315, %v335, 0
    %346 = vmatprep.subr.mxu0 0.0
    %347 = vmatpush1.msra.mxu0 %v341
    %348 = vmatprep.subr.mxu0 0.0
    %349 = vmatpush1.msra.mxu0 0.0
    %350 = vmatprep.subr.mxu0 0.0
    %351 = vmatpush1.msra.mxu0 0.0
    %352 = vmatprep.subr.mxu0 0.0
    %353 = vmatpush1.msra.mxu0 0.0
    %354 = vmatprep.subr.mxu0 0.0
    %355 = vmatpush1.msra.mxu0 0.0
    %356 = vmatprep.subr.mxu0 0.0
    %357 = vmatpush1.msra.mxu0 0.0
    %358 = vmatprep.subr.mxu0 0.0
    %359 = vmatpush1.msra.mxu0 0.0
    %360 = vmatprep.subr.mxu0 0.0
    %361 = vmatpush1.msra.mxu0 0.0
    %362 = vmatprep.subr.mxu0 0.0
    %363 = vmatpush1.msra.mxu0 0.0
    %364 = vmatprep.subr.mxu0 0.0
    %365 = vmatpush1.msra.mxu0 0.0
    %366 = vmatprep.subr.mxu0 0.0
    %367 = vmatpush1.msra.mxu0 0.0
    %368 = vmatprep.subr.mxu0 0.0
    %369 = vmatpush1.msra.mxu0 0.0
    %370 = vmatprep.subr.mxu0 0.0
    %371 = vmatpush1.msra.mxu0 0.0
    %372 = vmatprep.subr.mxu0 0.0
    %373 = vmatpush1.msra.mxu0 0.0
    %374 = vmatprep.subr.mxu0 0.0
    %375 = vmatpush1.msra.mxu0 0.0
    %376 = vmatprep.subr.mxu0 0.0
    %377 = vmatpush1.msra.mxu0 0.0
    %378 = vmatprep.subr.mxu0 0.0
    %379 = vmatpush1.msra.mxu0 0.0
    %380 = vmatprep.subr.mxu0 0.0
    %381 = vmatpush1.msra.mxu0 0.0
    %382 = vmatprep.subr.mxu0 0.0
    %383 = vmatpush1.msra.mxu0 0.0
    %384 = vmatprep.subr.mxu0 0.0
    %385 = vmatpush1.msra.mxu0 0.0
    %386 = vmatprep.subr.mxu0 0.0
    %387 = vmatpush1.msra.mxu0 0.0
    %388 = vmatprep.subr.mxu0 0.0
    %389 = vmatpush1.msra.mxu0 0.0
    %390 = vmatprep.subr.mxu0 0.0
    %391 = vmatpush1.msra.mxu0 0.0
    %392 = vmatprep.subr.mxu0 0.0
    %393 = vmatpush1.msra.mxu0 0.0
    %394 = vmatprep.subr.mxu0 0.0
    %395 = vmatpush1.msra.mxu0 0.0
    %396 = vmatprep.subr.mxu0 0.0
    %397 = vmatpush1.msra.mxu0 0.0
    %398 = vmatprep.subr.mxu0 0.0
    %399 = vmatpush1.msra.mxu0 0.0
    %400 = vmatprep.subr.mxu0 0.0
    %401 = vmatpush1.msra.mxu0 0.0
    %402 = vmatprep.subr.mxu0 0.0
    %403 = vmatpush1.msra.mxu0 0.0
    %404 = vmatprep.subr.mxu0 0.0
    %405 = vmatpush1.msra.mxu0 0.0
    %406 = vmatprep.subr.mxu0 0.0
    %407 = vmatpush1.msra.mxu0 0.0
    %408 = vmatprep.subr.mxu0 0.0
    %409 = vmatpush1.msra.mxu0 0.0
    %410 = vmatprep.mubr.f32.mxu0 0.0
    %411 = vmatmul.mubr.f32.gmra.mrb[0].mxu0 %v344
    %v412 = vpop.f32.mrb[0].mxu0
    %v413 = vadd.f32 0.0, %v412
    %v414 = vpop.f32.mrb[0].mxu0
    %415 = vdwg.mxu0
    %416 = vrot.lane.b32.xlu0 %v157, 64
    %v417 = vpop.permute.xlu0 %416
    %v420 = vsel %vm315, %v337, 0
    %422 = vmatprep.subr.mxu0 0.0
    %423 = vmatpush1.msra.mxu0 %v417
    %424 = vmatprep.subr.mxu0 0.0
    %425 = vmatpush1.msra.mxu0 0.0
    %426 = vmatprep.subr.mxu0 0.0
    %427 = vmatpush1.msra.mxu0 0.0
    %428 = vmatprep.subr.mxu0 0.0
    %429 = vmatpush1.msra.mxu0 0.0
    %430 = vmatprep.subr.mxu0 0.0
    %431 = vmatpush1.msra.mxu0 0.0
    %432 = vmatprep.subr.mxu0 0.0
    %433 = vmatpush1.msra.mxu0 0.0
    %434 = vmatprep.subr.mxu0 0.0
    %435 = vmatpush1.msra.mxu0 0.0
    %436 = vmatprep.subr.mxu0 0.0
    %437 = vmatpush1.msra.mxu0 0.0
    %438 = vmatprep.subr.mxu0 0.0
    %439 = vmatpush1.msra.mxu0 0.0
    %440 = vmatprep.subr.mxu0 0.0
    %441 = vmatpush1.msra.mxu0 0.0
    %442 = vmatprep.subr.mxu0 0.0
    %443 = vmatpush1.msra.mxu0 0.0
    %444 = vmatprep.subr.mxu0 0.0
    %445 = vmatpush1.msra.mxu0 0.0
    %446 = vmatprep.subr.mxu0 0.0
    %447 = vmatpush1.msra.mxu0 0.0
    %448 = vmatprep.subr.mxu0 0.0
    %449 = vmatpush1.msra.mxu0 0.0
    %450 = vmatprep.subr.mxu0 0.0
    %451 = vmatpush1.msra.mxu0 0.0
    %452 = vmatprep.subr.mxu0 0.0
    %453 = vmatpush1.msra.mxu0 0.0
    %454 = vmatprep.subr.mxu0 0.0
    %455 = vmatpush1.msra.mxu0 0.0
    %456 = vmatprep.subr.mxu0 0.0
    %457 = vmatpush1.msra.mxu0 0.0
    %458 = vmatprep.subr.mxu0 0.0
    %459 = vmatpush1.msra.mxu0 0.0
    %460 = vmatprep.subr.mxu0 0.0
    %461 = vmatpush1.msra.mxu0 0.0
    %462 = vmatprep.subr.mxu0 0.0
    %463 = vmatpush1.msra.mxu0 0.0
    %464 = vmatprep.subr.mxu0 0.0
    %465 = vmatpush1.msra.mxu0 0.0
    %466 = vmatprep.subr.mxu0 0.0
    %467 = vmatpush1.msra.mxu0 0.0
    %468 = vmatprep.subr.mxu0 0.0
    %469 = vmatpush1.msra.mxu0 0.0
    %470 = vmatprep.subr.mxu0 0.0
    %471 = vmatpush1.msra.mxu0 0.0
    %472 = vmatprep.subr.mxu0 0.0
    %473 = vmatpush1.msra.mxu0 0.0
    %474 = vmatprep.subr.mxu0 0.0
    %475 = vmatpush1.msra.mxu0 0.0
    %476 = vmatprep.subr.mxu0 0.0
    %477 = vmatpush1.msra.mxu0 0.0
    %478 = vmatprep.subr.mxu0 0.0
    %479 = vmatpush1.msra.mxu0 0.0
    %480 = vmatprep.subr.mxu0 0.0
    %481 = vmatpush1.msra.mxu0 0.0
    %482 = vmatprep.subr.mxu0 0.0
    %483 = vmatpush1.msra.mxu0 0.0
    %484 = vmatprep.subr.mxu0 0.0
    %485 = vmatpush1.msra.mxu0 0.0
    %486 = vmatprep.mubr.f32.mxu0 0.0
    %487 = vmatmul.mubr.f32.gmra.mrb[0].mxu0 %v420
    %v488 = vpop.f32.mrb[0].mxu0
    %v489 = vadd.f32 0.0, %v488
    %v490 = vpop.f32.mrb[0].mxu0
    %491 = vdwg.mxu0
    %v492 = vld [vmem:[#allocation7] sm:$0xf]
    %493 = vrot.lane.b32.xlu0 %v152, 124
    %v494 = vpop.permute.xlu0 %493
    %495 = vrot.lane.b32.xlu0 %v152, 92
    %v496 = vpop.permute.xlu0 %495
    %v497 = vsel %vm163, %v494, 0
    %v499 = vsel %vm163, %v496, 0
    %501 = vmatprep.subr.mxu0 0.0
    %502 = vmatpush1.xpose.msra.mxu0 %v499
    %503 = vmatprep.subr.mxu0 0.0
    %504 = vmatpush1.xpose.msra.mxu0 0.0
    %505 = vmatprep.subr.mxu0 0.0
    %506 = vmatpush1.xpose.msra.mxu0 0.0
    %507 = vmatprep.subr.mxu0 0.0
    %508 = vmatpush1.xpose.msra.mxu0 0.0
    %509 = vmatprep.subr.mxu0 0.0
    %510 = vmatpush1.xpose.msra.mxu0 0.0
    %511 = vmatprep.subr.mxu0 0.0
    %512 = vmatpush1.xpose.msra.mxu0 0.0
    %513 = vmatprep.subr.mxu0 0.0
    %514 = vmatpush1.xpose.msra.mxu0 0.0
    %515 = vmatprep.subr.mxu0 0.0
    %516 = vmatpush1.xpose.msra.mxu0 0.0
    %517 = vmatprep.subr.mxu0 0.0
    %518 = vmatpush1.xpose.msra.mxu0 0.0
    %519 = vmatprep.subr.mxu0 0.0
    %520 = vmatpush1.xpose.msra.mxu0 0.0
    %521 = vmatprep.subr.mxu0 0.0
    %522 = vmatpush1.xpose.msra.mxu0 0.0
    %523 = vmatprep.subr.mxu0 0.0
    %524 = vmatpush1.xpose.msra.mxu0 0.0
    %525 = vmatprep.subr.mxu0 0.0
    %526 = vmatpush1.xpose.msra.mxu0 0.0
    %527 = vmatprep.subr.mxu0 0.0
    %528 = vmatpush1.xpose.msra.mxu0 0.0
    %529 = vmatprep.subr.mxu0 0.0
    %530 = vmatpush1.xpose.msra.mxu0 0.0
    %531 = vmatprep.subr.mxu0 0.0
    %532 = vmatpush1.xpose.msra.mxu0 0.0
    %533 = vmatprep.subr.mxu0 0.0
    %534 = vmatpush1.xpose.msra.mxu0 0.0
    %535 = vmatprep.subr.mxu0 0.0
    %536 = vmatpush1.xpose.msra.mxu0 0.0
    %537 = vmatprep.subr.mxu0 0.0
    %538 = vmatpush1.xpose.msra.mxu0 0.0
    %539 = vmatprep.subr.mxu0 0.0
    %540 = vmatpush1.xpose.msra.mxu0 0.0
    %541 = vmatprep.subr.mxu0 0.0
    %542 = vmatpush1.xpose.msra.mxu0 0.0
    %543 = vmatprep.subr.mxu0 0.0
    %544 = vmatpush1.xpose.msra.mxu0 0.0
    %545 = vmatprep.subr.mxu0 0.0
    %546 = vmatpush1.xpose.msra.mxu0 0.0
    %547 = vmatprep.subr.mxu0 0.0
    %548 = vmatpush1.xpose.msra.mxu0 0.0
    %549 = vmatprep.subr.mxu0 0.0
    %550 = vmatpush1.xpose.msra.mxu0 0.0
    %551 = vmatprep.subr.mxu0 0.0
    %552 = vmatpush1.xpose.msra.mxu0 0.0
    %553 = vmatprep.subr.mxu0 0.0
    %554 = vmatpush1.xpose.msra.mxu0 0.0
    %555 = vmatprep.subr.mxu0 0.0
    %556 = vmatpush1.xpose.msra.mxu0 0.0
    %557 = vmatprep.subr.mxu0 0.0
    %558 = vmatpush1.xpose.msra.mxu0 0.0
    %559 = vmatprep.subr.mxu0 0.0
    %560 = vmatpush1.xpose.msra.mxu0 0.0
    %561 = vmatprep.subr.mxu0 0.0
    %562 = vmatpush1.xpose.msra.mxu0 0.0
    %563 = vmatprep.subr.mxu0 0.0
    %564 = vmatpush1.xpose.msra.mxu0 0.0
    %565 = vmatprep.mubr.f32.mxu0 0.0
    %566 = vmatmul.mubr.f32.gmra.mrb[0].mxu0 %v497
    %v567 = vpop.f32.mrb[0].mxu0
    %v568 = vadd.f32 0.0, %v567
    %v569 = vpop.f32.mrb[0].mxu0
    %570 = vdwg.mxu0
    %571 = vrot.lane.b32.xlu0 %v157, 124
    %v572 = vpop.permute.xlu0 %571
    %573 = vrot.lane.b32.xlu0 %v157, 92
    %v574 = vpop.permute.xlu0 %573
    %v575 = vsel %vm163, %v572, 0
    %v577 = vsel %vm163, %v574, 0
    %579 = vmatprep.subr.mxu0 0.0
    %580 = vmatpush1.xpose.msra.mxu0 %v577
    %581 = vmatprep.subr.mxu0 0.0
    %582 = vmatpush1.xpose.msra.mxu0 0.0
    %583 = vmatprep.subr.mxu0 0.0
    %584 = vmatpush1.xpose.msra.mxu0 0.0
    %585 = vmatprep.subr.mxu0 0.0
    %586 = vmatpush1.xpose.msra.mxu0 0.0
    %587 = vmatprep.subr.mxu0 0.0
    %588 = vmatpush1.xpose.msra.mxu0 0.0
    %589 = vmatprep.subr.mxu0 0.0
    %590 = vmatpush1.xpose.msra.mxu0 0.0
    %591 = vmatprep.subr.mxu0 0.0
    %592 = vmatpush1.xpose.msra.mxu0 0.0
    %593 = vmatprep.subr.mxu0 0.0
    %594 = vmatpush1.xpose.msra.mxu0 0.0
    %595 = vmatprep.subr.mxu0 0.0
    %596 = vmatpush1.xpose.msra.mxu0 0.0
    %597 = vmatprep.subr.mxu0 0.0
    %598 = vmatpush1.xpose.msra.mxu0 0.0
    %599 = vmatprep.subr.mxu0 0.0
    %600 = vmatpush1.xpose.msra.mxu0 0.0
    %601 = vmatprep.subr.mxu0 0.0
    %602 = vmatpush1.xpose.msra.mxu0 0.0
    %603 = vmatprep.subr.mxu0 0.0
    %604 = vmatpush1.xpose.msra.mxu0 0.0
    %605 = vmatprep.subr.mxu0 0.0
    %606 = vmatpush1.xpose.msra.mxu0 0.0
    %607 = vmatprep.subr.mxu0 0.0
    %608 = vmatpush1.xpose.msra.mxu0 0.0
    %609 = vmatprep.subr.mxu0 0.0
    %610 = vmatpush1.xpose.msra.mxu0 0.0
    %611 = vmatprep.subr.mxu0 0.0
    %612 = vmatpush1.xpose.msra.mxu0 0.0
    %613 = vmatprep.subr.mxu0 0.0
    %614 = vmatpush1.xpose.msra.mxu0 0.0
    %615 = vmatprep.subr.mxu0 0.0
    %616 = vmatpush1.xpose.msra.mxu0 0.0
    %617 = vmatprep.subr.mxu0 0.0
    %618 = vmatpush1.xpose.msra.mxu0 0.0
    %619 = vmatprep.subr.mxu0 0.0
    %620 = vmatpush1.xpose.msra.mxu0 0.0
    %621 = vmatprep.subr.mxu0 0.0
    %622 = vmatpush1.xpose.msra.mxu0 0.0
    %623 = vmatprep.subr.mxu0 0.0
    %624 = vmatpush1.xpose.msra.mxu0 0.0
    %625 = vmatprep.subr.mxu0 0.0
    %626 = vmatpush1.xpose.msra.mxu0 0.0
    %627 = vmatprep.subr.mxu0 0.0
    %628 = vmatpush1.xpose.msra.mxu0 0.0
    %629 = vmatprep.subr.mxu0 0.0
    %630 = vmatpush1.xpose.msra.mxu0 0.0
    %631 = vmatprep.subr.mxu0 0.0
    %632 = vmatpush1.xpose.msra.mxu0 0.0
    %633 = vmatprep.subr.mxu0 0.0
    %634 = vmatpush1.xpose.msra.mxu0 0.0
    %635 = vmatprep.subr.mxu0 0.0
    %636 = vmatpush1.xpose.msra.mxu0 0.0
    %637 = vmatprep.subr.mxu0 0.0
    %638 = vmatpush1.xpose.msra.mxu0 0.0
    %639 = vmatprep.subr.mxu0 0.0
    %640 = vmatpush1.xpose.msra.mxu0 0.0
    %641 = vmatprep.subr.mxu0 0.0
    %642 = vmatpush1.xpose.msra.mxu0 0.0
    %643 = vmatprep.mubr.f32.mxu0 0.0
    %644 = vmatmul.mubr.f32.gmra.mrb[0].mxu0 %v575
    %v645 = vpop.f32.mrb[0].mxu0
    %v646 = vadd.f32 0.0, %v645
    %v647 = vpop.f32.mrb[0].mxu0
    %648 = vdwg.mxu0
    %v649 = vsel %vm315, %v568, -inf
    %650 = vmax.xlane.f32.xlu0 %v649
    %v651 = vpop.xlane.xlu0 %650
    %v652 = vsel %vm315, %v646, -inf
    %653 = vmax.xlane.f32.xlu0 %v652
    %v654 = vpop.xlane.xlu0 %653
    %v655 = vsub.f32 %v568, %v651
    %v656 = vsub.f32 %v646, %v654
    %v657 = vmul.f32 %v655, 1.442695
    %v658 = vpow.pop %v657
    %v659 = vmul.f32 %v656, 1.442695
    %v660 = vpow.pop %v659
    %v661 = vsel %vm315, %v658, 0.0
    %662 = vadd.xlane.f32.xlu0 %v661
    %v663 = vpop.xlane.xlu0 %662
    %v664 = vsel %vm315, %v660, 0.0
    %665 = vadd.xlane.f32.xlu0 %v664
    %v666 = vpop.xlane.xlu0 %665
    %v667 = vrcp.pop %v663
    %v668 = vmul.f32 %v658, %v667
    %v669 = vrcp.pop %v666
    %v670 = vmul.f32 %v660, %v669
    %s671 = scalar_lea.vmem [#allocation9], 8
    %672 = vst.msk [vmem:[%s671] sm:$0xff] %vm315, %v668
    %673 = vst.msk [vmem:[%s671 + $0x40] sm:$0xff] %vm315, %v670
    %674 = vrot.lane.b32.xlu0 %v152, 60
    %v675 = vpop.permute.xlu0 %674
    %v678 = vsel %vm315, %v668, 0
    %680 = vmatprep.subr.mxu0 0.0
    %681 = vmatpush1.msra.mxu0 %v675
    %682 = vmatprep.subr.mxu0 0.0
    %683 = vmatpush1.msra.mxu0 0.0
    %684 = vmatprep.subr.mxu0 0.0
    %685 = vmatpush1.msra.mxu0 0.0
    %686 = vmatprep.subr.mxu0 0.0
    %687 = vmatpush1.msra.mxu0 0.0
    %688 = vmatprep.subr.mxu0 0.0
    %689 = vmatpush1.msra.mxu0 0.0
    %690 = vmatprep.subr.mxu0 0.0
    %691 = vmatpush1.msra.mxu0 0.0
    %692 = vmatprep.subr.mxu0 0.0
    %693 = vmatpush1.msra.mxu0 0.0
    %694 = vmatprep.subr.mxu0 0.0
    %695 = vmatpush1.msra.mxu0 0.0
    %696 = vmatprep.subr.mxu0 0.0
    %697 = vmatpush1.msra.mxu0 0.0
    %698 = vmatprep.subr.mxu0 0.0
    %699 = vmatpush1.msra.mxu0 0.0
    %700 = vmatprep.subr.mxu0 0.0
    %701 = vmatpush1.msra.mxu0 0.0
    %702 = vmatprep.subr.mxu0 0.0
    %703 = vmatpush1.msra.mxu0 0.0
    %704 = vmatprep.subr.mxu0 0.0
    %705 = vmatpush1.msra.mxu0 0.0
    %706 = vmatprep.subr.mxu0 0.0
    %707 = vmatpush1.msra.mxu0 0.0
    %708 = vmatprep.subr.mxu0 0.0
    %709 = vmatpush1.msra.mxu0 0.0
    %710 = vmatprep.subr.mxu0 0.0
    %711 = vmatpush1.msra.mxu0 0.0
    %712 = vmatprep.subr.mxu0 0.0
    %713 = vmatpush1.msra.mxu0 0.0
    %714 = vmatprep.subr.mxu0 0.0
    %715 = vmatpush1.msra.mxu0 0.0
    %716 = vmatprep.subr.mxu0 0.0
    %717 = vmatpush1.msra.mxu0 0.0
    %718 = vmatprep.subr.mxu0 0.0
    %719 = vmatpush1.msra.mxu0 0.0
    %720 = vmatprep.subr.mxu0 0.0
    %721 = vmatpush1.msra.mxu0 0.0
    %722 = vmatprep.subr.mxu0 0.0
    %723 = vmatpush1.msra.mxu0 0.0
    %724 = vmatprep.subr.mxu0 0.0
    %725 = vmatpush1.msra.mxu0 0.0
    %726 = vmatprep.subr.mxu0 0.0
    %727 = vmatpush1.msra.mxu0 0.0
    %728 = vmatprep.subr.mxu0 0.0
    %729 = vmatpush1.msra.mxu0 0.0
    %730 = vmatprep.subr.mxu0 0.0
    %731 = vmatpush1.msra.mxu0 0.0
    %732 = vmatprep.subr.mxu0 0.0
    %733 = vmatpush1.msra.mxu0 0.0
    %734 = vmatprep.subr.mxu0 0.0
    %735 = vmatpush1.msra.mxu0 0.0
    %736 = vmatprep.subr.mxu0 0.0
    %737 = vmatpush1.msra.mxu0 0.0
    %738 = vmatprep.subr.mxu0 0.0
    %739 = vmatpush1.msra.mxu0 0.0
    %740 = vmatprep.subr.mxu0 0.0
    %741 = vmatpush1.msra.mxu0 0.0
    %742 = vmatprep.subr.mxu0 0.0
    %743 = vmatpush1.msra.mxu0 0.0
    %744 = vmatprep.mubr.f32.mxu0 0.0
    %745 = vmatmul.mubr.f32.gmra.mrb[0].mxu0 %v678
    %v746 = vpop.f32.mrb[0].mxu0
    %v747 = vadd.f32 0.0, %v746
    %v748 = vpop.f32.mrb[0].mxu0
    %749 = vdwg.mxu0
    %750 = vrot.lane.b32.xlu0 %v157, 60
    %v751 = vpop.permute.xlu0 %750
    %v754 = vsel %vm315, %v670, 0
    %756 = vmatprep.subr.mxu0 0.0
    %757 = vmatpush1.msra.mxu0 %v751
    %758 = vmatprep.subr.mxu0 0.0
    %759 = vmatpush1.msra.mxu0 0.0
    %760 = vmatprep.subr.mxu0 0.0
    %761 = vmatpush1.msra.mxu0 0.0
    %762 = vmatprep.subr.mxu0 0.0
    %763 = vmatpush1.msra.mxu0 0.0
    %764 = vmatprep.subr.mxu0 0.0
    %765 = vmatpush1.msra.mxu0 0.0
    %766 = vmatprep.subr.mxu0 0.0
    %767 = vmatpush1.msra.mxu0 0.0
    %768 = vmatprep.subr.mxu0 0.0
    %769 = vmatpush1.msra.mxu0 0.0
    %770 = vmatprep.subr.mxu0 0.0
    %771 = vmatpush1.msra.mxu0 0.0
    %772 = vmatprep.subr.mxu0 0.0
    %773 = vmatpush1.msra.mxu0 0.0
    %774 = vmatprep.subr.mxu0 0.0
    %775 = vmatpush1.msra.mxu0 0.0
    %776 = vmatprep.subr.mxu0 0.0
    %777 = vmatpush1.msra.mxu0 0.0
    %778 = vmatprep.subr.mxu0 0.0
    %779 = vmatpush1.msra.mxu0 0.0
    %780 = vmatprep.subr.mxu0 0.0
    %781 = vmatpush1.msra.mxu0 0.0
    %782 = vmatprep.subr.mxu0 0.0
    %783 = vmatpush1.msra.mxu0 0.0
    %784 = vmatprep.subr.mxu0 0.0
    %785 = vmatpush1.msra.mxu0 0.0
    %786 = vmatprep.subr.mxu0 0.0
    %787 = vmatpush1.msra.mxu0 0.0
    %788 = vmatprep.subr.mxu0 0.0
    %789 = vmatpush1.msra.mxu0 0.0
    %790 = vmatprep.subr.mxu0 0.0
    %791 = vmatpush1.msra.mxu0 0.0
    %792 = vmatprep.subr.mxu0 0.0
    %793 = vmatpush1.msra.mxu0 0.0
    %794 = vmatprep.subr.mxu0 0.0
    %795 = vmatpush1.msra.mxu0 0.0
    %796 = vmatprep.subr.mxu0 0.0
    %797 = vmatpush1.msra.mxu0 0.0
    %798 = vmatprep.subr.mxu0 0.0
    %799 = vmatpush1.msra.mxu0 0.0
    %800 = vmatprep.subr.mxu0 0.0
    %801 = vmatpush1.msra.mxu0 0.0
    %802 = vmatprep.subr.mxu0 0.0
    %803 = vmatpush1.msra.mxu0 0.0
    %804 = vmatprep.subr.mxu0 0.0
    %805 = vmatpush1.msra.mxu0 0.0
    %806 = vmatprep.subr.mxu0 0.0
    %807 = vmatpush1.msra.mxu0 0.0
    %808 = vmatprep.subr.mxu0 0.0
    %809 = vmatpush1.msra.mxu0 0.0
    %810 = vmatprep.subr.mxu0 0.0
    %811 = vmatpush1.msra.mxu0 0.0
    %812 = vmatprep.subr.mxu0 0.0
    %813 = vmatpush1.msra.mxu0 0.0
    %814 = vmatprep.subr.mxu0 0.0
    %815 = vmatpush1.msra.mxu0 0.0
    %816 = vmatprep.subr.mxu0 0.0
    %817 = vmatpush1.msra.mxu0 0.0
    %818 = vmatprep.subr.mxu0 0.0
    %819 = vmatpush1.msra.mxu0 0.0
    %820 = vmatprep.mubr.f32.mxu0 0.0
    %821 = vmatmul.mubr.f32.gmra.mrb[0].mxu0 %v754
    %v822 = vpop.f32.mrb[0].mxu0
    %v823 = vadd.f32 0.0, %v822
    %v824 = vpop.f32.mrb[0].mxu0
    %825 = vdwg.mxu0
    %v826 = vld [vmem:[#allocation7 + $0x4] sm:$0xf]
    %v828 = vsel %vm163, %v747, 0
    %v831 = vsel %vm163, %v823, 0
    %vm833 = vcmask 1043456
    %v835 = vsel %vm833, %v826, 0
    %837 = vmatprep.subr.mxu0 0.0
    %838 = vmatpush1.msra.mxu0 %v835
    %839 = vmatprep.subr.mxu0 0.0
    %840 = vmatpush1.msra.mxu0 0.0
    %841 = vmatprep.subr.mxu0 0.0
    %842 = vmatpush1.msra.mxu0 0.0
    %843 = vmatprep.subr.mxu0 0.0
    %844 = vmatpush1.msra.mxu0 0.0
    %845 = vmatprep.subr.mxu0 0.0
    %846 = vmatpush1.msra.mxu0 0.0
    %847 = vmatprep.subr.mxu0 0.0
    %848 = vmatpush1.msra.mxu0 0.0
    %849 = vmatprep.subr.mxu0 0.0
    %850 = vmatpush1.msra.mxu0 0.0
    %851 = vmatprep.subr.mxu0 0.0
    %852 = vmatpush1.msra.mxu0 0.0
    %853 = vmatprep.subr.mxu0 0.0
    %854 = vmatpush1.msra.mxu0 0.0
    %855 = vmatprep.subr.mxu0 0.0
    %856 = vmatpush1.msra.mxu0 0.0
    %857 = vmatprep.subr.mxu0 0.0
    %858 = vmatpush1.msra.mxu0 0.0
    %859 = vmatprep.subr.mxu0 0.0
    %860 = vmatpush1.msra.mxu0 0.0
    %861 = vmatprep.subr.mxu0 0.0
    %862 = vmatpush1.msra.mxu0 0.0
    %863 = vmatprep.subr.mxu0 0.0
    %864 = vmatpush1.msra.mxu0 0.0
    %865 = vmatprep.subr.mxu0 0.0
    %866 = vmatpush1.msra.mxu0 0.0
    %867 = vmatprep.subr.mxu0 0.0
    %868 = vmatpush1.msra.mxu0 0.0
    %869 = vmatprep.subr.mxu0 0.0
    %870 = vmatpush1.msra.mxu0 0.0
    %871 = vmatprep.subr.mxu0 0.0
    %872 = vmatpush1.msra.mxu0 0.0
    %873 = vmatprep.subr.mxu0 0.0
    %874 = vmatpush1.msra.mxu0 0.0
    %875 = vmatprep.subr.mxu0 0.0
    %876 = vmatpush1.msra.mxu0 0.0
    %877 = vmatprep.subr.mxu0 0.0
    %878 = vmatpush1.msra.mxu0 0.0
    %879 = vmatprep.subr.mxu0 0.0
    %880 = vmatpush1.msra.mxu0 0.0
    %881 = vmatprep.subr.mxu0 0.0
    %882 = vmatpush1.msra.mxu0 0.0
    %883 = vmatprep.subr.mxu0 0.0
    %884 = vmatpush1.msra.mxu0 0.0
    %885 = vmatprep.subr.mxu0 0.0
    %886 = vmatpush1.msra.mxu0 0.0
    %887 = vmatprep.subr.mxu0 0.0
    %888 = vmatpush1.msra.mxu0 0.0
    %889 = vmatprep.subr.mxu0 0.0
    %890 = vmatpush1.msra.mxu0 0.0
    %891 = vmatprep.subr.mxu0 0.0
    %892 = vmatpush1.msra.mxu0 0.0
    %893 = vmatprep.subr.mxu0 0.0
    %894 = vmatpush1.msra.mxu0 0.0
    %895 = vmatprep.subr.mxu0 0.0
    %896 = vmatpush1.msra.mxu0 0.0
    %897 = vmatprep.subr.mxu0 0.0
    %898 = vmatpush1.msra.mxu0 0.0
    %899 = vmatprep.subr.mxu0 0.0
    %900 = vmatpush1.msra.mxu0 0.0
    %901 = vmatprep.mubr.f32.mxu0 0.0
    %902 = vmatmul.mubr.f32.gmra.mrb[0].mxu0 %v828
    %v903 = vpop.f32.mrb[0].mxu0
    %v904 = vadd.f32 0.0, %v903
    %v905 = vpop.f32.mrb[0].mxu0
    %906 = vmatprep.mubr.f32.mxu0 0.0
    %907 = vmatmul.mubr.f32.gmra.mrb[0].mxu0 %v831
    %v908 = vpop.f32.mrb[0].mxu0
    %v909 = vadd.f32 0.0, %v908
    %v910 = vpop.f32.mrb[0].mxu0
    %911 = vdwg.mxu0
    %v913 = vsel %vm163, %v413, 0
    %v916 = vsel %vm163, %v489, 0
    %v919 = vsel %vm833, %v492, 0
    %921 = vmatprep.subr.mxu0 0.0
    %922 = vmatpush1.msra.mxu0 %v919
    %923 = vmatprep.subr.mxu0 0.0
    %924 = vmatpush1.msra.mxu0 0.0
    %925 = vmatprep.subr.mxu0 0.0
    %926 = vmatpush1.msra.mxu0 0.0
    %927 = vmatprep.subr.mxu0 0.0
    %928 = vmatpush1.msra.mxu0 0.0
    %929 = vmatprep.subr.mxu0 0.0
    %930 = vmatpush1.msra.mxu0 0.0
    %931 = vmatprep.subr.mxu0 0.0
    %932 = vmatpush1.msra.mxu0 0.0
    %933 = vmatprep.subr.mxu0 0.0
    %934 = vmatpush1.msra.mxu0 0.0
    %935 = vmatprep.subr.mxu0 0.0
    %936 = vmatpush1.msra.mxu0 0.0
    %937 = vmatprep.subr.mxu0 0.0
    %938 = vmatpush1.msra.mxu0 0.0
    %939 = vmatprep.subr.mxu0 0.0
    %940 = vmatpush1.msra.mxu0 0.0
    %941 = vmatprep.subr.mxu0 0.0
    %942 = vmatpush1.msra.mxu0 0.0
    %943 = vmatprep.subr.mxu0 0.0
    %944 = vmatpush1.msra.mxu0 0.0
    %945 = vmatprep.subr.mxu0 0.0
    %946 = vmatpush1.msra.mxu0 0.0
    %947 = vmatprep.subr.mxu0 0.0
    %948 = vmatpush1.msra.mxu0 0.0
    %949 = vmatprep.subr.mxu0 0.0
    %950 = vmatpush1.msra.mxu0 0.0
    %951 = vmatprep.subr.mxu0 0.0
    %952 = vmatpush1.msra.mxu0 0.0
    %953 = vmatprep.subr.mxu0 0.0
    %954 = vmatpush1.msra.mxu0 0.0
    %955 = vmatprep.subr.mxu0 0.0
    %956 = vmatpush1.msra.mxu0 0.0
    %957 = vmatprep.subr.mxu0 0.0
    %958 = vmatpush1.msra.mxu0 0.0
    %959 = vmatprep.subr.mxu0 0.0
    %960 = vmatpush1.msra.mxu0 0.0
    %961 = vmatprep.subr.mxu0 0.0
    %962 = vmatpush1.msra.mxu0 0.0
    %963 = vmatprep.subr.mxu0 0.0
    %964 = vmatpush1.msra.mxu0 0.0
    %965 = vmatprep.subr.mxu0 0.0
    %966 = vmatpush1.msra.mxu0 0.0
    %967 = vmatprep.subr.mxu0 0.0
    %968 = vmatpush1.msra.mxu0 0.0
    %969 = vmatprep.subr.mxu0 0.0
    %970 = vmatpush1.msra.mxu0 0.0
    %971 = vmatprep.subr.mxu0 0.0
    %972 = vmatpush1.msra.mxu0 0.0
    %973 = vmatprep.subr.mxu0 0.0
    %974 = vmatpush1.msra.mxu0 0.0
    %975 = vmatprep.subr.mxu0 0.0
    %976 = vmatpush1.msra.mxu0 0.0
    %977 = vmatprep.subr.mxu0 0.0
    %978 = vmatpush1.msra.mxu0 0.0
    %979 = vmatprep.subr.mxu0 0.0
    %980 = vmatpush1.msra.mxu0 0.0
    %981 = vmatprep.subr.mxu0 0.0
    %982 = vmatpush1.msra.mxu0 0.0
    %983 = vmatprep.subr.mxu0 0.0
    %984 = vmatpush1.msra.mxu0 0.0
    %985 = vmatprep.mubr.f32.mxu0 0.0
    %986 = vmatmul.mubr.f32.gmra.mrb[0].mxu0 %v913
    %v987 = vpop.f32.mrb[0].mxu0
    %v988 = vadd.f32 %v904, %v987
    %v989 = vpop.f32.mrb[0].mxu0
    %990 = vmatprep.mubr.f32.mxu0 0.0
    %991 = vmatmul.mubr.f32.gmra.mrb[0].mxu0 %v916
    %v992 = vpop.f32.mrb[0].mxu0
    %v993 = vadd.f32 %v909, %v992
    %v994 = vpop.f32.mrb[0].mxu0
    %995 = vdwg.mxu0
    %996 = vrot.lane.b32.xlu0 %v152, 120
    %v997 = vpop.permute.xlu0 %996
    %998 = vrot.lane.b32.xlu0 %v152, 88
    %v999 = vpop.permute.xlu0 %998
    %v1000 = vsel %vm163, %v997, 0
    %v1002 = vsel %vm163, %v999, 0
    %1004 = vmatprep.subr.mxu0 0.0
    %1005 = vmatpush1.xpose.msra.mxu0 %v1002
    %1006 = vmatprep.subr.mxu0 0.0
    %1007 = vmatpush1.xpose.msra.mxu0 0.0
    %1008 = vmatprep.subr.mxu0 0.0
    %1009 = vmatpush1.xpose.msra.mxu0 0.0
    %1010 = vmatprep.subr.mxu0 0.0
    %1011 = vmatpush1.xpose.msra.mxu0 0.0
    %1012 = vmatprep.subr.mxu0 0.0
    %1013 = vmatpush1.xpose.msra.mxu0 0.0
    %1014 = vmatprep.subr.mxu0 0.0
    %1015 = vmatpush1.xpose.msra.mxu0 0.0
    %1016 = vmatprep.subr.mxu0 0.0
    %1017 = vmatpush1.xpose.msra.mxu0 0.0
    %1018 = vmatprep.subr.mxu0 0.0
    %1019 = vmatpush1.xpose.msra.mxu0 0.0
    %1020 = vmatprep.subr.mxu0 0.0
    %1021 = vmatpush1.xpose.msra.mxu0 0.0
    %1022 = vmatprep.subr.mxu0 0.0
    %1023 = vmatpush1.xpose.msra.mxu0 0.0
    %1024 = vmatprep.subr.mxu0 0.0
    %1025 = vmatpush1.xpose.msra.mxu0 0.0
    %1026 = vmatprep.subr.mxu0 0.0
    %1027 = vmatpush1.xpose.msra.mxu0 0.0
    %1028 = vmatprep.subr.mxu0 0.0
    %1029 = vmatpush1.xpose.msra.mxu0 0.0
    %1030 = vmatprep.subr.mxu0 0.0
    %1031 = vmatpush1.xpose.msra.mxu0 0.0
    %1032 = vmatprep.subr.mxu0 0.0
    %1033 = vmatpush1.xpose.msra.mxu0 0.0
    %1034 = vmatprep.subr.mxu0 0.0
    %1035 = vmatpush1.xpose.msra.mxu0 0.0
    %1036 = vmatprep.subr.mxu0 0.0
    %1037 = vmatpush1.xpose.msra.mxu0 0.0
    %1038 = vmatprep.subr.mxu0 0.0
    %1039 = vmatpush1.xpose.msra.mxu0 0.0
    %1040 = vmatprep.subr.mxu0 0.0
    %1041 = vmatpush1.xpose.msra.mxu0 0.0
    %1042 = vmatprep.subr.mxu0 0.0
    %1043 = vmatpush1.xpose.msra.mxu0 0.0
    %1044 = vmatprep.subr.mxu0 0.0
    %1045 = vmatpush1.xpose.msra.mxu0 0.0
    %1046 = vmatprep.subr.mxu0 0.0
    %1047 = vmatpush1.xpose.msra.mxu0 0.0
    %1048 = vmatprep.subr.mxu0 0.0
    %1049 = vmatpush1.xpose.msra.mxu0 0.0
    %1050 = vmatprep.subr.mxu0 0.0
    %1051 = vmatpush1.xpose.msra.mxu0 0.0
    %1052 = vmatprep.subr.mxu0 0.0
    %1053 = vmatpush1.xpose.msra.mxu0 0.0
    %1054 = vmatprep.subr.mxu0 0.0
    %1055 = vmatpush1.xpose.msra.mxu0 0.0
    %1056 = vmatprep.subr.mxu0 0.0
    %1057 = vmatpush1.xpose.msra.mxu0 0.0
    %1058 = vmatprep.subr.mxu0 0.0
    %1059 = vmatpush1.xpose.msra.mxu0 0.0
    %1060 = vmatprep.subr.mxu0 0.0
    %1061 = vmatpush1.xpose.msra.mxu0 0.0
    %1062 = vmatprep.subr.mxu0 0.0
    %1063 = vmatpush1.xpose.msra.mxu0 0.0
    %1064 = vmatprep.subr.mxu0 0.0
    %1065 = vmatpush1.xpose.msra.mxu0 0.0
    %1066 = vmatprep.subr.mxu0 0.0
    %1067 = vmatpush1.xpose.msra.mxu0 0.0
    %1068 = vmatprep.mubr.f32.mxu0 0.0
    %1069 = vmatmul.mubr.f32.gmra.mrb[0].mxu0 %v1000
    %v1070 = vpop.f32.mrb[0].mxu0
    %v1071 = vadd.f32 0.0, %v1070
    %v1072 = vpop.f32.mrb[0].mxu0
    %1073 = vdwg.mxu0
    %1074 = vrot.lane.b32.xlu0 %v157, 120
    %v1075 = vpop.permute.xlu0 %1074
    %1076 = vrot.lane.b32.xlu0 %v157, 88
    %v1077 = vpop.permute.xlu0 %1076
    %v1078 = vsel %vm163, %v1075, 0
    %v1080 = vsel %vm163, %v1077, 0
    %1082 = vmatprep.subr.mxu0 0.0
    %1083 = vmatpush1.xpose.msra.mxu0 %v1080
    %1084 = vmatprep.subr.mxu0 0.0
    %1085 = vmatpush1.xpose.msra.mxu0 0.0
    %1086 = vmatprep.subr.mxu0 0.0
    %1087 = vmatpush1.xpose.msra.mxu0 0.0
    %1088 = vmatprep.subr.mxu0 0.0
    %1089 = vmatpush1.xpose.msra.mxu0 0.0
    %1090 = vmatprep.subr.mxu0 0.0
    %1091 = vmatpush1.xpose.msra.mxu0 0.0
    %1092 = vmatprep.subr.mxu0 0.0
    %1093 = vmatpush1.xpose.msra.mxu0 0.0
    %1094 = vmatprep.subr.mxu0 0.0
    %1095 = vmatpush1.xpose.msra.mxu0 0.0
    %1096 = vmatprep.subr.mxu0 0.0
    %1097 = vmatpush1.xpose.msra.mxu0 0.0
    %1098 = vmatprep.subr.mxu0 0.0
    %1099 = vmatpush1.xpose.msra.mxu0 0.0
    %1100 = vmatprep.subr.mxu0 0.0
    %1101 = vmatpush1.xpose.msra.mxu0 0.0
    %1102 = vmatprep.subr.mxu0 0.0
    %1103 = vmatpush1.xpose.msra.mxu0 0.0
    %1104 = vmatprep.subr.mxu0 0.0
    %1105 = vmatpush1.xpose.msra.mxu0 0.0
    %1106 = vmatprep.subr.mxu0 0.0
    %1107 = vmatpush1.xpose.msra.mxu0 0.0
    %1108 = vmatprep.subr.mxu0 0.0
    %1109 = vmatpush1.xpose.msra.mxu0 0.0
    %1110 = vmatprep.subr.mxu0 0.0
    %1111 = vmatpush1.xpose.msra.mxu0 0.0
    %1112 = vmatprep.subr.mxu0 0.0
    %1113 = vmatpush1.xpose.msra.mxu0 0.0
    %1114 = vmatprep.subr.mxu0 0.0
    %1115 = vmatpush1.xpose.msra.mxu0 0.0
    %1116 = vmatprep.subr.mxu0 0.0
    %1117 = vmatpush1.xpose.msra.mxu0 0.0
    %1118 = vmatprep.subr.mxu0 0.0
    %1119 = vmatpush1.xpose.msra.mxu0 0.0
    %1120 = vmatprep.subr.mxu0 0.0
    %1121 = vmatpush1.xpose.msra.mxu0 0.0
    %1122 = vmatprep.subr.mxu0 0.0
    %1123 = vmatpush1.xpose.msra.mxu0 0.0
    %1124 = vmatprep.subr.mxu0 0.0
    %1125 = vmatpush1.xpose.msra.mxu0 0.0
    %1126 = vmatprep.subr.mxu0 0.0
    %1127 = vmatpush1.xpose.msra.mxu0 0.0
    %1128 = vmatprep.subr.mxu0 0.0
    %1129 = vmatpush1.xpose.msra.mxu0 0.0
    %1130 = vmatprep.subr.mxu0 0.0
    %1131 = vmatpush1.xpose.msra.mxu0 0.0
    %1132 = vmatprep.subr.mxu0 0.0
    %1133 = vmatpush1.xpose.msra.mxu0 0.0
    %1134 = vmatprep.subr.mxu0 0.0
    %1135 = vmatpush1.xpose.msra.mxu0 0.0
    %1136 = vmatprep.subr.mxu0 0.0
    %1137 = vmatpush1.xpose.msra.mxu0 0.0
    %1138 = vmatprep.subr.mxu0 0.0
    %1139 = vmatpush1.xpose.msra.mxu0 0.0
    %1140 = vmatprep.subr.mxu0 0.0
    %1141 = vmatpush1.xpose.msra.mxu0 0.0
    %1142 = vmatprep.subr.mxu0 0.0
    %1143 = vmatpush1.xpose.msra.mxu0 0.0
    %1144 = vmatprep.subr.mxu0 0.0
    %1145 = vmatpush1.xpose.msra.mxu0 0.0
    %1146 = vmatprep.mubr.f32.mxu0 0.0
    %1147 = vmatmul.mubr.f32.gmra.mrb[0].mxu0 %v1078
    %v1148 = vpop.f32.mrb[0].mxu0
    %v1149 = vadd.f32 0.0, %v1148
    %v1150 = vpop.f32.mrb[0].mxu0
    %1151 = vdwg.mxu0
    %v1152 = vsel %vm315, %v1071, -inf
    %1153 = vmax.xlane.f32.xlu0 %v1152
    %v1154 = vpop.xlane.xlu0 %1153
    %v1155 = vsel %vm315, %v1149, -inf
    %1156 = vmax.xlane.f32.xlu0 %v1155
    %v1157 = vpop.xlane.xlu0 %1156
    %v1158 = vsub.f32 %v1071, %v1154
    %v1159 = vsub.f32 %v1149, %v1157
    %v1160 = vmul.f32 %v1158, 1.442695
    %v1161 = vpow.pop %v1160
    %v1162 = vmul.f32 %v1159, 1.442695
    %v1163 = vpow.pop %v1162
    %v1164 = vsel %vm315, %v1161, 0.0
    %1165 = vadd.xlane.f32.xlu0 %v1164
    %v1166 = vpop.xlane.xlu0 %1165
    %v1167 = vsel %vm315, %v1163, 0.0
    %1168 = vadd.xlane.f32.xlu0 %v1167
    %v1169 = vpop.xlane.xlu0 %1168
    %v1170 = vrcp.pop %v1166
    %v1171 = vmul.f32 %v1161, %v1170
    %v1172 = vrcp.pop %v1169
    %v1173 = vmul.f32 %v1163, %v1172
    %s1174 = scalar_lea.vmem [#allocation9], 16
    %1175 = vst.msk [vmem:[%s1174] sm:$0xff] %vm315, %v1171
    %1176 = vst.msk [vmem:[%s1174 + $0x40] sm:$0xff] %vm315, %v1173
    %1177 = vrot.lane.b32.xlu0 %v152, 56
    %v1178 = vpop.permute.xlu0 %1177
    %v1181 = vsel %vm315, %v1171, 0
    %1183 = vmatprep.subr.mxu0 0.0
    %1184 = vmatpush1.msra.mxu0 %v1178
    %1185 = vmatprep.subr.mxu0 0.0
    %1186 = vmatpush1.msra.mxu0 0.0
    %1187 = vmatprep.subr.mxu0 0.0
    %1188 = vmatpush1.msra.mxu0 0.0
    %1189 = vmatprep.subr.mxu0 0.0
    %1190 = vmatpush1.msra.mxu0 0.0
    %1191 = vmatprep.subr.mxu0 0.0
    %1192 = vmatpush1.msra.mxu0 0.0
    %1193 = vmatprep.subr.mxu0 0.0
    %1194 = vmatpush1.msra.mxu0 0.0
    %1195 = vmatprep.subr.mxu0 0.0
    %1196 = vmatpush1.msra.mxu0 0.0
    %1197 = vmatprep.subr.mxu0 0.0
    %1198 = vmatpush1.msra.mxu0 0.0
    %1199 = vmatprep.subr.mxu0 0.0
    %1200 = vmatpush1.msra.mxu0 0.0
    %1201 = vmatprep.subr.mxu0 0.0
    %1202 = vmatpush1.msra.mxu0 0.0
    %1203 = vmatprep.subr.mxu0 0.0
    %1204 = vmatpush1.msra.mxu0 0.0
    %1205 = vmatprep.subr.mxu0 0.0
    %1206 = vmatpush1.msra.mxu0 0.0
    %1207 = vmatprep.subr.mxu0 0.0
    %1208 = vmatpush1.msra.mxu0 0.0
    %1209 = vmatprep.subr.mxu0 0.0
    %1210 = vmatpush1.msra.mxu0 0.0
    %1211 = vmatprep.subr.mxu0 0.0
    %1212 = vmatpush1.msra.mxu0 0.0
    %1213 = vmatprep.subr.mxu0 0.0
    %1214 = vmatpush1.msra.mxu0 0.0
    %1215 = vmatprep.subr.mxu0 0.0
    %1216 = vmatpush1.msra.mxu0 0.0
    %1217 = vmatprep.subr.mxu0 0.0
    %1218 = vmatpush1.msra.mxu0 0.0
    %1219 = vmatprep.subr.mxu0 0.0
    %1220 = vmatpush1.msra.mxu0 0.0
    %1221 = vmatprep.subr.mxu0 0.0
    %1222 = vmatpush1.msra.mxu0 0.0
    %1223 = vmatprep.subr.mxu0 0.0
    %1224 = vmatpush1.msra.mxu0 0.0
    %1225 = vmatprep.subr.mxu0 0.0
    %1226 = vmatpush1.msra.mxu0 0.0
    %1227 = vmatprep.subr.mxu0 0.0
    %1228 = vmatpush1.msra.mxu0 0.0
    %1229 = vmatprep.subr.mxu0 0.0
    %1230 = vmatpush1.msra.mxu0 0.0
    %1231 = vmatprep.subr.mxu0 0.0
    %1232 = vmatpush1.msra.mxu0 0.0
    %1233 = vmatprep.subr.mxu0 0.0
    %1234 = vmatpush1.msra.mxu0 0.0
    %1235 = vmatprep.subr.mxu0 0.0
    %1236 = vmatpush1.msra.mxu0 0.0
    %1237 = vmatprep.subr.mxu0 0.0
    %1238 = vmatpush1.msra.mxu0 0.0
    %1239 = vmatprep.subr.mxu0 0.0
    %1240 = vmatpush1.msra.mxu0 0.0
    %1241 = vmatprep.subr.mxu0 0.0
    %1242 = vmatpush1.msra.mxu0 0.0
    %1243 = vmatprep.subr.mxu0 0.0
    %1244 = vmatpush1.msra.mxu0 0.0
    %1245 = vmatprep.subr.mxu0 0.0
    %1246 = vmatpush1.msra.mxu0 0.0
    %1247 = vmatprep.mubr.f32.mxu0 0.0
    %1248 = vmatmul.mubr.f32.gmra.mrb[0].mxu0 %v1181
    %v1249 = vpop.f32.mrb[0].mxu0
    %v1250 = vadd.f32 0.0, %v1249
    %v1251 = vpop.f32.mrb[0].mxu0
    %1252 = vdwg.mxu0
    %1253 = vrot.lane.b32.xlu0 %v157, 56
    %v1254 = vpop.permute.xlu0 %1253
    %v1257 = vsel %vm315, %v1173, 0
    %1259 = vmatprep.subr.mxu0 0.0
    %1260 = vmatpush1.msra.mxu0 %v1254
    %1261 = vmatprep.subr.mxu0 0.0
    %1262 = vmatpush1.msra.mxu0 0.0
    %1263 = vmatprep.subr.mxu0 0.0
    %1264 = vmatpush1.msra.mxu0 0.0
    %1265 = vmatprep.subr.mxu0 0.0
    %1266 = vmatpush1.msra.mxu0 0.0
    %1267 = vmatprep.subr.mxu0 0.0
    %1268 = vmatpush1.msra.mxu0 0.0
    %1269 = vmatprep.subr.mxu0 0.0
    %1270 = vmatpush1.msra.mxu0 0.0
    %1271 = vmatprep.subr.mxu0 0.0
    %1272 = vmatpush1.msra.mxu0 0.0
    %1273 = vmatprep.subr.mxu0 0.0
    %1274 = vmatpush1.msra.mxu0 0.0
    %1275 = vmatprep.subr.mxu0 0.0
    %1276 = vmatpush1.msra.mxu0 0.0
    %1277 = vmatprep.subr.mxu0 0.0
    %1278 = vmatpush1.msra.mxu0 0.0
    %1279 = vmatprep.subr.mxu0 0.0
    %1280 = vmatpush1.msra.mxu0 0.0
    %1281 = vmatprep.subr.mxu0 0.0
    %1282 = vmatpush1.msra.mxu0 0.0
    %1283 = vmatprep.subr.mxu0 0.0
    %1284 = vmatpush1.msra.mxu0 0.0
    %1285 = vmatprep.subr.mxu0 0.0
    %1286 = vmatpush1.msra.mxu0 0.0
    %1287 = vmatprep.subr.mxu0 0.0
    %1288 = vmatpush1.msra.mxu0 0.0
    %1289 = vmatprep.subr.mxu0 0.0
    %1290 = vmatpush1.msra.mxu0 0.0
    %1291 = vmatprep.subr.mxu0 0.0
    %1292 = vmatpush1.msra.mxu0 0.0
    %1293 = vmatprep.subr.mxu0 0.0
    %1294 = vmatpush1.msra.mxu0 0.0
    %1295 = vmatprep.subr.mxu0 0.0
    %1296 = vmatpush1.msra.mxu0 0.0
    %1297 = vmatprep.subr.mxu0 0.0
    %1298 = vmatpush1.msra.mxu0 0.0
    %1299 = vmatprep.subr.mxu0 0.0
    %1300 = vmatpush1.msra.mxu0 0.0
    %1301 = vmatprep.subr.mxu0 0.0
    %1302 = vmatpush1.msra.mxu0 0.0
    %1303 = vmatprep.subr.mxu0 0.0
    %1304 = vmatpush1.msra.mxu0 0.0
    %1305 = vmatprep.subr.mxu0 0.0
    %1306 = vmatpush1.msra.mxu0 0.0
    %1307 = vmatprep.subr.mxu0 0.0
    %1308 = vmatpush1.msra.mxu0 0.0
    %1309 = vmatprep.subr.mxu0 0.0
    %1310 = vmatpush1.msra.mxu0 0.0
    %1311 = vmatprep.subr.mxu0 0.0
    %1312 = vmatpush1.msra.mxu0 0.0
    %1313 = vmatprep.subr.mxu0 0.0
    %1314 = vmatpush1.msra.mxu0 0.0
    %1315 = vmatprep.subr.mxu0 0.0
    %1316 = vmatpush1.msra.mxu0 0.0
    %1317 = vmatprep.subr.mxu0 0.0
    %1318 = vmatpush1.msra.mxu0 0.0
    %1319 = vmatprep.subr.mxu0 0.0
    %1320 = vmatpush1.msra.mxu0 0.0
    %1321 = vmatprep.subr.mxu0 0.0
    %1322 = vmatpush1.msra.mxu0 0.0
    %1323 = vmatprep.mubr.f32.mxu0 0.0
    %1324 = vmatmul.mubr.f32.gmra.mrb[0].mxu0 %v1257
    %v1325 = vpop.f32.mrb[0].mxu0
    %v1326 = vadd.f32 0.0, %v1325
    %v1327 = vpop.f32.mrb[0].mxu0
    %1328 = vdwg.mxu0
    %v1329 = vld [vmem:[#allocation7 + $0x8] sm:$0xf]
    %v1331 = vsel %vm163, %v1250, 0
    %v1334 = vsel %vm163, %v1326, 0
    %v1337 = vsel %vm833, %v1329, 0
    %1339 = vmatprep.subr.mxu0 0.0
    %1340 = vmatpush1.msra.mxu0 %v1337
    %1341 = vmatprep.subr.mxu0 0.0
    %1342 = vmatpush1.msra.mxu0 0.0
    %1343 = vmatprep.subr.mxu0 0.0
    %1344 = vmatpush1.msra.mxu0 0.0
    %1345 = vmatprep.subr.mxu0 0.0
    %1346 = vmatpush1.msra.mxu0 0.0
    %1347 = vmatprep.subr.mxu0 0.0
    %1348 = vmatpush1.msra.mxu0 0.0
    %1349 = vmatprep.subr.mxu0 0.0
    %1350 = vmatpush1.msra.mxu0 0.0
    %1351 = vmatprep.subr.mxu0 0.0
    %1352 = vmatpush1.msra.mxu0 0.0
    %1353 = vmatprep.subr.mxu0 0.0
    %1354 = vmatpush1.msra.mxu0 0.0
    %1355 = vmatprep.subr.mxu0 0.0
    %1356 = vmatpush1.msra.mxu0 0.0
    %1357 = vmatprep.subr.mxu0 0.0
    %1358 = vmatpush1.msra.mxu0 0.0
    %1359 = vmatprep.subr.mxu0 0.0
    %1360 = vmatpush1.msra.mxu0 0.0
    %1361 = vmatprep.subr.mxu0 0.0
    %1362 = vmatpush1.msra.mxu0 0.0
    %1363 = vmatprep.subr.mxu0 0.0
    %1364 = vmatpush1.msra.mxu0 0.0
    %1365 = vmatprep.subr.mxu0 0.0
    %1366 = vmatpush1.msra.mxu0 0.0
    %1367 = vmatprep.subr.mxu0 0.0
    %1368 = vmatpush1.msra.mxu0 0.0
    %1369 = vmatprep.subr.mxu0 0.0
    %1370 = vmatpush1.msra.mxu0 0.0
    %1371 = vmatprep.subr.mxu0 0.0
    %1372 = vmatpush1.msra.mxu0 0.0
    %1373 = vmatprep.subr.mxu0 0.0
    %1374 = vmatpush1.msra.mxu0 0.0
    %1375 = vmatprep.subr.mxu0 0.0
    %1376 = vmatpush1.msra.mxu0 0.0
    %1377 = vmatprep.subr.mxu0 0.0
    %1378 = vmatpush1.msra.mxu0 0.0
    %1379 = vmatprep.subr.mxu0 0.0
    %1380 = vmatpush1.msra.mxu0 0.0
    %1381 = vmatprep.subr.mxu0 0.0
    %1382 = vmatpush1.msra.mxu0 0.0
    %1383 = vmatprep.subr.mxu0 0.0
    %1384 = vmatpush1.msra.mxu0 0.0
    %1385 = vmatprep.subr.mxu0 0.0
    %1386 = vmatpush1.msra.mxu0 0.0
    %1387 = vmatprep.subr.mxu0 0.0
    %1388 = vmatpush1.msra.mxu0 0.0
    %1389 = vmatprep.subr.mxu0 0.0
    %1390 = vmatpush1.msra.mxu0 0.0
    %1391 = vmatprep.subr.mxu0 0.0
    %1392 = vmatpush1.msra.mxu0 0.0
    %1393 = vmatprep.subr.mxu0 0.0
    %1394 = vmatpush1.msra.mxu0 0.0
    %1395 = vmatprep.subr.mxu0 0.0
    %1396 = vmatpush1.msra.mxu0 0.0
    %1397 = vmatprep.subr.mxu0 0.0
    %1398 = vmatpush1.msra.mxu0 0.0
    %1399 = vmatprep.subr.mxu0 0.0
    %1400 = vmatpush1.msra.mxu0 0.0
    %1401 = vmatprep.subr.mxu0 0.0
    %1402 = vmatpush1.msra.mxu0 0.0
    %1403 = vmatprep.mubr.f32.mxu0 0.0
    %1404 = vmatmul.mubr.f32.gmra.mrb[0].mxu0 %v1331
    %v1405 = vpop.f32.mrb[0].mxu0
    %v1406 = vadd.f32 0.0, %v1405
    %v1407 = vpop.f32.mrb[0].mxu0
    %1408 = vmatprep.mubr.f32.mxu0 0.0
    %1409 = vmatmul.mubr.f32.gmra.mrb[0].mxu0 %v1334
    %v1410 = vpop.f32.mrb[0].mxu0
    %v1411 = vadd.f32 0.0, %v1410
    %v1412 = vpop.f32.mrb[0].mxu0
    %1413 = vdwg.mxu0
    %v1414 = vadd.f32 %v988, %v1406
    %v1415 = vadd.f32 %v993, %v1411
    %1416 = vrot.lane.b32.xlu0 %v152, 116
    %v1417 = vpop.permute.xlu0 %1416
    %1418 = vrot.lane.b32.xlu0 %v152, 84
    %v1419 = vpop.permute.xlu0 %1418
    %v1420 = vsel %vm163, %v1417, 0
    %v1422 = vsel %vm163, %v1419, 0
    %1424 = vmatprep.subr.mxu0 0.0
    %1425 = vmatpush1.xpose.msra.mxu0 %v1422
    %1426 = vmatprep.subr.mxu0 0.0
    %1427 = vmatpush1.xpose.msra.mxu0 0.0
    %1428 = vmatprep.subr.mxu0 0.0
    %1429 = vmatpush1.xpose.msra.mxu0 0.0
    %1430 = vmatprep.subr.mxu0 0.0
    %1431 = vmatpush1.xpose.msra.mxu0 0.0
    %1432 = vmatprep.subr.mxu0 0.0
    %1433 = vmatpush1.xpose.msra.mxu0 0.0
    %1434 = vmatprep.subr.mxu0 0.0
    %1435 = vmatpush1.xpose.msra.mxu0 0.0
    %1436 = vmatprep.subr.mxu0 0.0
    %1437 = vmatpush1.xpose.msra.mxu0 0.0
    %1438 = vmatprep.subr.mxu0 0.0
    %1439 = vmatpush1.xpose.msra.mxu0 0.0
    %1440 = vmatprep.subr.mxu0 0.0
    %1441 = vmatpush1.xpose.msra.mxu0 0.0
    %1442 = vmatprep.subr.mxu0 0.0
    %1443 = vmatpush1.xpose.msra.mxu0 0.0
    %1444 = vmatprep.subr.mxu0 0.0
    %1445 = vmatpush1.xpose.msra.mxu0 0.0
    %1446 = vmatprep.subr.mxu0 0.0
    %1447 = vmatpush1.xpose.msra.mxu0 0.0
    %1448 = vmatprep.subr.mxu0 0.0
    %1449 = vmatpush1.xpose.msra.mxu0 0.0
    %1450 = vmatprep.subr.mxu0 0.0
    %1451 = vmatpush1.xpose.msra.mxu0 0.0
    %1452 = vmatprep.subr.mxu0 0.0
    %1453 = vmatpush1.xpose.msra.mxu0 0.0
    %1454 = vmatprep.subr.mxu0 0.0
    %1455 = vmatpush1.xpose.msra.mxu0 0.0
    %1456 = vmatprep.subr.mxu0 0.0
    %1457 = vmatpush1.xpose.msra.mxu0 0.0
    %1458 = vmatprep.subr.mxu0 0.0
    %1459 = vmatpush1.xpose.msra.mxu0 0.0
    %1460 = vmatprep.subr.mxu0 0.0
    %1461 = vmatpush1.xpose.msra.mxu0 0.0
    %1462 = vmatprep.subr.mxu0 0.0
    %1463 = vmatpush1.xpose.msra.mxu0 0.0
    %1464 = vmatprep.subr.mxu0 0.0
    %1465 = vmatpush1.xpose.msra.mxu0 0.0
    %1466 = vmatprep.subr.mxu0 0.0
    %1467 = vmatpush1.xpose.msra.mxu0 0.0
    %1468 = vmatprep.subr.mxu0 0.0
    %1469 = vmatpush1.xpose.msra.mxu0 0.0
    %1470 = vmatprep.subr.mxu0 0.0
    %1471 = vmatpush1.xpose.msra.mxu0 0.0
    %1472 = vmatprep.subr.mxu0 0.0
    %1473 = vmatpush1.xpose.msra.mxu0 0.0
    %1474 = vmatprep.subr.mxu0 0.0
    %1475 = vmatpush1.xpose.msra.mxu0 0.0
    %1476 = vmatprep.subr.mxu0 0.0
    %1477 = vmatpush1.xpose.msra.mxu0 0.0
    %1478 = vmatprep.subr.mxu0 0.0
    %1479 = vmatpush1.xpose.msra.mxu0 0.0
    %1480 = vmatprep.subr.mxu0 0.0
    %1481 = vmatpush1.xpose.msra.mxu0 0.0
    %1482 = vmatprep.subr.mxu0 0.0
    %1483 = vmatpush1.xpose.msra.mxu0 0.0
    %1484 = vmatprep.subr.mxu0 0.0
    %1485 = vmatpush1.xpose.msra.mxu0 0.0
    %1486 = vmatprep.subr.mxu0 0.0
    %1487 = vmatpush1.xpose.msra.mxu0 0.0
    %1488 = vmatprep.mubr.f32.mxu0 0.0
    %1489 = vmatmul.mubr.f32.gmra.mrb[0].mxu0 %v1420
    %v1490 = vpop.f32.mrb[0].mxu0
    %v1491 = vadd.f32 0.0, %v1490
    %v1492 = vpop.f32.mrb[0].mxu0
    %1493 = vdwg.mxu0
    %1494 = vrot.lane.b32.xlu0 %v157, 116
    %v1495 = vpop.permute.xlu0 %1494
    %1496 = vrot.lane.b32.xlu0 %v157, 84
    %v1497 = vpop.permute.xlu0 %1496
    %v1498 = vsel %vm163, %v1495, 0
    %v1500 = vsel %vm163, %v1497, 0
    %1502 = vmatprep.subr.mxu0 0.0
    %1503 = vmatpush1.xpose.msra.mxu0 %v1500
    %1504 = vmatprep.subr.mxu0 0.0
    %1505 = vmatpush1.xpose.msra.mxu0 0.0
    %1506 = vmatprep.subr.mxu0 0.0
    %1507 = vmatpush1.xpose.msra.mxu0 0.0
    %1508 = vmatprep.subr.mxu0 0.0
    %1509 = vmatpush1.xpose.msra.mxu0 0.0
    %1510 = vmatprep.subr.mxu0 0.0
    %1511 = vmatpush1.xpose.msra.mxu0 0.0
    %1512 = vmatprep.subr.mxu0 0.0
    %1513 = vmatpush1.xpose.msra.mxu0 0.0
    %1514 = vmatprep.subr.mxu0 0.0
    %1515 = vmatpush1.xpose.msra.mxu0 0.0
    %1516 = vmatprep.subr.mxu0 0.0
    %1517 = vmatpush1.xpose.msra.mxu0 0.0
    %1518 = vmatprep.subr.mxu0 0.0
    %1519 = vmatpush1.xpose.msra.mxu0 0.0
    %1520 = vmatprep.subr.mxu0 0.0
    %1521 = vmatpush1.xpose.msra.mxu0 0.0
    %1522 = vmatprep.subr.mxu0 0.0
    %1523 = vmatpush1.xpose.msra.mxu0 0.0
    %1524 = vmatprep.subr.mxu0 0.0
    %1525 = vmatpush1.xpose.msra.mxu0 0.0
    %1526 = vmatprep.subr.mxu0 0.0
    %1527 = vmatpush1.xpose.msra.mxu0 0.0
    %1528 = vmatprep.subr.mxu0 0.0
    %1529 = vmatpush1.xpose.msra.mxu0 0.0
    %1530 = vmatprep.subr.mxu0 0.0
    %1531 = vmatpush1.xpose.msra.mxu0 0.0
    %1532 = vmatprep.subr.mxu0 0.0
    %1533 = vmatpush1.xpose.msra.mxu0 0.0
    %1534 = vmatprep.subr.mxu0 0.0
    %1535 = vmatpush1.xpose.msra.mxu0 0.0
    %1536 = vmatprep.subr.mxu0 0.0
    %1537 = vmatpush1.xpose.msra.mxu0 0.0
    %1538 = vmatprep.subr.mxu0 0.0
    %1539 = vmatpush1.xpose.msra.mxu0 0.0
    %1540 = vmatprep.subr.mxu0 0.0
    %1541 = vmatpush1.xpose.msra.mxu0 0.0
    %1542 = vmatprep.subr.mxu0 0.0
    %1543 = vmatpush1.xpose.msra.mxu0 0.0
    %1544 = vmatprep.subr.mxu0 0.0
    %1545 = vmatpush1.xpose.msra.mxu0 0.0
    %1546 = vmatprep.subr.mxu0 0.0
    %1547 = vmatpush1.xpose.msra.mxu0 0.0
    %1548 = vmatprep.subr.mxu0 0.0
    %1549 = vmatpush1.xpose.msra.mxu0 0.0
    %1550 = vmatprep.subr.mxu0 0.0
    %1551 = vmatpush1.xpose.msra.mxu0 0.0
    %1552 = vmatprep.subr.mxu0 0.0
    %1553 = vmatpush1.xpose.msra.mxu0 0.0
    %1554 = vmatprep.subr.mxu0 0.0
    %1555 = vmatpush1.xpose.msra.mxu0 0.0
    %1556 = vmatprep.subr.mxu0 0.0
    %1557 = vmatpush1.xpose.msra.mxu0 0.0
    %1558 = vmatprep.subr.mxu0 0.0
    %1559 = vmatpush1.xpose.msra.mxu0 0.0
    %1560 = vmatprep.subr.mxu0 0.0
    %1561 = vmatpush1.xpose.msra.mxu0 0.0
    %1562 = vmatprep.subr.mxu0 0.0
    %1563 = vmatpush1.xpose.msra.mxu0 0.0
    %1564 = vmatprep.subr.mxu0 0.0
    %1565 = vmatpush1.xpose.msra.mxu0 0.0
    %1566 = vmatprep.mubr.f32.mxu0 0.0
    %1567 = vmatmul.mubr.f32.gmra.mrb[0].mxu0 %v1498
    %v1568 = vpop.f32.mrb[0].mxu0
    %v1569 = vadd.f32 0.0, %v1568
    %v1570 = vpop.f32.mrb[0].mxu0
    %1571 = vdwg.mxu0
    %v1572 = vsel %vm315, %v1491, -inf
    %1573 = vmax.xlane.f32.xlu0 %v1572
    %v1574 = vpop.xlane.xlu0 %1573
    %v1575 = vsel %vm315, %v1569, -inf
    %1576 = vmax.xlane.f32.xlu0 %v1575
    %v1577 = vpop.xlane.xlu0 %1576
    %v1578 = vsub.f32 %v1491, %v1574
    %v1579 = vsub.f32 %v1569, %v1577
    %v1580 = vmul.f32 %v1578, 1.442695
    %v1581 = vpow.pop %v1580
    %v1582 = vmul.f32 %v1579, 1.442695
    %v1583 = vpow.pop %v1582
    %v1584 = vsel %vm315, %v1581, 0.0
    %1585 = vadd.xlane.f32.xlu0 %v1584
    %v1586 = vpop.xlane.xlu0 %1585
    %v1587 = vsel %vm315, %v1583, 0.0
    %1588 = vadd.xlane.f32.xlu0 %v1587
    %v1589 = vpop.xlane.xlu0 %1588
    %v1590 = vrcp.pop %v1586
    %v1591 = vmul.f32 %v1581, %v1590
    %v1592 = vrcp.pop %v1589
    %v1593 = vmul.f32 %v1583, %v1592
    %s1594 = scalar_lea.vmem [#allocation9], 24
    %1595 = vst.msk [vmem:[%s1594] sm:$0xff] %vm315, %v1591
    %1596 = vst.msk [vmem:[%s1594 + $0x40] sm:$0xff] %vm315, %v1593
    %1597 = vrot.lane.b32.xlu0 %v152, 52
    %v1598 = vpop.permute.xlu0 %1597
    %v1601 = vsel %vm315, %v1591, 0
    %1603 = vmatprep.subr.mxu0 0.0
    %1604 = vmatpush1.msra.mxu0 %v1598
    %1605 = vmatprep.subr.mxu0 0.0
    %1606 = vmatpush1.msra.mxu0 0.0
    %1607 = vmatprep.subr.mxu0 0.0
    %1608 = vmatpush1.msra.mxu0 0.0
    %1609 = vmatprep.subr.mxu0 0.0
    %1610 = vmatpush1.msra.mxu0 0.0
    %1611 = vmatprep.subr.mxu0 0.0
    %1612 = vmatpush1.msra.mxu0 0.0
    %1613 = vmatprep.subr.mxu0 0.0
    %1614 = vmatpush1.msra.mxu0 0.0
    %1615 = vmatprep.subr.mxu0 0.0
    %1616 = vmatpush1.msra.mxu0 0.0
    %1617 = vmatprep.subr.mxu0 0.0
    %1618 = vmatpush1.msra.mxu0 0.0
    %1619 = vmatprep.subr.mxu0 0.0
    %1620 = vmatpush1.msra.mxu0 0.0
    %1621 = vmatprep.subr.mxu0 0.0
    %1622 = vmatpush1.msra.mxu0 0.0
    %1623 = vmatprep.subr.mxu0 0.0
    %1624 = vmatpush1.msra.mxu0 0.0
    %1625 = vmatprep.subr.mxu0 0.0
    %1626 = vmatpush1.msra.mxu0 0.0
    %1627 = vmatprep.subr.mxu0 0.0
    %1628 = vmatpush1.msra.mxu0 0.0
    %1629 = vmatprep.subr.mxu0 0.0
    %1630 = vmatpush1.msra.mxu0 0.0
    %1631 = vmatprep.subr.mxu0 0.0
    %1632 = vmatpush1.msra.mxu0 0.0
    %1633 = vmatprep.subr.mxu0 0.0
    %1634 = vmatpush1.msra.mxu0 0.0
    %1635 = vmatprep.subr.mxu0 0.0
    %1636 = vmatpush1.msra.mxu0 0.0
    %1637 = vmatprep.subr.mxu0 0.0
    %1638 = vmatpush1.msra.mxu0 0.0
    %1639 = vmatprep.subr.mxu0 0.0
    %1640 = vmatpush1.msra.mxu0 0.0
    %1641 = vmatprep.subr.mxu0 0.0
    %1642 = vmatpush1.msra.mxu0 0.0
    %1643 = vmatprep.subr.mxu0 0.0
    %1644 = vmatpush1.msra.mxu0 0.0
    %1645 = vmatprep.subr.mxu0 0.0
    %1646 = vmatpush1.msra.mxu0 0.0
    %1647 = vmatprep.subr.mxu0 0.0
    %1648 = vmatpush1.msra.mxu0 0.0
    %1649 = vmatprep.subr.mxu0 0.0
    %1650 = vmatpush1.msra.mxu0 0.0
    %1651 = vmatprep.subr.mxu0 0.0
    %1652 = vmatpush1.msra.mxu0 0.0
    %1653 = vmatprep.subr.mxu0 0.0
    %1654 = vmatpush1.msra.mxu0 0.0
    %1655 = vmatprep.subr.mxu0 0.0
    %1656 = vmatpush1.msra.mxu0 0.0
    %1657 = vmatprep.subr.mxu0 0.0
    %1658 = vmatpush1.msra.mxu0 0.0
    %1659 = vmatprep.subr.mxu0 0.0
    %1660 = vmatpush1.msra.mxu0 0.0
    %1661 = vmatprep.subr.mxu0 0.0
    %1662 = vmatpush1.msra.mxu0 0.0
    %1663 = vmatprep.subr.mxu0 0.0
    %1664 = vmatpush1.msra.mxu0 0.0
    %1665 = vmatprep.subr.mxu0 0.0
    %1666 = vmatpush1.msra.mxu0 0.0
    %1667 = vmatprep.mubr.f32.mxu0 0.0
    %1668 = vmatmul.mubr.f32.gmra.mrb[0].mxu0 %v1601
    %v1669 = vpop.f32.mrb[0].mxu0
    %v1670 = vadd.f32 0.0, %v1669
    %v1671 = vpop.f32.mrb[0].mxu0
    %1672 = vdwg.mxu0
    %1673 = vrot.lane.b32.xlu0 %v157, 52
    %v1674 = vpop.permute.xlu0 %1673
    %v1677 = vsel %vm315, %v1593, 0
    %1679 = vmatprep.subr.mxu0 0.0
    %1680 = vmatpush1.msra.mxu0 %v1674
    %1681 = vmatprep.subr.mxu0 0.0
    %1682 = vmatpush1.msra.mxu0 0.0
    %1683 = vmatprep.subr.mxu0 0.0
    %1684 = vmatpush1.msra.mxu0 0.0
    %1685 = vmatprep.subr.mxu0 0.0
    %1686 = vmatpush1.msra.mxu0 0.0
    %1687 = vmatprep.subr.mxu0 0.0
    %1688 = vmatpush1.msra.mxu0 0.0
    %1689 = vmatprep.subr.mxu0 0.0
    %1690 = vmatpush1.msra.mxu0 0.0
    %1691 = vmatprep.subr.mxu0 0.0
    %1692 = vmatpush1.msra.mxu0 0.0
    %1693 = vmatprep.subr.mxu0 0.0
    %1694 = vmatpush1.msra.mxu0 0.0
    %1695 = vmatprep.subr.mxu0 0.0
    %1696 = vmatpush1.msra.mxu0 0.0
    %1697 = vmatprep.subr.mxu0 0.0
    %1698 = vmatpush1.msra.mxu0 0.0
    %1699 = vmatprep.subr.mxu0 0.0
    %1700 = vmatpush1.msra.mxu0 0.0
    %1701 = vmatprep.subr.mxu0 0.0
    %1702 = vmatpush1.msra.mxu0 0.0
    %1703 = vmatprep.subr.mxu0 0.0
    %1704 = vmatpush1.msra.mxu0 0.0
    %1705 = vmatprep.subr.mxu0 0.0
    %1706 = vmatpush1.msra.mxu0 0.0
    %1707 = vmatprep.subr.mxu0 0.0
    %1708 = vmatpush1.msra.mxu0 0.0
    %1709 = vmatprep.subr.mxu0 0.0
    %1710 = vmatpush1.msra.mxu0 0.0
    %1711 = vmatprep.subr.mxu0 0.0
    %1712 = vmatpush1.msra.mxu0 0.0
    %1713 = vmatprep.subr.mxu0 0.0
    %1714 = vmatpush1.msra.mxu0 0.0
    %1715 = vmatprep.subr.mxu0 0.0
    %1716 = vmatpush1.msra.mxu0 0.0
    %1717 = vmatprep.subr.mxu0 0.0
    %1718 = vmatpush1.msra.mxu0 0.0
    %1719 = vmatprep.subr.mxu0 0.0
    %1720 = vmatpush1.msra.mxu0 0.0
    %1721 = vmatprep.subr.mxu0 0.0
    %1722 = vmatpush1.msra.mxu0 0.0
    %1723 = vmatprep.subr.mxu0 0.0
    %1724 = vmatpush1.msra.mxu0 0.0
    %1725 = vmatprep.subr.mxu0 0.0
    %1726 = vmatpush1.msra.mxu0 0.0
    %1727 = vmatprep.subr.mxu0 0.0
    %1728 = vmatpush1.msra.mxu0 0.0
    %1729 = vmatprep.subr.mxu0 0.0
    %1730 = vmatpush1.msra.mxu0 0.0
    %1731 = vmatprep.subr.mxu0 0.0
    %1732 = vmatpush1.msra.mxu0 0.0
    %1733 = vmatprep.subr.mxu0 0.0
    %1734 = vmatpush1.msra.mxu0 0.0
    %1735 = vmatprep.subr.mxu0 0.0
    %1736 = vmatpush1.msra.mxu0 0.0
    %1737 = vmatprep.subr.mxu0 0.0
    %1738 = vmatpush1.msra.mxu0 0.0
    %1739 = vmatprep.subr.mxu0 0.0
    %1740 = vmatpush1.msra.mxu0 0.0
    %1741 = vmatprep.subr.mxu0 0.0
    %1742 = vmatpush1.msra.mxu0 0.0
    %1743 = vmatprep.mubr.f32.mxu0 0.0
    %1744 = vmatmul.mubr.f32.gmra.mrb[0].mxu0 %v1677
    %v1745 = vpop.f32.mrb[0].mxu0
    %v1746 = vadd.f32 0.0, %v1745
    %v1747 = vpop.f32.mrb[0].mxu0
    %1748 = vdwg.mxu0
    %v1749 = vld [vmem:[#allocation7 + $0xc] sm:$0xf]
    %v1751 = vsel %vm163, %v1670, 0
    %v1754 = vsel %vm163, %v1746, 0
    %v1757 = vsel %vm833, %v1749, 0
    %1759 = vmatprep.subr.mxu0 0.0
    %1760 = vmatpush1.msra.mxu0 %v1757
    %1761 = vmatprep.subr.mxu0 0.0
    %1762 = vmatpush1.msra.mxu0 0.0
    %1763 = vmatprep.subr.mxu0 0.0
    %1764 = vmatpush1.msra.mxu0 0.0
    %1765 = vmatprep.subr.mxu0 0.0
    %1766 = vmatpush1.msra.mxu0 0.0
    %1767 = vmatprep.subr.mxu0 0.0
    %1768 = vmatpush1.msra.mxu0 0.0
    %1769 = vmatprep.subr.mxu0 0.0
    %1770 = vmatpush1.msra.mxu0 0.0
    %1771 = vmatprep.subr.mxu0 0.0
    %1772 = vmatpush1.msra.mxu0 0.0
    %1773 = vmatprep.subr.mxu0 0.0
    %1774 = vmatpush1.msra.mxu0 0.0
    %1775 = vmatprep.subr.mxu0 0.0
    %1776 = vmatpush1.msra.mxu0 0.0
    %1777 = vmatprep.subr.mxu0 0.0
    %1778 = vmatpush1.msra.mxu0 0.0
    %1779 = vmatprep.subr.mxu0 0.0
    %1780 = vmatpush1.msra.mxu0 0.0
    %1781 = vmatprep.subr.mxu0 0.0
    %1782 = vmatpush1.msra.mxu0 0.0
    %1783 = vmatprep.subr.mxu0 0.0
    %1784 = vmatpush1.msra.mxu0 0.0
    %1785 = vmatprep.subr.mxu0 0.0
    %1786 = vmatpush1.msra.mxu0 0.0
    %1787 = vmatprep.subr.mxu0 0.0
    %1788 = vmatpush1.msra.mxu0 0.0
    %1789 = vmatprep.subr.mxu0 0.0
    %1790 = vmatpush1.msra.mxu0 0.0
    %1791 = vmatprep.subr.mxu0 0.0
    %1792 = vmatpush1.msra.mxu0 0.0
    %1793 = vmatprep.subr.mxu0 0.0
    %1794 = vmatpush1.msra.mxu0 0.0
    %1795 = vmatprep.subr.mxu0 0.0
    %1796 = vmatpush1.msra.mxu0 0.0
    %1797 = vmatprep.subr.mxu0 0.0
    %1798 = vmatpush1.msra.mxu0 0.0
    %1799 = vmatprep.subr.mxu0 0.0
    %1800 = vmatpush1.msra.mxu0 0.0
    %1801 = vmatprep.subr.mxu0 0.0
    %1802 = vmatpush1.msra.mxu0 0.0
    %1803 = vmatprep.subr.mxu0 0.0
    %1804 = vmatpush1.msra.mxu0 0.0
    %1805 = vmatprep.subr.mxu0 0.0
    %1806 = vmatpush1.msra.mxu0 0.0
    %1807 = vmatprep.subr.mxu0 0.0
    %1808 = vmatpush1.msra.mxu0 0.0
    %1809 = vmatprep.subr.mxu0 0.0
    %1810 = vmatpush1.msra.mxu0 0.0
    %1811 = vmatprep.subr.mxu0 0.0
    %1812 = vmatpush1.msra.mxu0 0.0
    %1813 = vmatprep.subr.mxu0 0.0
    %1814 = vmatpush1.msra.mxu0 0.0
    %1815 = vmatprep.subr.mxu0 0.0
    %1816 = vmatpush1.msra.mxu0 0.0
    %1817 = vmatprep.subr.mxu0 0.0
    %1818 = vmatpush1.msra.mxu0 0.0
    %1819 = vmatprep.subr.mxu0 0.0
    %1820 = vmatpush1.msra.mxu0 0.0
    %1821 = vmatprep.subr.mxu0 0.0
    %1822 = vmatpush1.msra.mxu0 0.0
    %1823 = vmatprep.mubr.f32.mxu0 0.0
    %1824 = vmatmul.mubr.f32.gmra.mrb[0].mxu0 %v1751
    %v1825 = vpop.f32.mrb[0].mxu0
    %v1826 = vadd.f32 0.0, %v1825
    %v1827 = vpop.f32.mrb[0].mxu0
    %1828 = vmatprep.mubr.f32.mxu0 0.0
    %1829 = vmatmul.mubr.f32.gmra.mrb[0].mxu0 %v1754
    %v1830 = vpop.f32.mrb[0].mxu0
    %v1831 = vadd.f32 0.0, %v1830
    %v1832 = vpop.f32.mrb[0].mxu0
    %1833 = vdwg.mxu0
    %v1834 = vadd.f32 %v1414, %v1826
    %v1835 = vadd.f32 %v1415, %v1831
    %1836 = vrot.lane.b32.xlu0 %v152, 112
    %v1837 = vpop.permute.xlu0 %1836
    %1838 = vrot.lane.b32.xlu0 %v152, 80
    %v1839 = vpop.permute.xlu0 %1838
    %v1840 = vsel %vm163, %v1837, 0
    %v1842 = vsel %vm163, %v1839, 0
    %1844 = vmatprep.subr.mxu0 0.0
    %1845 = vmatpush1.xpose.msra.mxu0 %v1842
    %1846 = vmatprep.subr.mxu0 0.0
    %1847 = vmatpush1.xpose.msra.mxu0 0.0
    %1848 = vmatprep.subr.mxu0 0.0
    %1849 = vmatpush1.xpose.msra.mxu0 0.0
    %1850 = vmatprep.subr.mxu0 0.0
    %1851 = vmatpush1.xpose.msra.mxu0 0.0
    %1852 = vmatprep.subr.mxu0 0.0
    %1853 = vmatpush1.xpose.msra.mxu0 0.0
    %1854 = vmatprep.subr.mxu0 0.0
    %1855 = vmatpush1.xpose.msra.mxu0 0.0
    %1856 = vmatprep.subr.mxu0 0.0
    %1857 = vmatpush1.xpose.msra.mxu0 0.0
    %1858 = vmatprep.subr.mxu0 0.0
    %1859 = vmatpush1.xpose.msra.mxu0 0.0
    %1860 = vmatprep.subr.mxu0 0.0
    %1861 = vmatpush1.xpose.msra.mxu0 0.0
    %1862 = vmatprep.subr.mxu0 0.0
    %1863 = vmatpush1.xpose.msra.mxu0 0.0
    %1864 = vmatprep.subr.mxu0 0.0
    %1865 = vmatpush1.xpose.msra.mxu0 0.0
    %1866 = vmatprep.subr.mxu0 0.0
    %1867 = vmatpush1.xpose.msra.mxu0 0.0
    %1868 = vmatprep.subr.mxu0 0.0
    %1869 = vmatpush1.xpose.msra.mxu0 0.0
    %1870 = vmatprep.subr.mxu0 0.0
    %1871 = vmatpush1.xpose.msra.mxu0 0.0
    %1872 = vmatprep.subr.mxu0 0.0
    %1873 = vmatpush1.xpose.msra.mxu0 0.0
    %1874 = vmatprep.subr.mxu0 0.0
    %1875 = vmatpush1.xpose.msra.mxu0 0.0
    %1876 = vmatprep.subr.mxu0 0.0
    %1877 = vmatpush1.xpose.msra.mxu0 0.0
    %1878 = vmatprep.subr.mxu0 0.0
    %1879 = vmatpush1.xpose.msra.mxu0 0.0
    %1880 = vmatprep.subr.mxu0 0.0
    %1881 = vmatpush1.xpose.msra.mxu0 0.0
    %1882 = vmatprep.subr.mxu0 0.0
    %1883 = vmatpush1.xpose.msra.mxu0 0.0
    %1884 = vmatprep.subr.mxu0 0.0
    %1885 = vmatpush1.xpose.msra.mxu0 0.0
    %1886 = vmatprep.subr.mxu0 0.0
    %1887 = vmatpush1.xpose.msra.mxu0 0.0
    %1888 = vmatprep.subr.mxu0 0.0
    %1889 = vmatpush1.xpose.msra.mxu0 0.0
    %1890 = vmatprep.subr.mxu0 0.0
    %1891 = vmatpush1.xpose.msra.mxu0 0.0
    %1892 = vmatprep.subr.mxu0 0.0
    %1893 = vmatpush1.xpose.msra.mxu0 0.0
    %1894 = vmatprep.subr.mxu0 0.0
    %1895 = vmatpush1.xpose.msra.mxu0 0.0
    %1896 = vmatprep.subr.mxu0 0.0
    %1897 = vmatpush1.xpose.msra.mxu0 0.0
    %1898 = vmatprep.subr.mxu0 0.0
    %1899 = vmatpush1.xpose.msra.mxu0 0.0
    %1900 = vmatprep.subr.mxu0 0.0
    %1901 = vmatpush1.xpose.msra.mxu0 0.0
    %1902 = vmatprep.subr.mxu0 0.0
    %1903 = vmatpush1.xpose.msra.mxu0 0.0
    %1904 = vmatprep.subr.mxu0 0.0
    %1905 = vmatpush1.xpose.msra.mxu0 0.0
    %1906 = vmatprep.subr.mxu0 0.0
    %1907 = vmatpush1.xpose.msra.mxu0 0.0
    %1908 = vmatprep.mubr.f32.mxu0 0.0
    %1909 = vmatmul.mubr.f32.gmra.mrb[0].mxu0 %v1840
    %v1910 = vpop.f32.mrb[0].mxu0
    %v1911 = vadd.f32 0.0, %v1910
    %v1912 = vpop.f32.mrb[0].mxu0
    %1913 = vdwg.mxu0
    %1914 = vrot.lane.b32.xlu0 %v157, 112
    %v1915 = vpop.permute.xlu0 %1914
    %1916 = vrot.lane.b32.xlu0 %v157, 80
    %v1917 = vpop.permute.xlu0 %1916
    %v1918 = vsel %vm163, %v1915, 0
    %v1920 = vsel %vm163, %v1917, 0
    %1922 = vmatprep.subr.mxu0 0.0
    %1923 = vmatpush1.xpose.msra.mxu0 %v1920
    %1924 = vmatprep.subr.mxu0 0.0
    %1925 = vmatpush1.xpose.msra.mxu0 0.0
    %1926 = vmatprep.subr.mxu0 0.0
    %1927 = vmatpush1.xpose.msra.mxu0 0.0
    %1928 = vmatprep.subr.mxu0 0.0
    %1929 = vmatpush1.xpose.msra.mxu0 0.0
    %1930 = vmatprep.subr.mxu0 0.0
    %1931 = vmatpush1.xpose.msra.mxu0 0.0
    %1932 = vmatprep.subr.mxu0 0.0
    %1933 = vmatpush1.xpose.msra.mxu0 0.0
    %1934 = vmatprep.subr.mxu0 0.0
    %1935 = vmatpush1.xpose.msra.mxu0 0.0
    %1936 = vmatprep.subr.mxu0 0.0
    %1937 = vmatpush1.xpose.msra.mxu0 0.0
    %1938 = vmatprep.subr.mxu0 0.0
    %1939 = vmatpush1.xpose.msra.mxu0 0.0
    %1940 = vmatprep.subr.mxu0 0.0
    %1941 = vmatpush1.xpose.msra.mxu0 0.0
    %1942 = vmatprep.subr.mxu0 0.0
    %1943 = vmatpush1.xpose.msra.mxu0 0.0
    %1944 = vmatprep.subr.mxu0 0.0
    %1945 = vmatpush1.xpose.msra.mxu0 0.0
    %1946 = vmatprep.subr.mxu0 0.0
    %1947 = vmatpush1.xpose.msra.mxu0 0.0
    %1948 = vmatprep.subr.mxu0 0.0
    %1949 = vmatpush1.xpose.msra.mxu0 0.0
    %1950 = vmatprep.subr.mxu0 0.0
    %1951 = vmatpush1.xpose.msra.mxu0 0.0
    %1952 = vmatprep.subr.mxu0 0.0
    %1953 = vmatpush1.xpose.msra.mxu0 0.0
    %1954 = vmatprep.subr.mxu0 0.0
    %1955 = vmatpush1.xpose.msra.mxu0 0.0
    %1956 = vmatprep.subr.mxu0 0.0
    %1957 = vmatpush1.xpose.msra.mxu0 0.0
    %1958 = vmatprep.subr.mxu0 0.0
    %1959 = vmatpush1.xpose.msra.mxu0 0.0
    %1960 = vmatprep.subr.mxu0 0.0
    %1961 = vmatpush1.xpose.msra.mxu0 0.0
    %1962 = vmatprep.subr.mxu0 0.0
    %1963 = vmatpush1.xpose.msra.mxu0 0.0
    %1964 = vmatprep.subr.mxu0 0.0
    %1965 = vmatpush1.xpose.msra.mxu0 0.0
    %1966 = vmatprep.subr.mxu0 0.0
    %1967 = vmatpush1.xpose.msra.mxu0 0.0
    %1968 = vmatprep.subr.mxu0 0.0
    %1969 = vmatpush1.xpose.msra.mxu0 0.0
    %1970 = vmatprep.subr.mxu0 0.0
    %1971 = vmatpush1.xpose.msra.mxu0 0.0
    %1972 = vmatprep.subr.mxu0 0.0
    %1973 = vmatpush1.xpose.msra.mxu0 0.0
    %1974 = vmatprep.subr.mxu0 0.0
    %1975 = vmatpush1.xpose.msra.mxu0 0.0
    %1976 = vmatprep.subr.mxu0 0.0
    %1977 = vmatpush1.xpose.msra.mxu0 0.0
    %1978 = vmatprep.subr.mxu0 0.0
    %1979 = vmatpush1.xpose.msra.mxu0 0.0
    %1980 = vmatprep.subr.mxu0 0.0
    %1981 = vmatpush1.xpose.msra.mxu0 0.0
    %1982 = vmatprep.subr.mxu0 0.0
    %1983 = vmatpush1.xpose.msra.mxu0 0.0
    %1984 = vmatprep.subr.mxu0 0.0
    %1985 = vmatpush1.xpose.msra.mxu0 0.0
    %1986 = vmatprep.mubr.f32.mxu0 0.0
    %1987 = vmatmul.mubr.f32.gmra.mrb[0].mxu0 %v1918
    %v1988 = vpop.f32.mrb[0].mxu0
    %v1989 = vadd.f32 0.0, %v1988
    %v1990 = vpop.f32.mrb[0].mxu0
    %1991 = vdwg.mxu0
    %v1992 = vsel %vm315, %v1911, -inf
    %1993 = vmax.xlane.f32.xlu0 %v1992
    %v1994 = vpop.xlane.xlu0 %1993
    %v1995 = vsel %vm315, %v1989, -inf
    %1996 = vmax.xlane.f32.xlu0 %v1995
    %v1997 = vpop.xlane.xlu0 %1996
    %v1998 = vsub.f32 %v1911, %v1994
    %v1999 = vsub.f32 %v1989, %v1997
    %v2000 = vmul.f32 %v1998, 1.442695
    %v2001 = vpow.pop %v2000
    %v2002 = vmul.f32 %v1999, 1.442695
    %v2003 = vpow.pop %v2002
    %v2004 = vsel %vm315, %v2001, 0.0
    %2005 = vadd.xlane.f32.xlu0 %v2004
    %v2006 = vpop.xlane.xlu0 %2005
    %v2007 = vsel %vm315, %v2003, 0.0
    %2008 = vadd.xlane.f32.xlu0 %v2007
    %v2009 = vpop.xlane.xlu0 %2008
    %v2010 = vrcp.pop %v2006
    %v2011 = vmul.f32 %v2001, %v2010
    %v2012 = vrcp.pop %v2009
    %v2013 = vmul.f32 %v2003, %v2012
    %s2014 = scalar_lea.vmem [#allocation9], 32
    %2015 = vst.msk [vmem:[%s2014] sm:$0xff] %vm315, %v2011
    %2016 = vst.msk [vmem:[%s2014 + $0x40] sm:$0xff] %vm315, %v2013
    %2017 = vrot.lane.b32.xlu0 %v152, 48
    %v2018 = vpop.permute.xlu0 %2017
    %v2021 = vsel %vm315, %v2011, 0
    %2023 = vmatprep.subr.mxu0 0.0
    %2024 = vmatpush1.msra.mxu0 %v2018
    %2025 = vmatprep.subr.mxu0 0.0
    %2026 = vmatpush1.msra.mxu0 0.0
    %2027 = vmatprep.subr.mxu0 0.0
    %2028 = vmatpush1.msra.mxu0 0.0
    %2029 = vmatprep.subr.mxu0 0.0
    %2030 = vmatpush1.msra.mxu0 0.0
    %2031 = vmatprep.subr.mxu0 0.0
    %2032 = vmatpush1.msra.mxu0 0.0
    %2033 = vmatprep.subr.mxu0 0.0
    %2034 = vmatpush1.msra.mxu0 0.0
    %2035 = vmatprep.subr.mxu0 0.0
    %2036 = vmatpush1.msra.mxu0 0.0
    %2037 = vmatprep.subr.mxu0 0.0
    %2038 = vmatpush1.msra.mxu0 0.0
    %2039 = vmatprep.subr.mxu0 0.0
    %2040 = vmatpush1.msra.mxu0 0.0
    %2041 = vmatprep.subr.mxu0 0.0
    %2042 = vmatpush1.msra.mxu0 0.0
    %2043 = vmatprep.subr.mxu0 0.0
    %2044 = vmatpush1.msra.mxu0 0.0
    %2045 = vmatprep.subr.mxu0 0.0
    %2046 = vmatpush1.msra.mxu0 0.0
    %2047 = vmatprep.subr.mxu0 0.0
    %2048 = vmatpush1.msra.mxu0 0.0
    %2049 = vmatprep.subr.mxu0 0.0
    %2050 = vmatpush1.msra.mxu0 0.0
    %2051 = vmatprep.subr.mxu0 0.0
    %2052 = vmatpush1.msra.mxu0 0.0
    %2053 = vmatprep.subr.mxu0 0.0
    %2054 = vmatpush1.msra.mxu0 0.0
    %2055 = vmatprep.subr.mxu0 0.0
    %2056 = vmatpush1.msra.mxu0 0.0
    %2057 = vmatprep.subr.mxu0 0.0
    %2058 = vmatpush1.msra.mxu0 0.0
    %2059 = vmatprep.subr.mxu0 0.0
    %2060 = vmatpush1.msra.mxu0 0.0
    %2061 = vmatprep.subr.mxu0 0.0
    %2062 = vmatpush1.msra.mxu0 0.0
    %2063 = vmatprep.subr.mxu0 0.0
    %2064 = vmatpush1.msra.mxu0 0.0
    %2065 = vmatprep.subr.mxu0 0.0
    %2066 = vmatpush1.msra.mxu0 0.0
    %2067 = vmatprep.subr.mxu0 0.0
    %2068 = vmatpush1.msra.mxu0 0.0
    %2069 = vmatprep.subr.mxu0 0.0
    %2070 = vmatpush1.msra.mxu0 0.0
    %2071 = vmatprep.subr.mxu0 0.0
    %2072 = vmatpush1.msra.mxu0 0.0
    %2073 = vmatprep.subr.mxu0 0.0
    %2074 = vmatpush1.msra.mxu0 0.0
    %2075 = vmatprep.subr.mxu0 0.0
    %2076 = vmatpush1.msra.mxu0 0.0
    %2077 = vmatprep.subr.mxu0 0.0
    %2078 = vmatpush1.msra.mxu0 0.0
    %2079 = vmatprep.subr.mxu0 0.0
    %2080 = vmatpush1.msra.mxu0 0.0
    %2081 = vmatprep.subr.mxu0 0.0
    %2082 = vmatpush1.msra.mxu0 0.0
    %2083 = vmatprep.subr.mxu0 0.0
    %2084 = vmatpush1.msra.mxu0 0.0
    %2085 = vmatprep.subr.mxu0 0.0
    %2086 = vmatpush1.msra.mxu0 0.0
    %2087 = vmatprep.mubr.f32.mxu0 0.0
    %2088 = vmatmul.mubr.f32.gmra.mrb[0].mxu0 %v2021
    %v2089 = vpop.f32.mrb[0].mxu0
    %v2090 = vadd.f32 0.0, %v2089
    %v2091 = vpop.f32.mrb[0].mxu0
    %2092 = vdwg.mxu0
    %2093 = vrot.lane.b32.xlu0 %v157, 48
    %v2094 = vpop.permute.xlu0 %2093
    %v2097 = vsel %vm315, %v2013, 0
    %2099 = vmatprep.subr.mxu0 0.0
    %2100 = vmatpush1.msra.mxu0 %v2094
    %2101 = vmatprep.subr.mxu0 0.0
    %2102 = vmatpush1.msra.mxu0 0.0
    %2103 = vmatprep.subr.mxu0 0.0
    %2104 = vmatpush1.msra.mxu0 0.0
    %2105 = vmatprep.subr.mxu0 0.0
    %2106 = vmatpush1.msra.mxu0 0.0
    %2107 = vmatprep.subr.mxu0 0.0
    %2108 = vmatpush1.msra.mxu0 0.0
    %2109 = vmatprep.subr.mxu0 0.0
    %2110 = vmatpush1.msra.mxu0 0.0
    %2111 = vmatprep.subr.mxu0 0.0
    %2112 = vmatpush1.msra.mxu0 0.0
    %2113 = vmatprep.subr.mxu0 0.0
    %2114 = vmatpush1.msra.mxu0 0.0
    %2115 = vmatprep.subr.mxu0 0.0
    %2116 = vmatpush1.msra.mxu0 0.0
    %2117 = vmatprep.subr.mxu0 0.0
    %2118 = vmatpush1.msra.mxu0 0.0
    %2119 = vmatprep.subr.mxu0 0.0
    %2120 = vmatpush1.msra.mxu0 0.0
    %2121 = vmatprep.subr.mxu0 0.0
    %2122 = vmatpush1.msra.mxu0 0.0
    %2123 = vmatprep.subr.mxu0 0.0
    %2124 = vmatpush1.msra.mxu0 0.0
    %2125 = vmatprep.subr.mxu0 0.0
    %2126 = vmatpush1.msra.mxu0 0.0
    %2127 = vmatprep.subr.mxu0 0.0
    %2128 = vmatpush1.msra.mxu0 0.0
    %2129 = vmatprep.subr.mxu0 0.0
    %2130 = vmatpush1.msra.mxu0 0.0
    %2131 = vmatprep.subr.mxu0 0.0
    %2132 = vmatpush1.msra.mxu0 0.0
    %2133 = vmatprep.subr.mxu0 0.0
    %2134 = vmatpush1.msra.mxu0 0.0
    %2135 = vmatprep.subr.mxu0 0.0
    %2136 = vmatpush1.msra.mxu0 0.0
    %2137 = vmatprep.subr.mxu0 0.0
    %2138 = vmatpush1.msra.mxu0 0.0
    %2139 = vmatprep.subr.mxu0 0.0
    %2140 = vmatpush1.msra.mxu0 0.0
    %2141 = vmatprep.subr.mxu0 0.0
    %2142 = vmatpush1.msra.mxu0 0.0
    %2143 = vmatprep.subr.mxu0 0.0
    %2144 = vmatpush1.msra.mxu0 0.0
    %2145 = vmatprep.subr.mxu0 0.0
    %2146 = vmatpush1.msra.mxu0 0.0
    %2147 = vmatprep.subr.mxu0 0.0
    %2148 = vmatpush1.msra.mxu0 0.0
    %2149 = vmatprep.subr.mxu0 0.0
    %2150 = vmatpush1.msra.mxu0 0.0
    %2151 = vmatprep.subr.mxu0 0.0
    %2152 = vmatpush1.msra.mxu0 0.0
    %2153 = vmatprep.subr.mxu0 0.0
    %2154 = vmatpush1.msra.mxu0 0.0
    %2155 = vmatprep.subr.mxu0 0.0
    %2156 = vmatpush1.msra.mxu0 0.0
    %2157 = vmatprep.subr.mxu0 0.0
    %2158 = vmatpush1.msra.mxu0 0.0
    %2159 = vmatprep.subr.mxu0 0.0
    %2160 = vmatpush1.msra.mxu0 0.0
    %2161 = vmatprep.subr.mxu0 0.0
    %2162 = vmatpush1.msra.mxu0 0.0
    %2163 = vmatprep.mubr.f32.mxu0 0.0
    %2164 = vmatmul.mubr.f32.gmra.mrb[0].mxu0 %v2097
    %v2165 = vpop.f32.mrb[0].mxu0
    %v2166 = vadd.f32 0.0, %v2165
    %v2167 = vpop.f32.mrb[0].mxu0
    %2168 = vdwg.mxu0
    %v2169 = vld [vmem:[#allocation7 + $0x10] sm:$0xf]
    %v2171 = vsel %vm163, %v2090, 0
    %v2174 = vsel %vm163, %v2166, 0
    %v2177 = vsel %vm833, %v2169, 0
    %2179 = vmatprep.subr.mxu0 0.0
    %2180 = vmatpush1.msra.mxu0 %v2177
    %2181 = vmatprep.subr.mxu0 0.0
    %2182 = vmatpush1.msra.mxu0 0.0
    %2183 = vmatprep.subr.mxu0 0.0
    %2184 = vmatpush1.msra.mxu0 0.0
    %2185 = vmatprep.subr.mxu0 0.0
    %2186 = vmatpush1.msra.mxu0 0.0
    %2187 = vmatprep.subr.mxu0 0.0
    %2188 = vmatpush1.msra.mxu0 0.0
    %2189 = vmatprep.subr.mxu0 0.0
    %2190 = vmatpush1.msra.mxu0 0.0
    %2191 = vmatprep.subr.mxu0 0.0
    %2192 = vmatpush1.msra.mxu0 0.0
    %2193 = vmatprep.subr.mxu0 0.0
    %2194 = vmatpush1.msra.mxu0 0.0
    %2195 = vmatprep.subr.mxu0 0.0
    %2196 = vmatpush1.msra.mxu0 0.0
    %2197 = vmatprep.subr.mxu0 0.0
    %2198 = vmatpush1.msra.mxu0 0.0
    %2199 = vmatprep.subr.mxu0 0.0
    %2200 = vmatpush1.msra.mxu0 0.0
    %2201 = vmatprep.subr.mxu0 0.0
    %2202 = vmatpush1.msra.mxu0 0.0
    %2203 = vmatprep.subr.mxu0 0.0
    %2204 = vmatpush1.msra.mxu0 0.0
    %2205 = vmatprep.subr.mxu0 0.0
    %2206 = vmatpush1.msra.mxu0 0.0
    %2207 = vmatprep.subr.mxu0 0.0
    %2208 = vmatpush1.msra.mxu0 0.0
    %2209 = vmatprep.subr.mxu0 0.0
    %2210 = vmatpush1.msra.mxu0 0.0
    %2211 = vmatprep.subr.mxu0 0.0
    %2212 = vmatpush1.msra.mxu0 0.0
    %2213 = vmatprep.subr.mxu0 0.0
    %2214 = vmatpush1.msra.mxu0 0.0
    %2215 = vmatprep.subr.mxu0 0.0
    %2216 = vmatpush1.msra.mxu0 0.0
    %2217 = vmatprep.subr.mxu0 0.0
    %2218 = vmatpush1.msra.mxu0 0.0
    %2219 = vmatprep.subr.mxu0 0.0
    %2220 = vmatpush1.msra.mxu0 0.0
    %2221 = vmatprep.subr.mxu0 0.0
    %2222 = vmatpush1.msra.mxu0 0.0
    %2223 = vmatprep.subr.mxu0 0.0
    %2224 = vmatpush1.msra.mxu0 0.0
    %2225 = vmatprep.subr.mxu0 0.0
    %2226 = vmatpush1.msra.mxu0 0.0
    %2227 = vmatprep.subr.mxu0 0.0
    %2228 = vmatpush1.msra.mxu0 0.0
    %2229 = vmatprep.subr.mxu0 0.0
    %2230 = vmatpush1.msra.mxu0 0.0
    %2231 = vmatprep.subr.mxu0 0.0
    %2232 = vmatpush1.msra.mxu0 0.0
    %2233 = vmatprep.subr.mxu0 0.0
    %2234 = vmatpush1.msra.mxu0 0.0
    %2235 = vmatprep.subr.mxu0 0.0
    %2236 = vmatpush1.msra.mxu0 0.0
    %2237 = vmatprep.subr.mxu0 0.0
    %2238 = vmatpush1.msra.mxu0 0.0
    %2239 = vmatprep.subr.mxu0 0.0
    %2240 = vmatpush1.msra.mxu0 0.0
    %2241 = vmatprep.subr.mxu0 0.0
    %2242 = vmatpush1.msra.mxu0 0.0
    %2243 = vmatprep.mubr.f32.mxu0 0.0
    %2244 = vmatmul.mubr.f32.gmra.mrb[0].mxu0 %v2171
    %v2245 = vpop.f32.mrb[0].mxu0
    %v2246 = vadd.f32 0.0, %v2245
    %v2247 = vpop.f32.mrb[0].mxu0
    %2248 = vmatprep.mubr.f32.mxu0 0.0
    %2249 = vmatmul.mubr.f32.gmra.mrb[0].mxu0 %v2174
    %v2250 = vpop.f32.mrb[0].mxu0
    %v2251 = vadd.f32 0.0, %v2250
    %v2252 = vpop.f32.mrb[0].mxu0
    %2253 = vdwg.mxu0
    %v2254 = vadd.f32 %v1834, %v2246
    %v2255 = vadd.f32 %v1835, %v2251
    %2256 = vrot.lane.b32.xlu0 %v152, 108
    %v2257 = vpop.permute.xlu0 %2256
    %2258 = vrot.lane.b32.xlu0 %v152, 76
    %v2259 = vpop.permute.xlu0 %2258
    %v2260 = vsel %vm163, %v2257, 0
    %v2262 = vsel %vm163, %v2259, 0
    %2264 = vmatprep.subr.mxu0 0.0
    %2265 = vmatpush1.xpose.msra.mxu0 %v2262
    %2266 = vmatprep.subr.mxu0 0.0
    %2267 = vmatpush1.xpose.msra.mxu0 0.0
    %2268 = vmatprep.subr.mxu0 0.0
    %2269 = vmatpush1.xpose.msra.mxu0 0.0
    %2270 = vmatprep.subr.mxu0 0.0
    %2271 = vmatpush1.xpose.msra.mxu0 0.0
    %2272 = vmatprep.subr.mxu0 0.0
    %2273 = vmatpush1.xpose.msra.mxu0 0.0
    %2274 = vmatprep.subr.mxu0 0.0
    %2275 = vmatpush1.xpose.msra.mxu0 0.0
    %2276 = vmatprep.subr.mxu0 0.0
    %2277 = vmatpush1.xpose.msra.mxu0 0.0
    %2278 = vmatprep.subr.mxu0 0.0
    %2279 = vmatpush1.xpose.msra.mxu0 0.0
    %2280 = vmatprep.subr.mxu0 0.0
    %2281 = vmatpush1.xpose.msra.mxu0 0.0
    %2282 = vmatprep.subr.mxu0 0.0
    %2283 = vmatpush1.xpose.msra.mxu0 0.0
    %2284 = vmatprep.subr.mxu0 0.0
    %2285 = vmatpush1.xpose.msra.mxu0 0.0
    %2286 = vmatprep.subr.mxu0 0.0
    %2287 = vmatpush1.xpose.msra.mxu0 0.0
    %2288 = vmatprep.subr.mxu0 0.0
    %2289 = vmatpush1.xpose.msra.mxu0 0.0
    %2290 = vmatprep.subr.mxu0 0.0
    %2291 = vmatpush1.xpose.msra.mxu0 0.0
    %2292 = vmatprep.subr.mxu0 0.0
    %2293 = vmatpush1.xpose.msra.mxu0 0.0
    %2294 = vmatprep.subr.mxu0 0.0
    %2295 = vmatpush1.xpose.msra.mxu0 0.0
    %2296 = vmatprep.subr.mxu0 0.0
    %2297 = vmatpush1.xpose.msra.mxu0 0.0
    %2298 = vmatprep.subr.mxu0 0.0
    %2299 = vmatpush1.xpose.msra.mxu0 0.0
    %2300 = vmatprep.subr.mxu0 0.0
    %2301 = vmatpush1.xpose.msra.mxu0 0.0
    %2302 = vmatprep.subr.mxu0 0.0
    %2303 = vmatpush1.xpose.msra.mxu0 0.0
    %2304 = vmatprep.subr.mxu0 0.0
    %2305 = vmatpush1.xpose.msra.mxu0 0.0
    %2306 = vmatprep.subr.mxu0 0.0
    %2307 = vmatpush1.xpose.msra.mxu0 0.0
    %2308 = vmatprep.subr.mxu0 0.0
    %2309 = vmatpush1.xpose.msra.mxu0 0.0
    %2310 = vmatprep.subr.mxu0 0.0
    %2311 = vmatpush1.xpose.msra.mxu0 0.0
    %2312 = vmatprep.subr.mxu0 0.0
    %2313 = vmatpush1.xpose.msra.mxu0 0.0
    %2314 = vmatprep.subr.mxu0 0.0
    %2315 = vmatpush1.xpose.msra.mxu0 0.0
    %2316 = vmatprep.subr.mxu0 0.0
    %2317 = vmatpush1.xpose.msra.mxu0 0.0
    %2318 = vmatprep.subr.mxu0 0.0
    %2319 = vmatpush1.xpose.msra.mxu0 0.0
    %2320 = vmatprep.subr.mxu0 0.0
    %2321 = vmatpush1.xpose.msra.mxu0 0.0
    %2322 = vmatprep.subr.mxu0 0.0
    %2323 = vmatpush1.xpose.msra.mxu0 0.0
    %2324 = vmatprep.subr.mxu0 0.0
    %2325 = vmatpush1.xpose.msra.mxu0 0.0
    %2326 = vmatprep.subr.mxu0 0.0
    %2327 = vmatpush1.xpose.msra.mxu0 0.0
    %2328 = vmatprep.mubr.f32.mxu0 0.0
    %2329 = vmatmul.mubr.f32.gmra.mrb[0].mxu0 %v2260
    %v2330 = vpop.f32.mrb[0].mxu0
    %v2331 = vadd.f32 0.0, %v2330
    %v2332 = vpop.f32.mrb[0].mxu0
    %2333 = vdwg.mxu0
    %2334 = vrot.lane.b32.xlu0 %v157, 108
    %v2335 = vpop.permute.xlu0 %2334
    %2336 = vrot.lane.b32.xlu0 %v157, 76
    %v2337 = vpop.permute.xlu0 %2336
    %v2338 = vsel %vm163, %v2335, 0
    %v2340 = vsel %vm163, %v2337, 0
    %2342 = vmatprep.subr.mxu0 0.0
    %2343 = vmatpush1.xpose.msra.mxu0 %v2340
    %2344 = vmatprep.subr.mxu0 0.0
    %2345 = vmatpush1.xpose.msra.mxu0 0.0
    %2346 = vmatprep.subr.mxu0 0.0
    %2347 = vmatpush1.xpose.msra.mxu0 0.0
    %2348 = vmatprep.subr.mxu0 0.0
    %2349 = vmatpush1.xpose.msra.mxu0 0.0
    %2350 = vmatprep.subr.mxu0 0.0
    %2351 = vmatpush1.xpose.msra.mxu0 0.0
    %2352 = vmatprep.subr.mxu0 0.0
    %2353 = vmatpush1.xpose.msra.mxu0 0.0
    %2354 = vmatprep.subr.mxu0 0.0
    %2355 = vmatpush1.xpose.msra.mxu0 0.0
    %2356 = vmatprep.subr.mxu0 0.0
    %2357 = vmatpush1.xpose.msra.mxu0 0.0
    %2358 = vmatprep.subr.mxu0 0.0
    %2359 = vmatpush1.xpose.msra.mxu0 0.0
    %2360 = vmatprep.subr.mxu0 0.0
    %2361 = vmatpush1.xpose.msra.mxu0 0.0
    %2362 = vmatprep.subr.mxu0 0.0
    %2363 = vmatpush1.xpose.msra.mxu0 0.0
    %2364 = vmatprep.subr.mxu0 0.0
    %2365 = vmatpush1.xpose.msra.mxu0 0.0
    %2366 = vmatprep.subr.mxu0 0.0
    %2367 = vmatpush1.xpose.msra.mxu0 0.0
    %2368 = vmatprep.subr.mxu0 0.0
    %2369 = vmatpush1.xpose.msra.mxu0 0.0
    %2370 = vmatprep.subr.mxu0 0.0
    %2371 = vmatpush1.xpose.msra.mxu0 0.0
    %2372 = vmatprep.subr.mxu0 0.0
    %2373 = vmatpush1.xpose.msra.mxu0 0.0
    %2374 = vmatprep.subr.mxu0 0.0
    %2375 = vmatpush1.xpose.msra.mxu0 0.0
    %2376 = vmatprep.subr.mxu0 0.0
    %2377 = vmatpush1.xpose.msra.mxu0 0.0
    %2378 = vmatprep.subr.mxu0 0.0
    %2379 = vmatpush1.xpose.msra.mxu0 0.0
    %2380 = vmatprep.subr.mxu0 0.0
    %2381 = vmatpush1.xpose.msra.mxu0 0.0
    %2382 = vmatprep.subr.mxu0 0.0
    %2383 = vmatpush1.xpose.msra.mxu0 0.0
    %2384 = vmatprep.subr.mxu0 0.0
    %2385 = vmatpush1.xpose.msra.mxu0 0.0
    %2386 = vmatprep.subr.mxu0 0.0
    %2387 = vmatpush1.xpose.msra.mxu0 0.0
    %2388 = vmatprep.subr.mxu0 0.0
    %2389 = vmatpush1.xpose.msra.mxu0 0.0
    %2390 = vmatprep.subr.mxu0 0.0
    %2391 = vmatpush1.xpose.msra.mxu0 0.0
    %2392 = vmatprep.subr.mxu0 0.0
    %2393 = vmatpush1.xpose.msra.mxu0 0.0
    %2394 = vmatprep.subr.mxu0 0.0
    %2395 = vmatpush1.xpose.msra.mxu0 0.0
    %2396 = vmatprep.subr.mxu0 0.0
    %2397 = vmatpush1.xpose.msra.mxu0 0.0
    %2398 = vmatprep.subr.mxu0 0.0
    %2399 = vmatpush1.xpose.msra.mxu0 0.0
    %2400 = vmatprep.subr.mxu0 0.0
    %2401 = vmatpush1.xpose.msra.mxu0 0.0
    %2402 = vmatprep.subr.mxu0 0.0
    %2403 = vmatpush1.xpose.msra.mxu0 0.0
    %2404 = vmatprep.subr.mxu0 0.0
    %2405 = vmatpush1.xpose.msra.mxu0 0.0
    %2406 = vmatprep.mubr.f32.mxu0 0.0
    %2407 = vmatmul.mubr.f32.gmra.mrb[0].mxu0 %v2338
    %v2408 = vpop.f32.mrb[0].mxu0
    %v2409 = vadd.f32 0.0, %v2408
    %v2410 = vpop.f32.mrb[0].mxu0
    %2411 = vdwg.mxu0
    %v2412 = vsel %vm315, %v2331, -inf
    %2413 = vmax.xlane.f32.xlu0 %v2412
    %v2414 = vpop.xlane.xlu0 %2413
    %v2415 = vsel %vm315, %v2409, -inf
    %2416 = vmax.xlane.f32.xlu0 %v2415
    %v2417 = vpop.xlane.xlu0 %2416
    %v2418 = vsub.f32 %v2331, %v2414
    %v2419 = vsub.f32 %v2409, %v2417
    %v2420 = vmul.f32 %v2418, 1.442695
    %v2421 = vpow.pop %v2420
    %v2422 = vmul.f32 %v2419, 1.442695
    %v2423 = vpow.pop %v2422
    %v2424 = vsel %vm315, %v2421, 0.0
    %2425 = vadd.xlane.f32.xlu0 %v2424
    %v2426 = vpop.xlane.xlu0 %2425
    %v2427 = vsel %vm315, %v2423, 0.0
    %2428 = vadd.xlane.f32.xlu0 %v2427
    %v2429 = vpop.xlane.xlu0 %2428
    %v2430 = vrcp.pop %v2426
    %v2431 = vmul.f32 %v2421, %v2430
    %v2432 = vrcp.pop %v2429
    %v2433 = vmul.f32 %v2423, %v2432
    %s2434 = scalar_lea.vmem [#allocation9], 40
    %2435 = vst.msk [vmem:[%s2434] sm:$0xff] %vm315, %v2431
    %2436 = vst.msk [vmem:[%s2434 + $0x40] sm:$0xff] %vm315, %v2433
    %2437 = vrot.lane.b32.xlu0 %v152, 44
    %v2438 = vpop.permute.xlu0 %2437
    %v2441 = vsel %vm315, %v2431, 0
    %2443 = vmatprep.subr.mxu0 0.0
    %2444 = vmatpush1.msra.mxu0 %v2438
    %2445 = vmatprep.subr.mxu0 0.0
    %2446 = vmatpush1.msra.mxu0 0.0
    %2447 = vmatprep.subr.mxu0 0.0
    %2448 = vmatpush1.msra.mxu0 0.0
    %2449 = vmatprep.subr.mxu0 0.0
    %2450 = vmatpush1.msra.mxu0 0.0
    %2451 = vmatprep.subr.mxu0 0.0
    %2452 = vmatpush1.msra.mxu0 0.0
    %2453 = vmatprep.subr.mxu0 0.0
    %2454 = vmatpush1.msra.mxu0 0.0
    %2455 = vmatprep.subr.mxu0 0.0
    %2456 = vmatpush1.msra.mxu0 0.0
    %2457 = vmatprep.subr.mxu0 0.0
    %2458 = vmatpush1.msra.mxu0 0.0
    %2459 = vmatprep.subr.mxu0 0.0
    %2460 = vmatpush1.msra.mxu0 0.0
    %2461 = vmatprep.subr.mxu0 0.0
    %2462 = vmatpush1.msra.mxu0 0.0
    %2463 = vmatprep.subr.mxu0 0.0
    %2464 = vmatpush1.msra.mxu0 0.0
    %2465 = vmatprep.subr.mxu0 0.0
    %2466 = vmatpush1.msra.mxu0 0.0
    %2467 = vmatprep.subr.mxu0 0.0
    %2468 = vmatpush1.msra.mxu0 0.0
    %2469 = vmatprep.subr.mxu0 0.0
    %2470 = vmatpush1.msra.mxu0 0.0
    %2471 = vmatprep.subr.mxu0 0.0
    %2472 = vmatpush1.msra.mxu0 0.0
    %2473 = vmatprep.subr.mxu0 0.0
    %2474 = vmatpush1.msra.mxu0 0.0
    %2475 = vmatprep.subr.mxu0 0.0
    %2476 = vmatpush1.msra.mxu0 0.0
    %2477 = vmatprep.subr.mxu0 0.0
    %2478 = vmatpush1.msra.mxu0 0.0
    %2479 = vmatprep.subr.mxu0 0.0
    %2480 = vmatpush1.msra.mxu0 0.0
    %2481 = vmatprep.subr.mxu0 0.0
    %2482 = vmatpush1.msra.mxu0 0.0
    %2483 = vmatprep.subr.mxu0 0.0
    %2484 = vmatpush1.msra.mxu0 0.0
    %2485 = vmatprep.subr.mxu0 0.0
    %2486 = vmatpush1.msra.mxu0 0.0
    %2487 = vmatprep.subr.mxu0 0.0
    %2488 = vmatpush1.msra.mxu0 0.0
    %2489 = vmatprep.subr.mxu0 0.0
    %2490 = vmatpush1.msra.mxu0 0.0
    %2491 = vmatprep.subr.mxu0 0.0
    %2492 = vmatpush1.msra.mxu0 0.0
    %2493 = vmatprep.subr.mxu0 0.0
    %2494 = vmatpush1.msra.mxu0 0.0
    %2495 = vmatprep.subr.mxu0 0.0
    %2496 = vmatpush1.msra.mxu0 0.0
    %2497 = vmatprep.subr.mxu0 0.0
    %2498 = vmatpush1.msra.mxu0 0.0
    %2499 = vmatprep.subr.mxu0 0.0
    %2500 = vmatpush1.msra.mxu0 0.0
    %2501 = vmatprep.subr.mxu0 0.0
    %2502 = vmatpush1.msra.mxu0 0.0
    %2503 = vmatprep.subr.mxu0 0.0
    %2504 = vmatpush1.msra.mxu0 0.0
    %2505 = vmatprep.subr.mxu0 0.0
    %2506 = vmatpush1.msra.mxu0 0.0
    %2507 = vmatprep.mubr.f32.mxu0 0.0
    %2508 = vmatmul.mubr.f32.gmra.mrb[0].mxu0 %v2441
    %v2509 = vpop.f32.mrb[0].mxu0
    %v2510 = vadd.f32 0.0, %v2509
    %v2511 = vpop.f32.mrb[0].mxu0
    %2512 = vdwg.mxu0
    %2513 = vrot.lane.b32.xlu0 %v157, 44
    %v2514 = vpop.permute.xlu0 %2513
    %v2517 = vsel %vm315, %v2433, 0
    %2519 = vmatprep.subr.mxu0 0.0
    %2520 = vmatpush1.msra.mxu0 %v2514
    %2521 = vmatprep.subr.mxu0 0.0
    %2522 = vmatpush1.msra.mxu0 0.0
    %2523 = vmatprep.subr.mxu0 0.0
    %2524 = vmatpush1.msra.mxu0 0.0
    %2525 = vmatprep.subr.mxu0 0.0
    %2526 = vmatpush1.msra.mxu0 0.0
    %2527 = vmatprep.subr.mxu0 0.0
    %2528 = vmatpush1.msra.mxu0 0.0
    %2529 = vmatprep.subr.mxu0 0.0
    %2530 = vmatpush1.msra.mxu0 0.0
    %2531 = vmatprep.subr.mxu0 0.0
    %2532 = vmatpush1.msra.mxu0 0.0
    %2533 = vmatprep.subr.mxu0 0.0
    %2534 = vmatpush1.msra.mxu0 0.0
    %2535 = vmatprep.subr.mxu0 0.0
    %2536 = vmatpush1.msra.mxu0 0.0
    %2537 = vmatprep.subr.mxu0 0.0
    %2538 = vmatpush1.msra.mxu0 0.0
    %2539 = vmatprep.subr.mxu0 0.0
    %2540 = vmatpush1.msra.mxu0 0.0
    %2541 = vmatprep.subr.mxu0 0.0
    %2542 = vmatpush1.msra.mxu0 0.0
    %2543 = vmatprep.subr.mxu0 0.0
    %2544 = vmatpush1.msra.mxu0 0.0
    %2545 = vmatprep.subr.mxu0 0.0
    %2546 = vmatpush1.msra.mxu0 0.0
    %2547 = vmatprep.subr.mxu0 0.0
    %2548 = vmatpush1.msra.mxu0 0.0
    %2549 = vmatprep.subr.mxu0 0.0
    %2550 = vmatpush1.msra.mxu0 0.0
    %2551 = vmatprep.subr.mxu0 0.0
    %2552 = vmatpush1.msra.mxu0 0.0
    %2553 = vmatprep.subr.mxu0 0.0
    %2554 = vmatpush1.msra.mxu0 0.0
    %2555 = vmatprep.subr.mxu0 0.0
    %2556 = vmatpush1.msra.mxu0 0.0
    %2557 = vmatprep.subr.mxu0 0.0
    %2558 = vmatpush1.msra.mxu0 0.0
    %2559 = vmatprep.subr.mxu0 0.0
    %2560 = vmatpush1.msra.mxu0 0.0
    %2561 = vmatprep.subr.mxu0 0.0
    %2562 = vmatpush1.msra.mxu0 0.0
    %2563 = vmatprep.subr.mxu0 0.0
    %2564 = vmatpush1.msra.mxu0 0.0
    %2565 = vmatprep.subr.mxu0 0.0
    %2566 = vmatpush1.msra.mxu0 0.0
    %2567 = vmatprep.subr.mxu0 0.0
    %2568 = vmatpush1.msra.mxu0 0.0
    %2569 = vmatprep.subr.mxu0 0.0
    %2570 = vmatpush1.msra.mxu0 0.0
    %2571 = vmatprep.subr.mxu0 0.0
    %2572 = vmatpush1.msra.mxu0 0.0
    %2573 = vmatprep.subr.mxu0 0.0
    %2574 = vmatpush1.msra.mxu0 0.0
    %2575 = vmatprep.subr.mxu0 0.0
    %2576 = vmatpush1.msra.mxu0 0.0
    %2577 = vmatprep.subr.mxu0 0.0
    %2578 = vmatpush1.msra.mxu0 0.0
    %2579 = vmatprep.subr.mxu0 0.0
    %2580 = vmatpush1.msra.mxu0 0.0
    %2581 = vmatprep.subr.mxu0 0.0
    %2582 = vmatpush1.msra.mxu0 0.0
    %2583 = vmatprep.mubr.f32.mxu0 0.0
    %2584 = vmatmul.mubr.f32.gmra.mrb[0].mxu0 %v2517
    %v2585 = vpop.f32.mrb[0].mxu0
    %v2586 = vadd.f32 0.0, %v2585
    %v2587 = vpop.f32.mrb[0].mxu0
    %2588 = vdwg.mxu0
    %v2589 = vld [vmem:[#allocation7 + $0x14] sm:$0xf]
    %v2591 = vsel %vm163, %v2510, 0
    %v2594 = vsel %vm163, %v2586, 0
    %v2597 = vsel %vm833, %v2589, 0
    %2599 = vmatprep.subr.mxu0 0.0
    %2600 = vmatpush1.msra.mxu0 %v2597
    %2601 = vmatprep.subr.mxu0 0.0
    %2602 = vmatpush1.msra.mxu0 0.0
    %2603 = vmatprep.subr.mxu0 0.0
    %2604 = vmatpush1.msra.mxu0 0.0
    %2605 = vmatprep.subr.mxu0 0.0
    %2606 = vmatpush1.msra.mxu0 0.0
    %2607 = vmatprep.subr.mxu0 0.0
    %2608 = vmatpush1.msra.mxu0 0.0
    %2609 = vmatprep.subr.mxu0 0.0
    %2610 = vmatpush1.msra.mxu0 0.0
    %2611 = vmatprep.subr.mxu0 0.0
    %2612 = vmatpush1.msra.mxu0 0.0
    %2613 = vmatprep.subr.mxu0 0.0
    %2614 = vmatpush1.msra.mxu0 0.0
    %2615 = vmatprep.subr.mxu0 0.0
    %2616 = vmatpush1.msra.mxu0 0.0
    %2617 = vmatprep.subr.mxu0 0.0
    %2618 = vmatpush1.msra.mxu0 0.0
    %2619 = vmatprep.subr.mxu0 0.0
    %2620 = vmatpush1.msra.mxu0 0.0
    %2621 = vmatprep.subr.mxu0 0.0
    %2622 = vmatpush1.msra.mxu0 0.0
    %2623 = vmatprep.subr.mxu0 0.0
    %2624 = vmatpush1.msra.mxu0 0.0
    %2625 = vmatprep.subr.mxu0 0.0
    %2626 = vmatpush1.msra.mxu0 0.0
    %2627 = vmatprep.subr.mxu0 0.0
    %2628 = vmatpush1.msra.mxu0 0.0
    %2629 = vmatprep.subr.mxu0 0.0
    %2630 = vmatpush1.msra.mxu0 0.0
    %2631 = vmatprep.subr.mxu0 0.0
    %2632 = vmatpush1.msra.mxu0 0.0
    %2633 = vmatprep.subr.mxu0 0.0
    %2634 = vmatpush1.msra.mxu0 0.0
    %2635 = vmatprep.subr.mxu0 0.0
    %2636 = vmatpush1.msra.mxu0 0.0
    %2637 = vmatprep.subr.mxu0 0.0
    %2638 = vmatpush1.msra.mxu0 0.0
    %2639 = vmatprep.subr.mxu0 0.0
    %2640 = vmatpush1.msra.mxu0 0.0
    %2641 = vmatprep.subr.mxu0 0.0
    %2642 = vmatpush1.msra.mxu0 0.0
    %2643 = vmatprep.subr.mxu0 0.0
    %2644 = vmatpush1.msra.mxu0 0.0
    %2645 = vmatprep.subr.mxu0 0.0
    %2646 = vmatpush1.msra.mxu0 0.0
    %2647 = vmatprep.subr.mxu0 0.0
    %2648 = vmatpush1.msra.mxu0 0.0
    %2649 = vmatprep.subr.mxu0 0.0
    %2650 = vmatpush1.msra.mxu0 0.0
    %2651 = vmatprep.subr.mxu0 0.0
    %2652 = vmatpush1.msra.mxu0 0.0
    %2653 = vmatprep.subr.mxu0 0.0
    %2654 = vmatpush1.msra.mxu0 0.0
    %2655 = vmatprep.subr.mxu0 0.0
    %2656 = vmatpush1.msra.mxu0 0.0
    %2657 = vmatprep.subr.mxu0 0.0
    %2658 = vmatpush1.msra.mxu0 0.0
    %2659 = vmatprep.subr.mxu0 0.0
    %2660 = vmatpush1.msra.mxu0 0.0
    %2661 = vmatprep.subr.mxu0 0.0
    %2662 = vmatpush1.msra.mxu0 0.0
    %2663 = vmatprep.mubr.f32.mxu0 0.0
    %2664 = vmatmul.mubr.f32.gmra.mrb[0].mxu0 %v2591
    %v2665 = vpop.f32.mrb[0].mxu0
    %v2666 = vadd.f32 0.0, %v2665
    %v2667 = vpop.f32.mrb[0].mxu0
    %2668 = vmatprep.mubr.f32.mxu0 0.0
    %2669 = vmatmul.mubr.f32.gmra.mrb[0].mxu0 %v2594
    %v2670 = vpop.f32.mrb[0].mxu0
    %v2671 = vadd.f32 0.0, %v2670
    %v2672 = vpop.f32.mrb[0].mxu0
    %2673 = vdwg.mxu0
    %v2674 = vadd.f32 %v2254, %v2666
    %v2675 = vadd.f32 %v2255, %v2671
    %2676 = vrot.lane.b32.xlu0 %v152, 104
    %v2677 = vpop.permute.xlu0 %2676
    %2678 = vrot.lane.b32.xlu0 %v152, 72
    %v2679 = vpop.permute.xlu0 %2678
    %v2680 = vsel %vm163, %v2677, 0
    %v2682 = vsel %vm163, %v2679, 0
    %2684 = vmatprep.subr.mxu0 0.0
    %2685 = vmatpush1.xpose.msra.mxu0 %v2682
    %2686 = vmatprep.subr.mxu0 0.0
    %2687 = vmatpush1.xpose.msra.mxu0 0.0
    %2688 = vmatprep.subr.mxu0 0.0
    %2689 = vmatpush1.xpose.msra.mxu0 0.0
    %2690 = vmatprep.subr.mxu0 0.0
    %2691 = vmatpush1.xpose.msra.mxu0 0.0
    %2692 = vmatprep.subr.mxu0 0.0
    %2693 = vmatpush1.xpose.msra.mxu0 0.0
    %2694 = vmatprep.subr.mxu0 0.0
    %2695 = vmatpush1.xpose.msra.mxu0 0.0
    %2696 = vmatprep.subr.mxu0 0.0
    %2697 = vmatpush1.xpose.msra.mxu0 0.0
    %2698 = vmatprep.subr.mxu0 0.0
    %2699 = vmatpush1.xpose.msra.mxu0 0.0
    %2700 = vmatprep.subr.mxu0 0.0
    %2701 = vmatpush1.xpose.msra.mxu0 0.0
    %2702 = vmatprep.subr.mxu0 0.0
    %2703 = vmatpush1.xpose.msra.mxu0 0.0
    %2704 = vmatprep.subr.mxu0 0.0
    %2705 = vmatpush1.xpose.msra.mxu0 0.0
    %2706 = vmatprep.subr.mxu0 0.0
    %2707 = vmatpush1.xpose.msra.mxu0 0.0
    %2708 = vmatprep.subr.mxu0 0.0
    %2709 = vmatpush1.xpose.msra.mxu0 0.0
    %2710 = vmatprep.subr.mxu0 0.0
    %2711 = vmatpush1.xpose.msra.mxu0 0.0
    %2712 = vmatprep.subr.mxu0 0.0
    %2713 = vmatpush1.xpose.msra.mxu0 0.0
    %2714 = vmatprep.subr.mxu0 0.0
    %2715 = vmatpush1.xpose.msra.mxu0 0.0
    %2716 = vmatprep.subr.mxu0 0.0
    %2717 = vmatpush1.xpose.msra.mxu0 0.0
    %2718 = vmatprep.subr.mxu0 0.0
    %2719 = vmatpush1.xpose.msra.mxu0 0.0
    %2720 = vmatprep.subr.mxu0 0.0
    %2721 = vmatpush1.xpose.msra.mxu0 0.0
    %2722 = vmatprep.subr.mxu0 0.0
    %2723 = vmatpush1.xpose.msra.mxu0 0.0
    %2724 = vmatprep.subr.mxu0 0.0
    %2725 = vmatpush1.xpose.msra.mxu0 0.0
    %2726 = vmatprep.subr.mxu0 0.0
    %2727 = vmatpush1.xpose.msra.mxu0 0.0
    %2728 = vmatprep.subr.mxu0 0.0
    %2729 = vmatpush1.xpose.msra.mxu0 0.0
    %2730 = vmatprep.subr.mxu0 0.0
    %2731 = vmatpush1.xpose.msra.mxu0 0.0
    %2732 = vmatprep.subr.mxu0 0.0
    %2733 = vmatpush1.xpose.msra.mxu0 0.0
    %2734 = vmatprep.subr.mxu0 0.0
    %2735 = vmatpush1.xpose.msra.mxu0 0.0
    %2736 = vmatprep.subr.mxu0 0.0
    %2737 = vmatpush1.xpose.msra.mxu0 0.0
    %2738 = vmatprep.subr.mxu0 0.0
    %2739 = vmatpush1.xpose.msra.mxu0 0.0
    %2740 = vmatprep.subr.mxu0 0.0
    %2741 = vmatpush1.xpose.msra.mxu0 0.0
    %2742 = vmatprep.subr.mxu0 0.0
    %2743 = vmatpush1.xpose.msra.mxu0 0.0
    %2744 = vmatprep.subr.mxu0 0.0
    %2745 = vmatpush1.xpose.msra.mxu0 0.0
    %2746 = vmatprep.subr.mxu0 0.0
    %2747 = vmatpush1.xpose.msra.mxu0 0.0
    %2748 = vmatprep.mubr.f32.mxu0 0.0
    %2749 = vmatmul.mubr.f32.gmra.mrb[0].mxu0 %v2680
    %v2750 = vpop.f32.mrb[0].mxu0
    %v2751 = vadd.f32 0.0, %v2750
    %v2752 = vpop.f32.mrb[0].mxu0
    %2753 = vdwg.mxu0
    %2754 = vrot.lane.b32.xlu0 %v157, 104
    %v2755 = vpop.permute.xlu0 %2754
    %2756 = vrot.lane.b32.xlu0 %v157, 72
    %v2757 = vpop.permute.xlu0 %2756
    %v2758 = vsel %vm163, %v2755, 0
    %v2760 = vsel %vm163, %v2757, 0
    %2762 = vmatprep.subr.mxu0 0.0
    %2763 = vmatpush1.xpose.msra.mxu0 %v2760
    %2764 = vmatprep.subr.mxu0 0.0
    %2765 = vmatpush1.xpose.msra.mxu0 0.0
    %2766 = vmatprep.subr.mxu0 0.0
    %2767 = vmatpush1.xpose.msra.mxu0 0.0
    %2768 = vmatprep.subr.mxu0 0.0
    %2769 = vmatpush1.xpose.msra.mxu0 0.0
    %2770 = vmatprep.subr.mxu0 0.0
    %2771 = vmatpush1.xpose.msra.mxu0 0.0
    %2772 = vmatprep.subr.mxu0 0.0
    %2773 = vmatpush1.xpose.msra.mxu0 0.0
    %2774 = vmatprep.subr.mxu0 0.0
    %2775 = vmatpush1.xpose.msra.mxu0 0.0
    %2776 = vmatprep.subr.mxu0 0.0
    %2777 = vmatpush1.xpose.msra.mxu0 0.0
    %2778 = vmatprep.subr.mxu0 0.0
    %2779 = vmatpush1.xpose.msra.mxu0 0.0
    %2780 = vmatprep.subr.mxu0 0.0
    %2781 = vmatpush1.xpose.msra.mxu0 0.0
    %2782 = vmatprep.subr.mxu0 0.0
    %2783 = vmatpush1.xpose.msra.mxu0 0.0
    %2784 = vmatprep.subr.mxu0 0.0
    %2785 = vmatpush1.xpose.msra.mxu0 0.0
    %2786 = vmatprep.subr.mxu0 0.0
    %2787 = vmatpush1.xpose.msra.mxu0 0.0
    %2788 = vmatprep.subr.mxu0 0.0
    %2789 = vmatpush1.xpose.msra.mxu0 0.0
    %2790 = vmatprep.subr.mxu0 0.0
    %2791 = vmatpush1.xpose.msra.mxu0 0.0
    %2792 = vmatprep.subr.mxu0 0.0
    %2793 = vmatpush1.xpose.msra.mxu0 0.0
    %2794 = vmatprep.subr.mxu0 0.0
    %2795 = vmatpush1.xpose.msra.mxu0 0.0
    %2796 = vmatprep.subr.mxu0 0.0
    %2797 = vmatpush1.xpose.msra.mxu0 0.0
    %2798 = vmatprep.subr.mxu0 0.0
    %2799 = vmatpush1.xpose.msra.mxu0 0.0
    %2800 = vmatprep.subr.mxu0 0.0
    %2801 = vmatpush1.xpose.msra.mxu0 0.0
    %2802 = vmatprep.subr.mxu0 0.0
    %2803 = vmatpush1.xpose.msra.mxu0 0.0
    %2804 = vmatprep.subr.mxu0 0.0
    %2805 = vmatpush1.xpose.msra.mxu0 0.0
    %2806 = vmatprep.subr.mxu0 0.0
    %2807 = vmatpush1.xpose.msra.mxu0 0.0
    %2808 = vmatprep.subr.mxu0 0.0
    %2809 = vmatpush1.xpose.msra.mxu0 0.0
    %2810 = vmatprep.subr.mxu0 0.0
    %2811 = vmatpush1.xpose.msra.mxu0 0.0
    %2812 = vmatprep.subr.mxu0 0.0
    %2813 = vmatpush1.xpose.msra.mxu0 0.0
    %2814 = vmatprep.subr.mxu0 0.0
    %2815 = vmatpush1.xpose.msra.mxu0 0.0
    %2816 = vmatprep.subr.mxu0 0.0
    %2817 = vmatpush1.xpose.msra.mxu0 0.0
    %2818 = vmatprep.subr.mxu0 0.0
    %2819 = vmatpush1.xpose.msra.mxu0 0.0
    %2820 = vmatprep.subr.mxu0 0.0
    %2821 = vmatpush1.xpose.msra.mxu0 0.0
    %2822 = vmatprep.subr.mxu0 0.0
    %2823 = vmatpush1.xpose.msra.mxu0 0.0
    %2824 = vmatprep.subr.mxu0 0.0
    %2825 = vmatpush1.xpose.msra.mxu0 0.0
    %2826 = vmatprep.mubr.f32.mxu0 0.0
    %2827 = vmatmul.mubr.f32.gmra.mrb[0].mxu0 %v2758
    %v2828 = vpop.f32.mrb[0].mxu0
    %v2829 = vadd.f32 0.0, %v2828
    %v2830 = vpop.f32.mrb[0].mxu0
    %2831 = vdwg.mxu0
    %v2832 = vsel %vm315, %v2751, -inf
    %2833 = vmax.xlane.f32.xlu0 %v2832
    %v2834 = vpop.xlane.xlu0 %2833
    %v2835 = vsel %vm315, %v2829, -inf
    %2836 = vmax.xlane.f32.xlu0 %v2835
    %v2837 = vpop.xlane.xlu0 %2836
    %v2838 = vsub.f32 %v2751, %v2834
    %v2839 = vsub.f32 %v2829, %v2837
    %v2840 = vmul.f32 %v2838, 1.442695
    %v2841 = vpow.pop %v2840
    %v2842 = vmul.f32 %v2839, 1.442695
    %v2843 = vpow.pop %v2842
    %v2844 = vsel %vm315, %v2841, 0.0
    %2845 = vadd.xlane.f32.xlu0 %v2844
    %v2846 = vpop.xlane.xlu0 %2845
    %v2847 = vsel %vm315, %v2843, 0.0
    %2848 = vadd.xlane.f32.xlu0 %v2847
    %v2849 = vpop.xlane.xlu0 %2848
    %v2850 = vrcp.pop %v2846
    %v2851 = vmul.f32 %v2841, %v2850
    %v2852 = vrcp.pop %v2849
    %v2853 = vmul.f32 %v2843, %v2852
    %s2854 = scalar_lea.vmem [#allocation9], 48
    %2855 = vst.msk [vmem:[%s2854] sm:$0xff] %vm315, %v2851
    %2856 = vst.msk [vmem:[%s2854 + $0x40] sm:$0xff] %vm315, %v2853
    %2857 = vrot.lane.b32.xlu0 %v152, 40
    %v2858 = vpop.permute.xlu0 %2857
    %v2861 = vsel %vm315, %v2851, 0
    %2863 = vmatprep.subr.mxu0 0.0
    %2864 = vmatpush1.msra.mxu0 %v2858
    %2865 = vmatprep.subr.mxu0 0.0
    %2866 = vmatpush1.msra.mxu0 0.0
    %2867 = vmatprep.subr.mxu0 0.0
    %2868 = vmatpush1.msra.mxu0 0.0
    %2869 = vmatprep.subr.mxu0 0.0
    %2870 = vmatpush1.msra.mxu0 0.0
    %2871 = vmatprep.subr.mxu0 0.0
    %2872 = vmatpush1.msra.mxu0 0.0
    %2873 = vmatprep.subr.mxu0 0.0
    %2874 = vmatpush1.msra.mxu0 0.0
    %2875 = vmatprep.subr.mxu0 0.0
    %2876 = vmatpush1.msra.mxu0 0.0
    %2877 = vmatprep.subr.mxu0 0.0
    %2878 = vmatpush1.msra.mxu0 0.0
    %2879 = vmatprep.subr.mxu0 0.0
    %2880 = vmatpush1.msra.mxu0 0.0
    %2881 = vmatprep.subr.mxu0 0.0
    %2882 = vmatpush1.msra.mxu0 0.0
    %2883 = vmatprep.subr.mxu0 0.0
    %2884 = vmatpush1.msra.mxu0 0.0
    %2885 = vmatprep.subr.mxu0 0.0
    %2886 = vmatpush1.msra.mxu0 0.0
    %2887 = vmatprep.subr.mxu0 0.0
    %2888 = vmatpush1.msra.mxu0 0.0
    %2889 = vmatprep.subr.mxu0 0.0
    %2890 = vmatpush1.msra.mxu0 0.0
    %2891 = vmatprep.subr.mxu0 0.0
    %2892 = vmatpush1.msra.mxu0 0.0
    %2893 = vmatprep.subr.mxu0 0.0
    %2894 = vmatpush1.msra.mxu0 0.0
    %2895 = vmatprep.subr.mxu0 0.0
    %2896 = vmatpush1.msra.mxu0 0.0
    %2897 = vmatprep.subr.mxu0 0.0
    %2898 = vmatpush1.msra.mxu0 0.0
    %2899 = vmatprep.subr.mxu0 0.0
    %2900 = vmatpush1.msra.mxu0 0.0
    %2901 = vmatprep.subr.mxu0 0.0
    %2902 = vmatpush1.msra.mxu0 0.0
    %2903 = vmatprep.subr.mxu0 0.0
    %2904 = vmatpush1.msra.mxu0 0.0
    %2905 = vmatprep.subr.mxu0 0.0
    %2906 = vmatpush1.msra.mxu0 0.0
    %2907 = vmatprep.subr.mxu0 0.0
    %2908 = vmatpush1.msra.mxu0 0.0
    %2909 = vmatprep.subr.mxu0 0.0
    %2910 = vmatpush1.msra.mxu0 0.0
    %2911 = vmatprep.subr.mxu0 0.0
    %2912 = vmatpush1.msra.mxu0 0.0
    %2913 = vmatprep.subr.mxu0 0.0
    %2914 = vmatpush1.msra.mxu0 0.0
    %2915 = vmatprep.subr.mxu0 0.0
    %2916 = vmatpush1.msra.mxu0 0.0
    %2917 = vmatprep.subr.mxu0 0.0
    %2918 = vmatpush1.msra.mxu0 0.0
    %2919 = vmatprep.subr.mxu0 0.0
    %2920 = vmatpush1.msra.mxu0 0.0
    %2921 = vmatprep.subr.mxu0 0.0
    %2922 = vmatpush1.msra.mxu0 0.0
    %2923 = vmatprep.subr.mxu0 0.0
    %2924 = vmatpush1.msra.mxu0 0.0
    %2925 = vmatprep.subr.mxu0 0.0
    %2926 = vmatpush1.msra.mxu0 0.0
    %2927 = vmatprep.mubr.f32.mxu0 0.0
    %2928 = vmatmul.mubr.f32.gmra.mrb[0].mxu0 %v2861
    %v2929 = vpop.f32.mrb[0].mxu0
    %v2930 = vadd.f32 0.0, %v2929
    %v2931 = vpop.f32.mrb[0].mxu0
    %2932 = vdwg.mxu0
    %2933 = vrot.lane.b32.xlu0 %v157, 40
    %v2934 = vpop.permute.xlu0 %2933
    %v2937 = vsel %vm315, %v2853, 0
    %2939 = vmatprep.subr.mxu0 0.0
    %2940 = vmatpush1.msra.mxu0 %v2934
    %2941 = vmatprep.subr.mxu0 0.0
    %2942 = vmatpush1.msra.mxu0 0.0
    %2943 = vmatprep.subr.mxu0 0.0
    %2944 = vmatpush1.msra.mxu0 0.0
    %2945 = vmatprep.subr.mxu0 0.0
    %2946 = vmatpush1.msra.mxu0 0.0
    %2947 = vmatprep.subr.mxu0 0.0
    %2948 = vmatpush1.msra.mxu0 0.0
    %2949 = vmatprep.subr.mxu0 0.0
    %2950 = vmatpush1.msra.mxu0 0.0
    %2951 = vmatprep.subr.mxu0 0.0
    %2952 = vmatpush1.msra.mxu0 0.0
    %2953 = vmatprep.subr.mxu0 0.0
    %2954 = vmatpush1.msra.mxu0 0.0
    %2955 = vmatprep.subr.mxu0 0.0
    %2956 = vmatpush1.msra.mxu0 0.0
    %2957 = vmatprep.subr.mxu0 0.0
    %2958 = vmatpush1.msra.mxu0 0.0
    %2959 = vmatprep.subr.mxu0 0.0
    %2960 = vmatpush1.msra.mxu0 0.0
    %2961 = vmatprep.subr.mxu0 0.0
    %2962 = vmatpush1.msra.mxu0 0.0
    %2963 = vmatprep.subr.mxu0 0.0
    %2964 = vmatpush1.msra.mxu0 0.0
    %2965 = vmatprep.subr.mxu0 0.0
    %2966 = vmatpush1.msra.mxu0 0.0
    %2967 = vmatprep.subr.mxu0 0.0
    %2968 = vmatpush1.msra.mxu0 0.0
    %2969 = vmatprep.subr.mxu0 0.0
    %2970 = vmatpush1.msra.mxu0 0.0
    %2971 = vmatprep.subr.mxu0 0.0
    %2972 = vmatpush1.msra.mxu0 0.0
    %2973 = vmatprep.subr.mxu0 0.0
    %2974 = vmatpush1.msra.mxu0 0.0
    %2975 = vmatprep.subr.mxu0 0.0
    %2976 = vmatpush1.msra.mxu0 0.0
    %2977 = vmatprep.subr.mxu0 0.0
    %2978 = vmatpush1.msra.mxu0 0.0
    %2979 = vmatprep.subr.mxu0 0.0
    %2980 = vmatpush1.msra.mxu0 0.0
    %2981 = vmatprep.subr.mxu0 0.0
    %2982 = vmatpush1.msra.mxu0 0.0
    %2983 = vmatprep.subr.mxu0 0.0
    %2984 = vmatpush1.msra.mxu0 0.0
    %2985 = vmatprep.subr.mxu0 0.0
    %2986 = vmatpush1.msra.mxu0 0.0
    %2987 = vmatprep.subr.mxu0 0.0
    %2988 = vmatpush1.msra.mxu0 0.0
    %2989 = vmatprep.subr.mxu0 0.0
    %2990 = vmatpush1.msra.mxu0 0.0
    %2991 = vmatprep.subr.mxu0 0.0
    %2992 = vmatpush1.msra.mxu0 0.0
    %2993 = vmatprep.subr.mxu0 0.0
    %2994 = vmatpush1.msra.mxu0 0.0
    %2995 = vmatprep.subr.mxu0 0.0
    %2996 = vmatpush1.msra.mxu0 0.0
    %2997 = vmatprep.subr.mxu0 0.0
    %2998 = vmatpush1.msra.mxu0 0.0
    %2999 = vmatprep.subr.mxu0 0.0
    %3000 = vmatpush1.msra.mxu0 0.0
    %3001 = vmatprep.subr.mxu0 0.0
    %3002 = vmatpush1.msra.mxu0 0.0
    %3003 = vmatprep.mubr.f32.mxu0 0.0
    %3004 = vmatmul.mubr.f32.gmra.mrb[0].mxu0 %v2937
    %v3005 = vpop.f32.mrb[0].mxu0
    %v3006 = vadd.f32 0.0, %v3005
    %v3007 = vpop.f32.mrb[0].mxu0
    %3008 = vdwg.mxu0
    %v3009 = vld [vmem:[#allocation7 + $0x18] sm:$0xf]
    %v3011 = vsel %vm163, %v2930, 0
    %v3014 = vsel %vm163, %v3006, 0
    %v3017 = vsel %vm833, %v3009, 0
    %3019 = vmatprep.subr.mxu0 0.0
    %3020 = vmatpush1.msra.mxu0 %v3017
    %3021 = vmatprep.subr.mxu0 0.0
    %3022 = vmatpush1.msra.mxu0 0.0
    %3023 = vmatprep.subr.mxu0 0.0
    %3024 = vmatpush1.msra.mxu0 0.0
    %3025 = vmatprep.subr.mxu0 0.0
    %3026 = vmatpush1.msra.mxu0 0.0
    %3027 = vmatprep.subr.mxu0 0.0
    %3028 = vmatpush1.msra.mxu0 0.0
    %3029 = vmatprep.subr.mxu0 0.0
    %3030 = vmatpush1.msra.mxu0 0.0
    %3031 = vmatprep.subr.mxu0 0.0
    %3032 = vmatpush1.msra.mxu0 0.0
    %3033 = vmatprep.subr.mxu0 0.0
    %3034 = vmatpush1.msra.mxu0 0.0
    %3035 = vmatprep.subr.mxu0 0.0
    %3036 = vmatpush1.msra.mxu0 0.0
    %3037 = vmatprep.subr.mxu0 0.0
    %3038 = vmatpush1.msra.mxu0 0.0
    %3039 = vmatprep.subr.mxu0 0.0
    %3040 = vmatpush1.msra.mxu0 0.0
    %3041 = vmatprep.subr.mxu0 0.0
    %3042 = vmatpush1.msra.mxu0 0.0
    %3043 = vmatprep.subr.mxu0 0.0
    %3044 = vmatpush1.msra.mxu0 0.0
    %3045 = vmatprep.subr.mxu0 0.0
    %3046 = vmatpush1.msra.mxu0 0.0
    %3047 = vmatprep.subr.mxu0 0.0
    %3048 = vmatpush1.msra.mxu0 0.0
    %3049 = vmatprep.subr.mxu0 0.0
    %3050 = vmatpush1.msra.mxu0 0.0
    %3051 = vmatprep.subr.mxu0 0.0
    %3052 = vmatpush1.msra.mxu0 0.0
    %3053 = vmatprep.subr.mxu0 0.0
    %3054 = vmatpush1.msra.mxu0 0.0
    %3055 = vmatprep.subr.mxu0 0.0
    %3056 = vmatpush1.msra.mxu0 0.0
    %3057 = vmatprep.subr.mxu0 0.0
    %3058 = vmatpush1.msra.mxu0 0.0
    %3059 = vmatprep.subr.mxu0 0.0
    %3060 = vmatpush1.msra.mxu0 0.0
    %3061 = vmatprep.subr.mxu0 0.0
    %3062 = vmatpush1.msra.mxu0 0.0
    %3063 = vmatprep.subr.mxu0 0.0
    %3064 = vmatpush1.msra.mxu0 0.0
    %3065 = vmatprep.subr.mxu0 0.0
    %3066 = vmatpush1.msra.mxu0 0.0
    %3067 = vmatprep.subr.mxu0 0.0
    %3068 = vmatpush1.msra.mxu0 0.0
    %3069 = vmatprep.subr.mxu0 0.0
    %3070 = vmatpush1.msra.mxu0 0.0
    %3071 = vmatprep.subr.mxu0 0.0
    %3072 = vmatpush1.msra.mxu0 0.0
    %3073 = vmatprep.subr.mxu0 0.0
    %3074 = vmatpush1.msra.mxu0 0.0
    %3075 = vmatprep.subr.mxu0 0.0
    %3076 = vmatpush1.msra.mxu0 0.0
    %3077 = vmatprep.subr.mxu0 0.0
    %3078 = vmatpush1.msra.mxu0 0.0
    %3079 = vmatprep.subr.mxu0 0.0
    %3080 = vmatpush1.msra.mxu0 0.0
    %3081 = vmatprep.subr.mxu0 0.0
    %3082 = vmatpush1.msra.mxu0 0.0
    %3083 = vmatprep.mubr.f32.mxu0 0.0
    %3084 = vmatmul.mubr.f32.gmra.mrb[0].mxu0 %v3011
    %v3085 = vpop.f32.mrb[0].mxu0
    %v3086 = vadd.f32 0.0, %v3085
    %v3087 = vpop.f32.mrb[0].mxu0
    %3088 = vmatprep.mubr.f32.mxu0 0.0
    %3089 = vmatmul.mubr.f32.gmra.mrb[0].mxu0 %v3014
    %v3090 = vpop.f32.mrb[0].mxu0
    %v3091 = vadd.f32 0.0, %v3090
    %v3092 = vpop.f32.mrb[0].mxu0
    %3093 = vdwg.mxu0
    %v3094 = vadd.f32 %v2674, %v3086
    %v3095 = vadd.f32 %v2675, %v3091
    %3096 = vrot.lane.b32.xlu0 %v152, 100
    %v3097 = vpop.permute.xlu0 %3096
    %3098 = vrot.lane.b32.xlu0 %v152, 68
    %v3099 = vpop.permute.xlu0 %3098
    %v3100 = vsel %vm163, %v3097, 0
    %v3102 = vsel %vm163, %v3099, 0
    %3104 = vmatprep.subr.mxu0 0.0
    %3105 = vmatpush1.xpose.msra.mxu0 %v3102
    %3106 = vmatprep.subr.mxu0 0.0
    %3107 = vmatpush1.xpose.msra.mxu0 0.0
    %3108 = vmatprep.subr.mxu0 0.0
    %3109 = vmatpush1.xpose.msra.mxu0 0.0
    %3110 = vmatprep.subr.mxu0 0.0
    %3111 = vmatpush1.xpose.msra.mxu0 0.0
    %3112 = vmatprep.subr.mxu0 0.0
    %3113 = vmatpush1.xpose.msra.mxu0 0.0
    %3114 = vmatprep.subr.mxu0 0.0
    %3115 = vmatpush1.xpose.msra.mxu0 0.0
    %3116 = vmatprep.subr.mxu0 0.0
    %3117 = vmatpush1.xpose.msra.mxu0 0.0
    %3118 = vmatprep.subr.mxu0 0.0
    %3119 = vmatpush1.xpose.msra.mxu0 0.0
    %3120 = vmatprep.subr.mxu0 0.0
    %3121 = vmatpush1.xpose.msra.mxu0 0.0
    %3122 = vmatprep.subr.mxu0 0.0
    %3123 = vmatpush1.xpose.msra.mxu0 0.0
    %3124 = vmatprep.subr.mxu0 0.0
    %3125 = vmatpush1.xpose.msra.mxu0 0.0
    %3126 = vmatprep.subr.mxu0 0.0
    %3127 = vmatpush1.xpose.msra.mxu0 0.0
    %3128 = vmatprep.subr.mxu0 0.0
    %3129 = vmatpush1.xpose.msra.mxu0 0.0
    %3130 = vmatprep.subr.mxu0 0.0
    %3131 = vmatpush1.xpose.msra.mxu0 0.0
    %3132 = vmatprep.subr.mxu0 0.0
    %3133 = vmatpush1.xpose.msra.mxu0 0.0
    %3134 = vmatprep.subr.mxu0 0.0
    %3135 = vmatpush1.xpose.msra.mxu0 0.0
    %3136 = vmatprep.subr.mxu0 0.0
    %3137 = vmatpush1.xpose.msra.mxu0 0.0
    %3138 = vmatprep.subr.mxu0 0.0
    %3139 = vmatpush1.xpose.msra.mxu0 0.0
    %3140 = vmatprep.subr.mxu0 0.0
    %3141 = vmatpush1.xpose.msra.mxu0 0.0
    %3142 = vmatprep.subr.mxu0 0.0
    %3143 = vmatpush1.xpose.msra.mxu0 0.0
    %3144 = vmatprep.subr.mxu0 0.0
    %3145 = vmatpush1.xpose.msra.mxu0 0.0
    %3146 = vmatprep.subr.mxu0 0.0
    %3147 = vmatpush1.xpose.msra.mxu0 0.0
    %3148 = vmatprep.subr.mxu0 0.0
    %3149 = vmatpush1.xpose.msra.mxu0 0.0
    %3150 = vmatprep.subr.mxu0 0.0
    %3151 = vmatpush1.xpose.msra.mxu0 0.0
    %3152 = vmatprep.subr.mxu0 0.0
    %3153 = vmatpush1.xpose.msra.mxu0 0.0
    %3154 = vmatprep.subr.mxu0 0.0
    %3155 = vmatpush1.xpose.msra.mxu0 0.0
    %3156 = vmatprep.subr.mxu0 0.0
    %3157 = vmatpush1.xpose.msra.mxu0 0.0
    %3158 = vmatprep.subr.mxu0 0.0
    %3159 = vmatpush1.xpose.msra.mxu0 0.0
    %3160 = vmatprep.subr.mxu0 0.0
    %3161 = vmatpush1.xpose.msra.mxu0 0.0
    %3162 = vmatprep.subr.mxu0 0.0
    %3163 = vmatpush1.xpose.msra.mxu0 0.0
    %3164 = vmatprep.subr.mxu0 0.0
    %3165 = vmatpush1.xpose.msra.mxu0 0.0
    %3166 = vmatprep.subr.mxu0 0.0
    %3167 = vmatpush1.xpose.msra.mxu0 0.0
    %3168 = vmatprep.mubr.f32.mxu0 0.0
    %3169 = vmatmul.mubr.f32.gmra.mrb[0].mxu0 %v3100
    %v3170 = vpop.f32.mrb[0].mxu0
    %v3171 = vadd.f32 0.0, %v3170
    %v3172 = vpop.f32.mrb[0].mxu0
    %3173 = vdwg.mxu0
    %3174 = vrot.lane.b32.xlu0 %v157, 100
    %v3175 = vpop.permute.xlu0 %3174
    %3176 = vrot.lane.b32.xlu0 %v157, 68
    %v3177 = vpop.permute.xlu0 %3176
    %v3178 = vsel %vm163, %v3175, 0
    %v3180 = vsel %vm163, %v3177, 0
    %3182 = vmatprep.subr.mxu0 0.0
    %3183 = vmatpush1.xpose.msra.mxu0 %v3180
    %3184 = vmatprep.subr.mxu0 0.0
    %3185 = vmatpush1.xpose.msra.mxu0 0.0
    %3186 = vmatprep.subr.mxu0 0.0
    %3187 = vmatpush1.xpose.msra.mxu0 0.0
    %3188 = vmatprep.subr.mxu0 0.0
    %3189 = vmatpush1.xpose.msra.mxu0 0.0
    %3190 = vmatprep.subr.mxu0 0.0
    %3191 = vmatpush1.xpose.msra.mxu0 0.0
    %3192 = vmatprep.subr.mxu0 0.0
    %3193 = vmatpush1.xpose.msra.mxu0 0.0
    %3194 = vmatprep.subr.mxu0 0.0
    %3195 = vmatpush1.xpose.msra.mxu0 0.0
    %3196 = vmatprep.subr.mxu0 0.0
    %3197 = vmatpush1.xpose.msra.mxu0 0.0
    %3198 = vmatprep.subr.mxu0 0.0
    %3199 = vmatpush1.xpose.msra.mxu0 0.0
    %3200 = vmatprep.subr.mxu0 0.0
    %3201 = vmatpush1.xpose.msra.mxu0 0.0
    %3202 = vmatprep.subr.mxu0 0.0
    %3203 = vmatpush1.xpose.msra.mxu0 0.0
    %3204 = vmatprep.subr.mxu0 0.0
    %3205 = vmatpush1.xpose.msra.mxu0 0.0
    %3206 = vmatprep.subr.mxu0 0.0
    %3207 = vmatpush1.xpose.msra.mxu0 0.0
    %3208 = vmatprep.subr.mxu0 0.0
    %3209 = vmatpush1.xpose.msra.mxu0 0.0
    %3210 = vmatprep.subr.mxu0 0.0
    %3211 = vmatpush1.xpose.msra.mxu0 0.0
    %3212 = vmatprep.subr.mxu0 0.0
    %3213 = vmatpush1.xpose.msra.mxu0 0.0
    %3214 = vmatprep.subr.mxu0 0.0
    %3215 = vmatpush1.xpose.msra.mxu0 0.0
    %3216 = vmatprep.subr.mxu0 0.0
    %3217 = vmatpush1.xpose.msra.mxu0 0.0
    %3218 = vmatprep.subr.mxu0 0.0
    %3219 = vmatpush1.xpose.msra.mxu0 0.0
    %3220 = vmatprep.subr.mxu0 0.0
    %3221 = vmatpush1.xpose.msra.mxu0 0.0
    %3222 = vmatprep.subr.mxu0 0.0
    %3223 = vmatpush1.xpose.msra.mxu0 0.0
    %3224 = vmatprep.subr.mxu0 0.0
    %3225 = vmatpush1.xpose.msra.mxu0 0.0
    %3226 = vmatprep.subr.mxu0 0.0
    %3227 = vmatpush1.xpose.msra.mxu0 0.0
    %3228 = vmatprep.subr.mxu0 0.0
    %3229 = vmatpush1.xpose.msra.mxu0 0.0
    %3230 = vmatprep.subr.mxu0 0.0
    %3231 = vmatpush1.xpose.msra.mxu0 0.0
    %3232 = vmatprep.subr.mxu0 0.0
    %3233 = vmatpush1.xpose.msra.mxu0 0.0
    %3234 = vmatprep.subr.mxu0 0.0
    %3235 = vmatpush1.xpose.msra.mxu0 0.0
    %3236 = vmatprep.subr.mxu0 0.0
    %3237 = vmatpush1.xpose.msra.mxu0 0.0
    %3238 = vmatprep.subr.mxu0 0.0
    %3239 = vmatpush1.xpose.msra.mxu0 0.0
    %3240 = vmatprep.subr.mxu0 0.0
    %3241 = vmatpush1.xpose.msra.mxu0 0.0
    %3242 = vmatprep.subr.mxu0 0.0
    %3243 = vmatpush1.xpose.msra.mxu0 0.0
    %3244 = vmatprep.subr.mxu0 0.0
    %3245 = vmatpush1.xpose.msra.mxu0 0.0
    %3246 = vmatprep.mubr.f32.mxu0 0.0
    %3247 = vmatmul.mubr.f32.gmra.mrb[0].mxu0 %v3178
    %v3248 = vpop.f32.mrb[0].mxu0
    %v3249 = vadd.f32 0.0, %v3248
    %v3250 = vpop.f32.mrb[0].mxu0
    %3251 = vdwg.mxu0
    %v3252 = vsel %vm315, %v3171, -inf
    %3253 = vmax.xlane.f32.xlu0 %v3252
    %v3254 = vpop.xlane.xlu0 %3253
    %v3255 = vsel %vm315, %v3249, -inf
    %3256 = vmax.xlane.f32.xlu0 %v3255
    %v3257 = vpop.xlane.xlu0 %3256
    %v3258 = vsub.f32 %v3171, %v3254
    %v3259 = vsub.f32 %v3249, %v3257
    %v3260 = vmul.f32 %v3258, 1.442695
    %v3261 = vpow.pop %v3260
    %v3262 = vmul.f32 %v3259, 1.442695
    %v3263 = vpow.pop %v3262
    %v3264 = vsel %vm315, %v3261, 0.0
    %3265 = vadd.xlane.f32.xlu0 %v3264
    %v3266 = vpop.xlane.xlu0 %3265
    %v3267 = vsel %vm315, %v3263, 0.0
    %3268 = vadd.xlane.f32.xlu0 %v3267
    %v3269 = vpop.xlane.xlu0 %3268
    %v3270 = vrcp.pop %v3266
    %v3271 = vmul.f32 %v3261, %v3270
    %v3272 = vrcp.pop %v3269
    %v3273 = vmul.f32 %v3263, %v3272
    %s3274 = scalar_lea.vmem [#allocation9], 56
    %3275 = vst.msk [vmem:[%s3274] sm:$0xff] %vm315, %v3271
    %3276 = vst.msk [vmem:[%s3274 + $0x40] sm:$0xff] %vm315, %v3273
    %3277 = vrot.lane.b32.xlu0 %v152, 36
    %v3278 = vpop.permute.xlu0 %3277
    %v3281 = vsel %vm315, %v3271, 0
    %3283 = vmatprep.subr.mxu0 0.0
    %3284 = vmatpush1.msra.mxu0 %v3278
    %3285 = vmatprep.subr.mxu0 0.0
    %3286 = vmatpush1.msra.mxu0 0.0
    %3287 = vmatprep.subr.mxu0 0.0
    %3288 = vmatpush1.msra.mxu0 0.0
    %3289 = vmatprep.subr.mxu0 0.0
    %3290 = vmatpush1.msra.mxu0 0.0
    %3291 = vmatprep.subr.mxu0 0.0
    %3292 = vmatpush1.msra.mxu0 0.0
    %3293 = vmatprep.subr.mxu0 0.0
    %3294 = vmatpush1.msra.mxu0 0.0
    %3295 = vmatprep.subr.mxu0 0.0
    %3296 = vmatpush1.msra.mxu0 0.0
    %3297 = vmatprep.subr.mxu0 0.0
    %3298 = vmatpush1.msra.mxu0 0.0
    %3299 = vmatprep.subr.mxu0 0.0
    %3300 = vmatpush1.msra.mxu0 0.0
    %3301 = vmatprep.subr.mxu0 0.0
    %3302 = vmatpush1.msra.mxu0 0.0
    %3303 = vmatprep.subr.mxu0 0.0
    %3304 = vmatpush1.msra.mxu0 0.0
    %3305 = vmatprep.subr.mxu0 0.0
    %3306 = vmatpush1.msra.mxu0 0.0
    %3307 = vmatprep.subr.mxu0 0.0
    %3308 = vmatpush1.msra.mxu0 0.0
    %3309 = vmatprep.subr.mxu0 0.0
    %3310 = vmatpush1.msra.mxu0 0.0
    %3311 = vmatprep.subr.mxu0 0.0
    %3312 = vmatpush1.msra.mxu0 0.0
    %3313 = vmatprep.subr.mxu0 0.0
    %3314 = vmatpush1.msra.mxu0 0.0
    %3315 = vmatprep.subr.mxu0 0.0
    %3316 = vmatpush1.msra.mxu0 0.0
    %3317 = vmatprep.subr.mxu0 0.0
    %3318 = vmatpush1.msra.mxu0 0.0
    %3319 = vmatprep.subr.mxu0 0.0
    %3320 = vmatpush1.msra.mxu0 0.0
    %3321 = vmatprep.subr.mxu0 0.0
    %3322 = vmatpush1.msra.mxu0 0.0
    %3323 = vmatprep.subr.mxu0 0.0
    %3324 = vmatpush1.msra.mxu0 0.0
    %3325 = vmatprep.subr.mxu0 0.0
    %3326 = vmatpush1.msra.mxu0 0.0
    %3327 = vmatprep.subr.mxu0 0.0
    %3328 = vmatpush1.msra.mxu0 0.0
    %3329 = vmatprep.subr.mxu0 0.0
    %3330 = vmatpush1.msra.mxu0 0.0
    %3331 = vmatprep.subr.mxu0 0.0
    %3332 = vmatpush1.msra.mxu0 0.0
    %3333 = vmatprep.subr.mxu0 0.0
    %3334 = vmatpush1.msra.mxu0 0.0
    %3335 = vmatprep.subr.mxu0 0.0
    %3336 = vmatpush1.msra.mxu0 0.0
    %3337 = vmatprep.subr.mxu0 0.0
    %3338 = vmatpush1.msra.mxu0 0.0
    %3339 = vmatprep.subr.mxu0 0.0
    %3340 = vmatpush1.msra.mxu0 0.0
    %3341 = vmatprep.subr.mxu0 0.0
    %3342 = vmatpush1.msra.mxu0 0.0
    %3343 = vmatprep.subr.mxu0 0.0
    %3344 = vmatpush1.msra.mxu0 0.0
    %3345 = vmatprep.subr.mxu0 0.0
    %3346 = vmatpush1.msra.mxu0 0.0
    %3347 = vmatprep.mubr.f32.mxu0 0.0
    %3348 = vmatmul.mubr.f32.gmra.mrb[0].mxu0 %v3281
    %v3349 = vpop.f32.mrb[0].mxu0
    %v3350 = vadd.f32 0.0, %v3349
    %v3351 = vpop.f32.mrb[0].mxu0
    %3352 = vdwg.mxu0
    %3353 = vrot.lane.b32.xlu0 %v157, 36
    %v3354 = vpop.permute.xlu0 %3353
    %v3357 = vsel %vm315, %v3273, 0
    %3359 = vmatprep.subr.mxu0 0.0
    %3360 = vmatpush1.msra.mxu0 %v3354
    %3361 = vmatprep.subr.mxu0 0.0
    %3362 = vmatpush1.msra.mxu0 0.0
    %3363 = vmatprep.subr.mxu0 0.0
    %3364 = vmatpush1.msra.mxu0 0.0
    %3365 = vmatprep.subr.mxu0 0.0
    %3366 = vmatpush1.msra.mxu0 0.0
    %3367 = vmatprep.subr.mxu0 0.0
    %3368 = vmatpush1.msra.mxu0 0.0
    %3369 = vmatprep.subr.mxu0 0.0
    %3370 = vmatpush1.msra.mxu0 0.0
    %3371 = vmatprep.subr.mxu0 0.0
    %3372 = vmatpush1.msra.mxu0 0.0
    %3373 = vmatprep.subr.mxu0 0.0
    %3374 = vmatpush1.msra.mxu0 0.0
    %3375 = vmatprep.subr.mxu0 0.0
    %3376 = vmatpush1.msra.mxu0 0.0
    %3377 = vmatprep.subr.mxu0 0.0
    %3378 = vmatpush1.msra.mxu0 0.0
    %3379 = vmatprep.subr.mxu0 0.0
    %3380 = vmatpush1.msra.mxu0 0.0
    %3381 = vmatprep.subr.mxu0 0.0
    %3382 = vmatpush1.msra.mxu0 0.0
    %3383 = vmatprep.subr.mxu0 0.0
    %3384 = vmatpush1.msra.mxu0 0.0
    %3385 = vmatprep.subr.mxu0 0.0
    %3386 = vmatpush1.msra.mxu0 0.0
    %3387 = vmatprep.subr.mxu0 0.0
    %3388 = vmatpush1.msra.mxu0 0.0
    %3389 = vmatprep.subr.mxu0 0.0
    %3390 = vmatpush1.msra.mxu0 0.0
    %3391 = vmatprep.subr.mxu0 0.0
    %3392 = vmatpush1.msra.mxu0 0.0
    %3393 = vmatprep.subr.mxu0 0.0
    %3394 = vmatpush1.msra.mxu0 0.0
    %3395 = vmatprep.subr.mxu0 0.0
    %3396 = vmatpush1.msra.mxu0 0.0
    %3397 = vmatprep.subr.mxu0 0.0
    %3398 = vmatpush1.msra.mxu0 0.0
    %3399 = vmatprep.subr.mxu0 0.0
    %3400 = vmatpush1.msra.mxu0 0.0
    %3401 = vmatprep.subr.mxu0 0.0
    %3402 = vmatpush1.msra.mxu0 0.0
    %3403 = vmatprep.subr.mxu0 0.0
    %3404 = vmatpush1.msra.mxu0 0.0
    %3405 = vmatprep.subr.mxu0 0.0
    %3406 = vmatpush1.msra.mxu0 0.0
    %3407 = vmatprep.subr.mxu0 0.0
    %3408 = vmatpush1.msra.mxu0 0.0
    %3409 = vmatprep.subr.mxu0 0.0
    %3410 = vmatpush1.msra.mxu0 0.0
    %3411 = vmatprep.subr.mxu0 0.0
    %3412 = vmatpush1.msra.mxu0 0.0
    %3413 = vmatprep.subr.mxu0 0.0
    %3414 = vmatpush1.msra.mxu0 0.0
    %3415 = vmatprep.subr.mxu0 0.0
    %3416 = vmatpush1.msra.mxu0 0.0
    %3417 = vmatprep.subr.mxu0 0.0
    %3418 = vmatpush1.msra.mxu0 0.0
    %3419 = vmatprep.subr.mxu0 0.0
    %3420 = vmatpush1.msra.mxu0 0.0
    %3421 = vmatprep.subr.mxu0 0.0
    %3422 = vmatpush1.msra.mxu0 0.0
    %3423 = vmatprep.mubr.f32.mxu0 0.0
    %3424 = vmatmul.mubr.f32.gmra.mrb[0].mxu0 %v3357
    %v3425 = vpop.f32.mrb[0].mxu0
    %v3426 = vadd.f32 0.0, %v3425
    %v3427 = vpop.f32.mrb[0].mxu0
    %3428 = vdwg.mxu0
    %v3429 = vld [vmem:[#allocation7 + $0x1c] sm:$0xf]
    %v3431 = vsel %vm163, %v3350, 0
    %v3434 = vsel %vm163, %v3426, 0
    %v3437 = vsel %vm833, %v3429, 0
    %3439 = vmatprep.subr.mxu0 0.0
    %3440 = vmatpush1.msra.mxu0 %v3437
    %3441 = vmatprep.subr.mxu0 0.0
    %3442 = vmatpush1.msra.mxu0 0.0
    %3443 = vmatprep.subr.mxu0 0.0
    %3444 = vmatpush1.msra.mxu0 0.0
    %3445 = vmatprep.subr.mxu0 0.0
    %3446 = vmatpush1.msra.mxu0 0.0
    %3447 = vmatprep.subr.mxu0 0.0
    %3448 = vmatpush1.msra.mxu0 0.0
    %3449 = vmatprep.subr.mxu0 0.0
    %3450 = vmatpush1.msra.mxu0 0.0
    %3451 = vmatprep.subr.mxu0 0.0
    %3452 = vmatpush1.msra.mxu0 0.0
    %3453 = vmatprep.subr.mxu0 0.0
    %3454 = vmatpush1.msra.mxu0 0.0
    %3455 = vmatprep.subr.mxu0 0.0
    %3456 = vmatpush1.msra.mxu0 0.0
    %3457 = vmatprep.subr.mxu0 0.0
    %3458 = vmatpush1.msra.mxu0 0.0
    %3459 = vmatprep.subr.mxu0 0.0
    %3460 = vmatpush1.msra.mxu0 0.0
    %3461 = vmatprep.subr.mxu0 0.0
    %3462 = vmatpush1.msra.mxu0 0.0
    %3463 = vmatprep.subr.mxu0 0.0
    %3464 = vmatpush1.msra.mxu0 0.0
    %3465 = vmatprep.subr.mxu0 0.0
    %3466 = vmatpush1.msra.mxu0 0.0
    %3467 = vmatprep.subr.mxu0 0.0
    %3468 = vmatpush1.msra.mxu0 0.0
    %3469 = vmatprep.subr.mxu0 0.0
    %3470 = vmatpush1.msra.mxu0 0.0
    %3471 = vmatprep.subr.mxu0 0.0
    %3472 = vmatpush1.msra.mxu0 0.0
    %3473 = vmatprep.subr.mxu0 0.0
    %3474 = vmatpush1.msra.mxu0 0.0
    %3475 = vmatprep.subr.mxu0 0.0
    %3476 = vmatpush1.msra.mxu0 0.0
    %3477 = vmatprep.subr.mxu0 0.0
    %3478 = vmatpush1.msra.mxu0 0.0
    %3479 = vmatprep.subr.mxu0 0.0
    %3480 = vmatpush1.msra.mxu0 0.0
    %3481 = vmatprep.subr.mxu0 0.0
    %3482 = vmatpush1.msra.mxu0 0.0
    %3483 = vmatprep.subr.mxu0 0.0
    %3484 = vmatpush1.msra.mxu0 0.0
    %3485 = vmatprep.subr.mxu0 0.0
    %3486 = vmatpush1.msra.mxu0 0.0
    %3487 = vmatprep.subr.mxu0 0.0
    %3488 = vmatpush1.msra.mxu0 0.0
    %3489 = vmatprep.subr.mxu0 0.0
    %3490 = vmatpush1.msra.mxu0 0.0
    %3491 = vmatprep.subr.mxu0 0.0
    %3492 = vmatpush1.msra.mxu0 0.0
    %3493 = vmatprep.subr.mxu0 0.0
    %3494 = vmatpush1.msra.mxu0 0.0
    %3495 = vmatprep.subr.mxu0 0.0
    %3496 = vmatpush1.msra.mxu0 0.0
    %3497 = vmatprep.subr.mxu0 0.0
    %3498 = vmatpush1.msra.mxu0 0.0
    %3499 = vmatprep.subr.mxu0 0.0
    %3500 = vmatpush1.msra.mxu0 0.0
    %3501 = vmatprep.subr.mxu0 0.0
    %3502 = vmatpush1.msra.mxu0 0.0
    %3503 = vmatprep.mubr.f32.mxu0 0.0
    %3504 = vmatmul.mubr.f32.gmra.mrb[0].mxu0 %v3431
    %v3505 = vpop.f32.mrb[0].mxu0
    %v3506 = vadd.f32 0.0, %v3505
    %v3507 = vpop.f32.mrb[0].mxu0
    %3508 = vmatprep.mubr.f32.mxu0 0.0
    %3509 = vmatmul.mubr.f32.gmra.mrb[0].mxu0 %v3434
    %v3510 = vpop.f32.mrb[0].mxu0
    %v3511 = vadd.f32 0.0, %v3510
    %v3512 = vpop.f32.mrb[0].mxu0
    %3513 = vdwg.mxu0
    %v3514 = vadd.f32 %v3094, %v3506
    %v3515 = vadd.f32 %v3095, %v3511
    %v3516 = vld [vmem:[%s4] sm:$0x1]
    %v3518 = vlaneseq
    %v3519 = vshrl.u32 %v3518, 7
    %v3520 = vsub.s32 0, %v3519
    %v3521 = vrot.slane %v3516, %v3520
    %v3523 = vadd.f32 %v3514, %v3521
    %v3524 = vadd.f32 %v3515, %v3521
    %3525 = vst.msk [vmem:[#allocation8] sm:$0xff] %vm78, %v3523
    %3526 = vst.msk [vmem:[#allocation8 + $0x8] sm:$0xff] %vm78, %v3524
    // Predicated region
    $region34: #{tpu_custom_call.1} parent=1 // pred_check
      _
    $region35: #{tpu_custom_call.1} parent=1 // pred_check_branch
      %3528 = sbr.rel (0) target = $region37
    $region36: #{tpu_custom_call.1} parent=1 // pred_region
      %s3530 = ssub.s32 256, 256
      %3531 = vsyncadd [#allocation4], %s3530
      %s3532 = sshll.u32 [#allocation8], 4
      %s3533 = int_to_ptr.vmem [resolvable:$true] %s3532
      %3538 = dma.vmem_to_hbm [thread:$0]  %s3533, 256, %s5, [#allocation4], 128, 128, 8
    $region37: #{tpu_custom_call.1} parent=1 // pred_fallthru
      _
    // Predicated region
    $region38: #{tpu_custom_call.1} parent=1 // pred_check
      _
    $region39: #{tpu_custom_call.1} parent=1 // pred_check_branch
      %3540 = sbr.rel (0) target = $region41
    $region40: #{tpu_custom_call.1} parent=1 // pred_region
      %s3542 = ssub.s32 2048, 2048
      %3543 = vsyncadd [#allocation10], %s3542
      %s3544 = sshll.u32 [#allocation9], 4
      %s3545 = int_to_ptr.vmem [resolvable:$true] %s3544
      %3550 = dma.vmem_to_hbm [thread:$0]  %s3545, 2048, %s6, [#allocation10], 128, 128, 8
    $region41: #{tpu_custom_call.1} parent=1 // pred_fallthru
      _
    // Predicated region
    $region42: #{tpu_custom_call.1} parent=1 // pred_check
      _
    $region43: #{tpu_custom_call.1} parent=1 // pred_check_branch
      %3552 = sbr.rel (0) target = $region45
    $region44: #{tpu_custom_call.1} parent=1 // pred_region
      %3553 = dma.done [#allocation4], 256
    $region45: #{tpu_custom_call.1} parent=1 // pred_fallthru
      _
    // Predicated region
    $region46: #{tpu_custom_call.1} parent=1 // pred_check
      _
    $region47: #{tpu_custom_call.1} parent=1 // pred_check_branch
      %3555 = sbr.rel (0) target = $region49
    $region48: #{tpu_custom_call.1} parent=1 // pred_region
      %3556 = dma.done [#allocation10], 2048
    $region49: #{tpu_custom_call.1} parent=1 // pred_fallthru
      _
    %3557 = vsyncpa [#allocation3], 1
    %3558 = vsyncpa [#allocation6], 1
    %3559 = vsyncpa [#allocation4], 1
    %3560 = vsyncpa [#allocation10], 1

</llo_original>
